<compile_context>
chip_gen: v6e
topology: v6e:2x2x1
jax: 0.10.0
libtpu: 0.0.40
codegen_flags: <defaults>
</compile_context>

<pallas_src>
import functools

import jax
import jax.numpy as jnp
from jax.experimental import pallas as pl
from jax.experimental.pallas import tpu as pltpu


# ------------------------------ helpers -------------------------------------

_TM_TARGET = 1024                      # bf16 row tiles => ~0.25-1 MiB per input tile
_VMEM_LIMIT = 32 * 1024 * 1024         # safe scoped budget on v5e/v6e/v7x

_PARALLEL = pltpu.CompilerParams(
    dimension_semantics=("parallel",), vmem_limit_bytes=_VMEM_LIMIT)
_ARBITRARY = pltpu.CompilerParams(     # reduction grids (resident accumulators)
    dimension_semantics=("arbitrary",), vmem_limit_bytes=_VMEM_LIMIT)


def _round_up(a, m):
    return ((a + m - 1) // m) * m


def _choose_tile(m, target=_TM_TARGET):
    """Row tile (multiple of 8) and the padded row count it divides.

    Aims for >= 2 grid steps so a 1-D 'parallel' grid spans both v7x TCs."""
    mp = _round_up(m, 8)
    if mp <= 8:
        return mp, mp
    tile = min(target, _round_up(mp, 16) // 2)   # multiple of 8 by construction
    mp = _round_up(m, tile)
    return tile, mp


def _pad_rows(x, mp):
    m = x.shape[0]
    if mp == m:
        return x
    pad = [(0, mp - m)] + [(0, 0)] * (x.ndim - 1)
    return jnp.pad(x, pad)


# ----------------------------- Pallas kernels --------------------------------


def _linear_kernel(x_ref, w_ref, b_ref, o_ref, *, relu):
    y = jnp.dot(x_ref[...], w_ref[...], preferred_element_type=jnp.float32)
    y = y + b_ref[...]
    if relu:
        y = jnp.maximum(y, 0.0)
    o_ref[...] = y.astype(o_ref.dtype)


def linear(x, w, b, relu=False, out_dtype=jnp.bfloat16):
    """Row-tiled y = x @ w + b (bf16 inputs/weights, f32 accumulation)."""
    M, K = x.shape
    N = w.shape[1]
    tm, Mp = _choose_tile(M)
    xp = _pad_rows(x, Mp)
    out = pl.pallas_call(
        functools.partial(_linear_kernel, relu=relu),
        out_shape=jax.ShapeDtypeStruct((Mp, N), out_dtype),
        grid=(Mp // tm,),
        in_specs=[
            pl.BlockSpec((tm, K), lambda i: (i, 0)),
            pl.BlockSpec((K, N), lambda i: (0, 0)),     # weights stay VMEM-resident
            pl.BlockSpec((1, N), lambda i: (0, 0)),
        ],
        out_specs=pl.BlockSpec((tm, N), lambda i: (i, 0)),
        compiler_params=_PARALLEL,
    )(xp, w, b.reshape(1, N))
    return out[:M]


def _attn_prep_kernel(q_ref, k_ref, v_ref, e_ref, s_ref, logit_ref, ve_ref, *, scale):
    # q,k,v,e: (TM, H*C) bf16 lane-dense; s: (H*C, H) 0/1 head selector (f32).
    e = e_ref[...]                                       # read e once
    ve_ref[...] = (v_ref[...] + e).astype(ve_ref.dtype)  # ve = v + e  (bf16 out)
    ke = k_ref[...].astype(jnp.float32) + e.astype(jnp.float32)
    qk = q_ref[...].astype(jnp.float32) * ke             # f32 for accurate logits
    logit_ref[...] = jnp.dot(qk, s_ref[...],
                             preferred_element_type=jnp.float32) * scale


def attn_prep(q_e, k_e, v_e, e_e, heads, out_ch):
    """Returns (logits (E,H) f32, ve = v+e (E,HC) bf16), fused so e is read once."""
    E, HC = q_e.shape
    tm, Ep = _choose_tile(E)
    qp, kp, vp, ep = (_pad_rows(a, Ep) for a in (q_e, k_e, v_e, e_e))
    # S[h*C + c, h] = 1 -> per-head sum as a tiny MXU matmul.
    S = jnp.repeat(jnp.eye(heads, dtype=jnp.float32), out_ch, axis=0)   # (HC, H)
    logits, ve = pl.pallas_call(
        functools.partial(_attn_prep_kernel, scale=1.0 / (out_ch ** 0.5)),
        out_shape=(
            jax.ShapeDtypeStruct((Ep, heads), jnp.float32),
            jax.ShapeDtypeStruct((Ep, HC), jnp.bfloat16),
        ),
        grid=(Ep // tm,),
        in_specs=[
            pl.BlockSpec((tm, HC), lambda i: (i, 0)),
            pl.BlockSpec((tm, HC), lambda i: (i, 0)),
            pl.BlockSpec((tm, HC), lambda i: (i, 0)),
            pl.BlockSpec((tm, HC), lambda i: (i, 0)),
            pl.BlockSpec((HC, heads), lambda i: (0, 0)),
        ],
        out_specs=(
            pl.BlockSpec((tm, heads), lambda i: (i, 0)),
            pl.BlockSpec((tm, HC), lambda i: (i, 0)),
        ),
        compiler_params=_PARALLEL,
    )(qp, kp, vp, ep, S)
    return logits[:E], ve[:E]


def _msg_agg_kernel(ve_ref, p_ref, dst_ref, r_ref, agg_ref, den_ref, *, n_pad):
    # Fused message + segment-sum: no (E,HC) msg in HBM, no XLA scatter.
    @pl.when(pl.program_id(0) == 0)
    def _():
        agg_ref[...] = jnp.zeros_like(agg_ref)
        den_ref[...] = jnp.zeros_like(den_ref)

    p = p_ref[...]                                            # (tm, H) f32, unnormalized exp
    p_exp = jnp.dot(p, r_ref[...], preferred_element_type=jnp.float32)   # (tm, HC)
    msg = (ve_ref[...].astype(jnp.float32) * p_exp).astype(jnp.bfloat16)

    ids = jax.lax.broadcasted_iota(jnp.int32, (p.shape[0], n_pad), 1)
    onehot = (ids == dst_ref[...]).astype(jnp.float32)        # (tm, n_pad)

    dn = (((0,), (0,)), ((), ()))                             # contract the edge (row) axis
    agg_ref[...] += jax.lax.dot_general(onehot.astype(jnp.bfloat16), msg, dn,
                                        preferred_element_type=jnp.float32)
    den_ref[...] += jax.lax.dot_general(onehot, p, dn,
                                        preferred_element_type=jnp.float32)


def message_aggregate(ve, p, dst, num_nodes, heads, out_ch):
    """agg[n,:] = sum_{e: dst[e]=n} ve[e,:] * p[e,head(.)];  den[n,h] = sum p[e,h].

    One-hot MXU matmul accumulation; assumes the (N, H*C) f32 accumulator fits
    VMEM (modest N).  TODO(synk): for very large N, switch to a dst-sorted
    streaming reduction with scalar-prefetched segment boundaries."""
    E, HC = ve.shape
    te, Ep = _choose_tile(E)
    n_pad = _round_up(num_nodes, 8)
    vep = _pad_rows(ve, Ep)
    pp = _pad_rows(p, Ep)                  # zero-padded p => padded edges contribute nothing
    dstp = _pad_rows(dst.astype(jnp.int32).reshape(E, 1), Ep)
    R = jnp.repeat(jnp.eye(heads, dtype=jnp.float32), out_ch, axis=1)   # (H, HC)
    agg, den = pl.pallas_call(
        functools.partial(_msg_agg_kernel, n_pad=n_pad),
        out_shape=(
            jax.ShapeDtypeStruct((n_pad, HC), jnp.float32),
            jax.ShapeDtypeStruct((n_pad, heads), jnp.float32),
        ),
        grid=(Ep // te,),
        in_specs=[
            pl.BlockSpec((te, HC), lambda i: (i, 0)),
            pl.BlockSpec((te, heads), lambda i: (i, 0)),
            pl.BlockSpec((te, 1), lambda i: (i, 0)),
            pl.BlockSpec((heads, HC), lambda i: (0, 0)),
        ],
        out_specs=(
            pl.BlockSpec((n_pad, HC), lambda i: (0, 0)),      # resident accumulators
            pl.BlockSpec((n_pad, heads), lambda i: (0, 0)),
        ),
        compiler_params=_ARBITRARY,
    )(vep, pp, dstp, R)
    return agg[:num_nodes], den[:num_nodes]


def _combine_kernel(agg_ref, den_ref, skip_ref, r_ref, a_ref, o_ref):
    # Deferred softmax normalization + head mean + skip + ReLU.
    den_exp = jnp.dot(den_ref[...], r_ref[...], preferred_element_type=jnp.float32)
    inv = pl.reciprocal(den_exp + 1e-16, approx=True)          # EUP slot, ~free
    normalized = agg_ref[...] * inv                            # (tm, HC) f32
    mean = jnp.dot(normalized, a_ref[...], preferred_element_type=jnp.float32)
    y = jnp.maximum(mean + skip_ref[...].astype(jnp.float32), 0.0)
    o_ref[...] = y.astype(o_ref.dtype)


def combine(agg, den, skip, heads, out_ch):
    N, HC = agg.shape
    C = out_ch
    tm, Np = _choose_tile(N)
    aggp, denp, skipp = _pad_rows(agg, Np), _pad_rows(den, Np), _pad_rows(skip, Np)
    R = jnp.repeat(jnp.eye(heads, dtype=jnp.float32), out_ch, axis=1)      # (H, HC)
    A = jnp.tile(jnp.eye(C, dtype=jnp.float32), (heads, 1)) / float(heads)  # (HC, C)
    out = pl.pallas_call(
        _combine_kernel,
        out_shape=jax.ShapeDtypeStruct((Np, C), jnp.bfloat16),
        grid=(Np // tm,),
        in_specs=[
            pl.BlockSpec((tm, HC), lambda i: (i, 0)),
            pl.BlockSpec((tm, heads), lambda i: (i, 0)),
            pl.BlockSpec((tm, C), lambda i: (i, 0)),
            pl.BlockSpec((heads, HC), lambda i: (0, 0)),
            pl.BlockSpec((HC, C), lambda i: (0, 0)),
        ],
        out_specs=pl.BlockSpec((tm, C), lambda i: (i, 0)),
        compiler_params=_PARALLEL,
    )(aggp, denp, skipp, R, A)
    return out[:N]


def _edge_mlp_kernel(xs_ref, ea_ref, xd_ref, w1a_ref, w1b_ref, w1c_ref,
                     b1_ref, w2_ref, b2_ref, o_ref):
    # Fused 2-layer MLP; the torch concat is avoided by splitting W1 row-wise.
    h = (jnp.dot(xs_ref[...], w1a_ref[...], preferred_element_type=jnp.float32)
         + jnp.dot(ea_ref[...], w1b_ref[...], preferred_element_type=jnp.float32)
         + jnp.dot(xd_ref[...], w1c_ref[...], preferred_element_type=jnp.float32)
         + b1_ref[...])
    h = jnp.maximum(h, 0.0)
    # (tm,32)@(32,1) would waste the MXU: VPU multiply + XLU lane reduce instead.
    o_ref[...] = jnp.sum(h * w2_ref[...], axis=-1, keepdims=True) + b2_ref[...]


def edge_mlp(x_src, edge_attr, x_dst, W1a, W1b, W1c, b1, w2_row, b2, hidden):
    E = x_src.shape[0]
    edge_in = edge_attr.shape[1]
    tm, Ep = _choose_tile(E)
    xs, ea, xd = (_pad_rows(a, Ep) for a in (x_src, edge_attr, x_dst))
    out = pl.pallas_call(
        _edge_mlp_kernel,
        out_shape=jax.ShapeDtypeStruct((Ep, 1), jnp.float32),
        grid=(Ep // tm,),
        in_specs=[
            pl.BlockSpec((tm, hidden), lambda i: (i, 0)),
            pl.BlockSpec((tm, edge_in), lambda i: (i, 0)),
            pl.BlockSpec((tm, hidden), lambda i: (i, 0)),
            pl.BlockSpec((hidden, hidden), lambda i: (0, 0)),
            pl.BlockSpec((edge_in, hidden), lambda i: (0, 0)),
            pl.BlockSpec((hidden, hidden), lambda i: (0, 0)),
            pl.BlockSpec((1, hidden), lambda i: (0, 0)),
            pl.BlockSpec((1, hidden), lambda i: (0, 0)),
            pl.BlockSpec((1, 1), lambda i: (0, 0)),
        ],
        out_specs=pl.BlockSpec((tm, 1), lambda i: (i, 0)),
        compiler_params=_PARALLEL,
    )(xs, ea, xd, W1a, W1b, W1c, b1.reshape(1, hidden), w2_row, b2.reshape(1, 1))
    # TODO(synk): for very large E, emit a lane-dense (E/128,128) output slab
    # instead of a (tm,1) column to avoid masked stores.
    return out[:E, 0]


# ------------------------- TransformerConv (PyG semantics) -------------------


def transformer_conv(x, edge_index, edge_attr_bf16, prm, heads, out_ch):
    """TransformerConv(heads=H, concat=False, root_weight=True, beta=False) + ReLU."""
    N = x.shape[0]
    HC = heads * out_ch
    src, dst = edge_index[0], edge_index[1]

    # Pre-fused Q/K/V/skip projection: one matmul, x read from HBM once.
    qkvs = linear(x, prm["Wqkvs"], prm["bqkvs"])                # (N, 3HC + C) bf16
    q = qkvs[:, :HC]
    k = qkvs[:, HC:2 * HC]
    v = qkvs[:, 2 * HC:3 * HC]
    skip = qkvs[:, 3 * HC:]

    e = linear(edge_attr_bf16, prm["We"], prm["be"])            # PyG lin_edge: bias=False

    # TODO(synk): row gathers kept in plain JAX (bf16 halves their HBM traffic);
    # fuse via a DMA/scalar-prefetch gather kernel for very large E.
    q_e, k_e, v_e = q[dst], k[src], v[src]

    logits, ve = attn_prep(q_e, k_e, v_e, e, heads, out_ch)     # (E,H) f32, (E,HC) bf16

    # Deferred-normalization softmax: only the tiny (E,H)/(N,H) max stays in JAX.
    seg_max = jax.ops.segment_max(logits, dst, num_segments=N)
    seg_max = jnp.where(jnp.isfinite(seg_max), seg_max, 0.0)
    p_unnorm = jnp.exp(logits - seg_max[dst])                   # (E, H) f32

    agg, den = message_aggregate(ve, p_unnorm, dst, N, heads, out_ch)
    return combine(agg, den, skip, heads, out_ch)               # (N, C) bf16


# ------------------------------- full model ----------------------------------


def edge_gnn_classifier(params, x, edge_index, edge_attr, heads, hidden):
    ea = edge_attr.astype(jnp.bfloat16)
    x = transformer_conv(x.astype(jnp.bfloat16), edge_index, ea,
                         params["conv1"], heads, hidden)
    x = transformer_conv(x, edge_index, ea, params["conv2"], heads, hidden)

    src, dst = edge_index[0], edge_index[1]
    return edge_mlp(x[src], ea, x[dst],
                    params["mlp_W1a"], params["mlp_W1b"], params["mlp_W1c"],
                    params["mlp_b1"], params["mlp_w2_row"], params["mlp_b2"],
                    hidden)                                     # (E,) f32


def init_conv_params(key, in_ch, edge_in, hidden, heads):
    ks = jax.random.split(key, 10)
    s = 0.1
    hc = heads * hidden
    Wq = s * jax.random.normal(ks[0], (in_ch, hc), jnp.float32)
    bq = s * jax.random.normal(ks[1], (hc,), jnp.float32)
    Wk = s * jax.random.normal(ks[2], (in_ch, hc), jnp.float32)
    bk = s * jax.random.normal(ks[3], (hc,), jnp.float32)
    Wv = s * jax.random.normal(ks[4], (in_ch, hc), jnp.float32)
    bv = s * jax.random.normal(ks[5], (hc,), jnp.float32)
    We = s * jax.random.normal(ks[6], (edge_in, hc), jnp.float32)
    Ws = s * jax.random.normal(ks[7], (in_ch, hidden), jnp.float32)
    bs = s * jax.random.normal(ks[8], (hidden,), jnp.float32)
    # Projection weights fused ONCE at parameter-build time (not per forward).
    return {
        "Wqkvs": jnp.concatenate([Wq, Wk, Wv, Ws], axis=1).astype(jnp.bfloat16),
        "bqkvs": jnp.concatenate([bq, bk, bv, bs], axis=0),     # f32 bias
        "We": We.astype(jnp.bfloat16),
        "be": jnp.zeros((hc,), jnp.float32),                    # PyG lin_edge bias=False
    }


def init_params(key, in_ch, edge_in, hidden, heads):
    k1, k2, k3, k4, k5, k6 = jax.random.split(key, 6)
    s = 0.1
    W1 = s * jax.random.normal(k3, (2 * hidden + edge_in, hidden), jnp.float32)
    W2 = s * jax.random.normal(k5, (hidden, 1), jnp.float32)
    return {
        "conv1": init_conv_params(k1, in_ch, edge_in, hidden, heads),
        "conv2": init_conv_params(k2, hidden, edge_in, hidden, heads),
        # W1 rows ordered as [x_src | edge_attr | x_dst], pre-split at build time.
        "mlp_W1a": W1[:hidden].astype(jnp.bfloat16),
        "mlp_W1b": W1[hidden:hidden + edge_in].astype(jnp.bfloat16),
        "mlp_W1c": W1[hidden + edge_in:].astype(jnp.bfloat16),
        "mlp_b1": s * jax.random.normal(k4, (hidden,), jnp.float32),
        "mlp_w2_row": W2.reshape(1, hidden),                    # row form for VPU+XLU path
        "mlp_b2": s * jax.random.normal(k6, (1,), jnp.float32),
    }


if __name__ == "__main__":
    N, E = 16, 32            # nodes, edges
    IN_CH, EDGE_IN = 8, 4    # node / edge feature dims
    HIDDEN, HEADS = 32, 4

    key = jax.random.PRNGKey(0)
    kx, ke, ks, kd, kp = jax.random.split(key, 5)

    x = jax.random.normal(kx, (N, IN_CH), jnp.float32)
    edge_attr = jax.random.normal(ke, (E, EDGE_IN), jnp.float32)
    edge_index = jnp.stack(
        [
            jax.random.randint(ks, (E,), 0, N, dtype=jnp.int32),
            jax.random.randint(kd, (E,), 0, N, dtype=jnp.int32),
        ],
        axis=0,
    )  # (2, E)

    params = init_params(kp, IN_CH, EDGE_IN, HIDDEN, HEADS)

    fwd = jax.jit(functools.partial(edge_gnn_classifier, heads=HEADS, hidden=HIDDEN))
    out = fwd(params, x, edge_index, edge_attr)
    out = jax.block_until_ready(out)

    assert out.shape == (E,) and out.dtype == jnp.float32
    assert bool(jnp.all(jnp.isfinite(out)))
    print("KERNEL_OK")
</pallas_src>

<mosaic_0001>
module attributes {stable_mosaic.version = 11 : i64} {
  func.func @_linear_kernel(%arg0: i32, %arg1: memref<16x4xbf16, #tpu.memory_space<vmem>>, %arg2: memref<4x128xbf16, #tpu.memory_space<vmem>>, %arg3: memref<1x128xf32, #tpu.memory_space<vmem>>, %arg4: memref<16x128xbf16, #tpu.memory_space<vmem>>) attributes {dimension_semantics = [#tpu.dimension_semantics<parallel>], iteration_bounds = array<i64: 2>, scalar_prefetch = 0 : i64, scratch_operands = 0 : i64, tpu.core_type = #tpu.core_type<tc>, window_params = [{transform_indices = @transform_0, window_bounds = array<i64: 16, 4>}, {pipeline_mode = #tpu.pipeline_mode<synchronous>, transform_indices = @transform_1, window_bounds = array<i64: 4, 128>}, {pipeline_mode = #tpu.pipeline_mode<synchronous>, transform_indices = @transform_2, window_bounds = array<i64: 1, 128>}, {transform_indices = @transform_3, window_bounds = array<i64: 16, 128>}]} {
    %c0 = arith.constant 0 : index
    %c0_0 = arith.constant 0 : index
    %0 = vector.load %arg1[%c0, %c0_0] : memref<16x4xbf16, #tpu.memory_space<vmem>>, vector<16x4xbf16>
    %c0_1 = arith.constant 0 : index
    %c0_2 = arith.constant 0 : index
    %1 = vector.load %arg2[%c0_1, %c0_2] : memref<4x128xbf16, #tpu.memory_space<vmem>>, vector<4x128xbf16>
    %cst = arith.constant dense<0.000000e+00> : vector<16x128xf32>
    %2 = tpu.matmul %0, %1, %cst {dimension_numbers = #tpu.dot_dimension_numbers<[1], [0], [0], [1], [0, 0, 1, 1], [], []>} : vector<16x4xbf16>, vector<4x128xbf16>, vector<16x128xf32> -> vector<16x128xf32>
    %c0_3 = arith.constant 0 : index
    %c0_4 = arith.constant 0 : index
    %3 = vector.load %arg3[%c0_3, %c0_4] : memref<1x128xf32, #tpu.memory_space<vmem>>, vector<1x128xf32>
    %4 = vector.broadcast %3 : vector<1x128xf32> to vector<16x128xf32>
    %5 = arith.addf %2, %4 : vector<16x128xf32>
    %6 = arith.truncf %5 : vector<16x128xf32> to vector<16x128xbf16>
    %c0_5 = arith.constant 0 : index
    %c0_6 = arith.constant 0 : index
    %7 = vector.load %arg4[%c0_5, %c0_6] : memref<16x128xbf16, #tpu.memory_space<vmem>>, vector<16x128xbf16>
    tpu.vector_store %arg4[%c0_5, %c0_6], %6 {strides = array<i32>} : memref<16x128xbf16, #tpu.memory_space<vmem>>, vector<16x128xbf16>,
    return
  }
  func.func @transform_0(%arg0: i32) -> (i32, i32) {
    %c0_i32 = arith.constant 0 : i32
    %c0_i32_0 = arith.constant 0 : i32
    return %arg0, %c0_i32 : i32, i32
  }
  func.func @transform_1(%arg0: i32) -> (i32, i32) {
    %c0_i32 = arith.constant 0 : i32
    %c0_i32_0 = arith.constant 0 : i32
    %c0_i32_1 = arith.constant 0 : i32
    return %c0_i32, %c0_i32_0 : i32, i32
  }
  func.func @transform_2(%arg0: i32) -> (i32, i32) {
    %c0_i32 = arith.constant 0 : i32
    %c0_i32_0 = arith.constant 0 : i32
    %c0_i32_1 = arith.constant 0 : i32
    return %c0_i32, %c0_i32_0 : i32, i32
  }
  func.func @transform_3(%arg0: i32) -> (i32, i32) {
    %c0_i32 = arith.constant 0 : i32
    %c0_i32_0 = arith.constant 0 : i32
    return %arg0, %c0_i32 : i32, i32
  }
}

module attributes {stable_mosaic.version = 11 : i64} {
  func.func @_linear_kernel(%arg0: i32, %arg1: memref<8x8xbf16, #tpu.memory_space<vmem>>, %arg2: memref<8x416xbf16, #tpu.memory_space<vmem>>, %arg3: memref<1x416xf32, #tpu.memory_space<vmem>>, %arg4: memref<8x416xbf16, #tpu.memory_space<vmem>>) attributes {dimension_semantics = [#tpu.dimension_semantics<parallel>], iteration_bounds = array<i64: 2>, scalar_prefetch = 0 : i64, scratch_operands = 0 : i64, tpu.core_type = #tpu.core_type<tc>, window_params = [{transform_indices = @transform_0, window_bounds = array<i64: 8, 8>}, {pipeline_mode = #tpu.pipeline_mode<synchronous>, transform_indices = @transform_1, window_bounds = array<i64: 8, 416>}, {pipeline_mode = #tpu.pipeline_mode<synchronous>, transform_indices = @transform_2, window_bounds = array<i64: 1, 416>}, {transform_indices = @transform_3, window_bounds = array<i64: 8, 416>}]} {
    %c0 = arith.constant 0 : index
    %c0_0 = arith.constant 0 : index
    %0 = vector.load %arg1[%c0, %c0_0] : memref<8x8xbf16, #tpu.memory_space<vmem>>, vector<8x8xbf16>
    %c0_1 = arith.constant 0 : index
    %c0_2 = arith.constant 0 : index
    %1 = vector.load %arg2[%c0_1, %c0_2] : memref<8x416xbf16, #tpu.memory_space<vmem>>, vector<8x416xbf16>
    %cst = arith.constant dense<0.000000e+00> : vector<8x416xf32>
    %2 = tpu.matmul %0, %1, %cst {dimension_numbers = #tpu.dot_dimension_numbers<[1], [0], [0], [1], [0, 0, 1, 1], [], []>} : vector<8x8xbf16>, vector<8x416xbf16>, vector<8x416xf32> -> vector<8x416xf32>
    %c0_3 = arith.constant 0 : index
    %c0_4 = arith.constant 0 : index
    %3 = vector.load %arg3[%c0_3, %c0_4] : memref<1x416xf32, #tpu.memory_space<vmem>>, vector<1x416xf32>
    %4 = vector.broadcast %3 : vector<1x416xf32> to vector<8x416xf32>
    %5 = arith.addf %2, %4 : vector<8x416xf32>
    %6 = arith.truncf %5 : vector<8x416xf32> to vector<8x416xbf16>
    %c0_5 = arith.constant 0 : index
    %c0_6 = arith.constant 0 : index
    %7 = vector.load %arg4[%c0_5, %c0_6] : memref<8x416xbf16, #tpu.memory_space<vmem>>, vector<8x416xbf16>
    tpu.vector_store %arg4[%c0_5, %c0_6], %6 {strides = array<i32>} : memref<8x416xbf16, #tpu.memory_space<vmem>>, vector<8x416xbf16>,
    return
  }
  func.func @transform_0(%arg0: i32) -> (i32, i32) {
    %c0_i32 = arith.constant 0 : i32
    %c0_i32_0 = arith.constant 0 : i32
    return %arg0, %c0_i32 : i32, i32
  }
  func.func @transform_1(%arg0: i32) -> (i32, i32) {
    %c0_i32 = arith.constant 0 : i32
    %c0_i32_0 = arith.constant 0 : i32
    %c0_i32_1 = arith.constant 0 : i32
    return %c0_i32, %c0_i32_0 : i32, i32
  }
  func.func @transform_2(%arg0: i32) -> (i32, i32) {
    %c0_i32 = arith.constant 0 : i32
    %c0_i32_0 = arith.constant 0 : i32
    %c0_i32_1 = arith.constant 0 : i32
    return %c0_i32, %c0_i32_0 : i32, i32
  }
  func.func @transform_3(%arg0: i32) -> (i32, i32) {
    %c0_i32 = arith.constant 0 : i32
    %c0_i32_0 = arith.constant 0 : i32
    return %arg0, %c0_i32 : i32, i32
  }
}

module attributes {stable_mosaic.version = 11 : i64} {
  func.func @_attn_prep_kernel(%arg0: i32, %arg1: memref<16x128xbf16, #tpu.memory_space<vmem>>, %arg2: memref<16x128xbf16, #tpu.memory_space<vmem>>, %arg3: memref<16x128xbf16, #tpu.memory_space<vmem>>, %arg4: memref<16x128xbf16, #tpu.memory_space<vmem>>, %arg5: memref<128x4xf32, #tpu.memory_space<vmem>>, %arg6: memref<16x4xf32, #tpu.memory_space<vmem>>, %arg7: memref<16x128xbf16, #tpu.memory_space<vmem>>) attributes {dimension_semantics = [#tpu.dimension_semantics<parallel>], iteration_bounds = array<i64: 2>, scalar_prefetch = 0 : i64, scratch_operands = 0 : i64, tpu.core_type = #tpu.core_type<tc>, window_params = [{transform_indices = @transform_0, window_bounds = array<i64: 16, 128>}, {transform_indices = @transform_1, window_bounds = array<i64: 16, 128>}, {transform_indices = @transform_2, window_bounds = array<i64: 16, 128>}, {transform_indices = @transform_3, window_bounds = array<i64: 16, 128>}, {pipeline_mode = #tpu.pipeline_mode<synchronous>, transform_indices = @transform_4, window_bounds = array<i64: 128, 4>}, {transform_indices = @transform_5, window_bounds = array<i64: 16, 4>}, {transform_indices = @transform_6, window_bounds = array<i64: 16, 128>}]} {
    %c0 = arith.constant 0 : index
    %c0_0 = arith.constant 0 : index
    %0 = vector.load %arg4[%c0, %c0_0] : memref<16x128xbf16, #tpu.memory_space<vmem>>, vector<16x128xbf16>
    %c0_1 = arith.constant 0 : index
    %c0_2 = arith.constant 0 : index
    %1 = vector.load %arg3[%c0_1, %c0_2] : memref<16x128xbf16, #tpu.memory_space<vmem>>, vector<16x128xbf16>
    %2 = arith.addf %1, %0 : vector<16x128xbf16>
    %c0_3 = arith.constant 0 : index
    %c0_4 = arith.constant 0 : index
    %3 = vector.load %arg7[%c0_3, %c0_4] : memref<16x128xbf16, #tpu.memory_space<vmem>>, vector<16x128xbf16>
    tpu.vector_store %arg7[%c0_3, %c0_4], %2 {strides = array<i32>} : memref<16x128xbf16, #tpu.memory_space<vmem>>, vector<16x128xbf16>,
    %c0_5 = arith.constant 0 : index
    %c0_6 = arith.constant 0 : index
    %4 = vector.load %arg2[%c0_5, %c0_6] : memref<16x128xbf16, #tpu.memory_space<vmem>>, vector<16x128xbf16>
    %5 = arith.extf %4 : vector<16x128xbf16> to vector<16x128xf32>
    %6 = arith.extf %0 : vector<16x128xbf16> to vector<16x128xf32>
    %7 = arith.addf %5, %6 : vector<16x128xf32>
    %c0_7 = arith.constant 0 : index
    %c0_8 = arith.constant 0 : index
    %8 = vector.load %arg1[%c0_7, %c0_8] : memref<16x128xbf16, #tpu.memory_space<vmem>>, vector<16x128xbf16>
    %9 = arith.extf %8 : vector<16x128xbf16> to vector<16x128xf32>
    %10 = arith.mulf %9, %7 : vector<16x128xf32>
    %c0_9 = arith.constant 0 : index
    %c0_10 = arith.constant 0 : index
    %11 = vector.load %arg5[%c0_9, %c0_10] : memref<128x4xf32, #tpu.memory_space<vmem>>, vector<128x4xf32>
    %cst = arith.constant dense<0.000000e+00> : vector<16x4xf32>
    %12 = tpu.matmul %10, %11, %cst {dimension_numbers = #tpu.dot_dimension_numbers<[1], [0], [0], [1], [0, 0, 1, 1], [], []>} : vector<16x128xf32>, vector<128x4xf32>, vector<16x4xf32> -> vector<16x4xf32>
    %cst_11 = arith.constant 0.176776692 : f32
    %13 = vector.broadcast %cst_11 : f32 to vector<16x4xf32>
    %14 = arith.mulf %12, %13 : vector<16x4xf32>
    %c0_12 = arith.constant 0 : index
    %c0_13 = arith.constant 0 : index
    %15 = vector.load %arg6[%c0_12, %c0_13] : memref<16x4xf32, #tpu.memory_space<vmem>>, vector<16x4xf32>
    tpu.vector_store %arg6[%c0_12, %c0_13], %14 {strides = array<i32>} : memref<16x4xf32, #tpu.memory_space<vmem>>, vector<16x4xf32>,
    return
  }
  func.func @transform_0(%arg0: i32) -> (i32, i32) {
    %c0_i32 = arith.constant 0 : i32
    %c0_i32_0 = arith.constant 0 : i32
    return %arg0, %c0_i32 : i32, i32
  }
  func.func @transform_1(%arg0: i32) -> (i32, i32) {
    %c0_i32 = arith.constant 0 : i32
    %c0_i32_0 = arith.constant 0 : i32
    return %arg0, %c0_i32 : i32, i32
  }
  func.func @transform_2(%arg0: i32) -> (i32, i32) {
    %c0_i32 = arith.constant 0 : i32
    %c0_i32_0 = arith.constant 0 : i32
    return %arg0, %c0_i32 : i32, i32
  }
  func.func @transform_3(%arg0: i32) -> (i32, i32) {
    %c0_i32 = arith.constant 0 : i32
    %c0_i32_0 = arith.constant 0 : i32
    return %arg0, %c0_i32 : i32, i32
  }
  func.func @transform_4(%arg0: i32) -> (i32, i32) {
    %c0_i32 = arith.constant 0 : i32
    %c0_i32_0 = arith.constant 0 : i32
    %c0_i32_1 = arith.constant 0 : i32
    return %c0_i32, %c0_i32_0 : i32, i32
  }
  func.func @transform_5(%arg0: i32) -> (i32, i32) {
    %c0_i32 = arith.constant 0 : i32
    %c0_i32_0 = arith.constant 0 : i32
    return %arg0, %c0_i32 : i32, i32
  }
  func.func @transform_6(%arg0: i32) -> (i32, i32) {
    %c0_i32 = arith.constant 0 : i32
    %c0_i32_0 = arith.constant 0 : i32
    return %arg0, %c0_i32 : i32, i32
  }
}

module attributes {stable_mosaic.version = 11 : i64} {
  func.func @_msg_agg_kernel(%arg0: i32, %arg1: memref<16x128xbf16, #tpu.memory_space<vmem>>, %arg2: memref<16x4xf32, #tpu.memory_space<vmem>>, %arg3: memref<16x1xi32, #tpu.memory_space<vmem>>, %arg4: memref<4x128xf32, #tpu.memory_space<vmem>>, %arg5: memref<16x128xf32, #tpu.memory_space<vmem>>, %arg6: memref<16x4xf32, #tpu.memory_space<vmem>>) attributes {dimension_semantics = [#tpu.dimension_semantics<arbitrary>], iteration_bounds = array<i64: 2>, scalar_prefetch = 0 : i64, scratch_operands = 0 : i64, tpu.core_type = #tpu.core_type<tc>, window_params = [{transform_indices = @transform_0, window_bounds = array<i64: 16, 128>}, {transform_indices = @transform_1, window_bounds = array<i64: 16, 4>}, {transform_indices = @transform_2, window_bounds = array<i64: 16, 1>}, {pipeline_mode = #tpu.pipeline_mode<synchronous>, transform_indices = @transform_3, window_bounds = array<i64: 4, 128>}, {pipeline_mode = #tpu.pipeline_mode<synchronous>, transform_indices = @transform_4, window_bounds = array<i64: 16, 128>}, {pipeline_mode = #tpu.pipeline_mode<synchronous>, transform_indices = @transform_5, window_bounds = array<i64: 16, 4>}]} {
    %c0_i32 = arith.constant 0 : i32
    %0 = arith.cmpi eq, %arg0, %c0_i32 : i32
    %1 = arith.extui %0 : i1 to i32
    %c0_i32_0 = arith.constant 0 : i32
    %2 = arith.cmpi ne, %1, %c0_i32_0 : i32
    scf.if %2 {
      %cst_18 = arith.constant 0.000000e+00 : f32
      %25 = vector.broadcast %cst_18 : f32 to vector<16x128xf32>
      %c0_19 = arith.constant 0 : index
      %c0_20 = arith.constant 0 : index
      %26 = vector.load %arg5[%c0_19, %c0_20] : memref<16x128xf32, #tpu.memory_space<vmem>>, vector<16x128xf32>
      tpu.vector_store %arg5[%c0_19, %c0_20], %25 {strides = array<i32>} : memref<16x128xf32, #tpu.memory_space<vmem>>, vector<16x128xf32>,
      %cst_21 = arith.constant 0.000000e+00 : f32
      %27 = vector.broadcast %cst_21 : f32 to vector<16x4xf32>
      %c0_22 = arith.constant 0 : index
      %c0_23 = arith.constant 0 : index
      %28 = vector.load %arg6[%c0_22, %c0_23] : memref<16x4xf32, #tpu.memory_space<vmem>>, vector<16x4xf32>
      tpu.vector_store %arg6[%c0_22, %c0_23], %27 {strides = array<i32>} : memref<16x4xf32, #tpu.memory_space<vmem>>, vector<16x4xf32>,
    } else {
    }
    %c0 = arith.constant 0 : index
    %c0_1 = arith.constant 0 : index
    %3 = vector.load %arg2[%c0, %c0_1] : memref<16x4xf32, #tpu.memory_space<vmem>>, vector<16x4xf32>
    %c0_2 = arith.constant 0 : index
    %c0_3 = arith.constant 0 : index
    %4 = vector.load %arg4[%c0_2, %c0_3] : memref<4x128xf32, #tpu.memory_space<vmem>>, vector<4x128xf32>
    %cst = arith.constant dense<0.000000e+00> : vector<16x128xf32>
    %5 = tpu.matmul %3, %4, %cst {dimension_numbers = #tpu.dot_dimension_numbers<[1], [0], [0], [1], [0, 0, 1, 1], [], []>} : vector<16x4xf32>, vector<4x128xf32>, vector<16x128xf32> -> vector<16x128xf32>
    %c0_4 = arith.constant 0 : index
    %c0_5 = arith.constant 0 : index
    %6 = vector.load %arg1[%c0_4, %c0_5] : memref<16x128xbf16, #tpu.memory_space<vmem>>, vector<16x128xbf16>
    %7 = arith.extf %6 : vector<16x128xbf16> to vector<16x128xf32>
    %8 = arith.mulf %7, %5 : vector<16x128xf32>
    %9 = arith.truncf %8 : vector<16x128xf32> to vector<16x128xbf16>
    %10 = tpu.iota {dimensions = array<i32: 1>} : vector<16x16xi32>
    %c0_6 = arith.constant 0 : index
    %c0_7 = arith.constant 0 : index
    %11 = vector.load %arg3[%c0_6, %c0_7] : memref<16x1xi32, #tpu.memory_space<vmem>>, vector<16x1xi32>
    %12 = vector.broadcast %11 : vector<16x1xi32> to vector<16x16xi32>
    %13 = arith.cmpi eq, %10, %12 : vector<16x16xi32>
    %14 = arith.extui %13 : vector<16x16xi1> to vector<16x16xi32>
    %15 = arith.sitofp %14 : vector<16x16xi32> to vector<16x16xf32>
    %c0_8 = arith.constant 0 : index
    %c0_9 = arith.constant 0 : index
    %16 = vector.load %arg5[%c0_8, %c0_9] : memref<16x128xf32, #tpu.memory_space<vmem>>, vector<16x128xf32>
    %17 = arith.truncf %15 : vector<16x16xf32> to vector<16x16xbf16>
    %cst_10 = arith.constant dense<0.000000e+00> : vector<16x128xf32>
    %18 = tpu.matmul %17, %9, %cst_10 {dimension_numbers = #tpu.dot_dimension_numbers<[0], [0], [1], [1], [0, 1, 1, 1], [], []>} : vector<16x16xbf16>, vector<16x128xbf16>, vector<16x128xf32> -> vector<16x128xf32>
    %19 = arith.addf %16, %18 : vector<16x128xf32>
    %c0_11 = arith.constant 0 : index
    %c0_12 = arith.constant 0 : index
    %20 = vector.load %arg5[%c0_11, %c0_12] : memref<16x128xf32, #tpu.memory_space<vmem>>, vector<16x128xf32>
    tpu.vector_store %arg5[%c0_11, %c0_12], %19 {strides = array<i32>} : memref<16x128xf32, #tpu.memory_space<vmem>>, vector<16x128xf32>,
    %c0_13 = arith.constant 0 : index
    %c0_14 = arith.constant 0 : index
    %21 = vector.load %arg6[%c0_13, %c0_14] : memref<16x4xf32, #tpu.memory_space<vmem>>, vector<16x4xf32>
    %cst_15 = arith.constant dense<0.000000e+00> : vector<16x4xf32>
    %22 = tpu.matmul %15, %3, %cst_15 {dimension_numbers = #tpu.dot_dimension_numbers<[0], [0], [1], [1], [0, 1, 1, 1], [], []>} : vector<16x16xf32>, vector<16x4xf32>, vector<16x4xf32> -> vector<16x4xf32>
    %23 = arith.addf %21, %22 : vector<16x4xf32>
    %c0_16 = arith.constant 0 : index
    %c0_17 = arith.constant 0 : index
    %24 = vector.load %arg6[%c0_16, %c0_17] : memref<16x4xf32, #tpu.memory_space<vmem>>, vector<16x4xf32>
    tpu.vector_store %arg6[%c0_16, %c0_17], %23 {strides = array<i32>} : memref<16x4xf32, #tpu.memory_space<vmem>>, vector<16x4xf32>,
    return
  }
  func.func @transform_0(%arg0: i32) -> (i32, i32) {
    %c0_i32 = arith.constant 0 : i32
    %c0_i32_0 = arith.constant 0 : i32
    return %arg0, %c0_i32 : i32, i32
  }
  func.func @transform_1(%arg0: i32) -> (i32, i32) {
    %c0_i32 = arith.constant 0 : i32
    %c0_i32_0 = arith.constant 0 : i32
    return %arg0, %c0_i32 : i32, i32
  }
  func.func @transform_2(%arg0: i32) -> (i32, i32) {
    %c0_i32 = arith.constant 0 : i32
    %c0_i32_0 = arith.constant 0 : i32
    return %arg0, %c0_i32 : i32, i32
  }
  func.func @transform_3(%arg0: i32) -> (i32, i32) {
    %c0_i32 = arith.constant 0 : i32
    %c0_i32_0 = arith.constant 0 : i32
    %c0_i32_1 = arith.constant 0 : i32
    return %c0_i32, %c0_i32_0 : i32, i32
  }
  func.func @transform_4(%arg0: i32) -> (i32, i32) {
    %c0_i32 = arith.constant 0 : i32
    %c0_i32_0 = arith.constant 0 : i32
    %c0_i32_1 = arith.constant 0 : i32
    return %c0_i32, %c0_i32_0 : i32, i32
  }
  func.func @transform_5(%arg0: i32) -> (i32, i32) {
    %c0_i32 = arith.constant 0 : i32
    %c0_i32_0 = arith.constant 0 : i32
    %c0_i32_1 = arith.constant 0 : i32
    return %c0_i32, %c0_i32_0 : i32, i32
  }
}

module attributes {stable_mosaic.version = 11 : i64} {
  func.func @_linear_kernel(%arg0: i32, %arg1: memref<8x32xbf16, #tpu.memory_space<vmem>>, %arg2: memref<32x416xbf16, #tpu.memory_space<vmem>>, %arg3: memref<1x416xf32, #tpu.memory_space<vmem>>, %arg4: memref<8x416xbf16, #tpu.memory_space<vmem>>) attributes {dimension_semantics = [#tpu.dimension_semantics<parallel>], iteration_bounds = array<i64: 2>, scalar_prefetch = 0 : i64, scratch_operands = 0 : i64, tpu.core_type = #tpu.core_type<tc>, window_params = [{transform_indices = @transform_0, window_bounds = array<i64: 8, 32>}, {pipeline_mode = #tpu.pipeline_mode<synchronous>, transform_indices = @transform_1, window_bounds = array<i64: 32, 416>}, {pipeline_mode = #tpu.pipeline_mode<synchronous>, transform_indices = @transform_2, window_bounds = array<i64: 1, 416>}, {transform_indices = @transform_3, window_bounds = array<i64: 8, 416>}]} {
    %c0 = arith.constant 0 : index
    %c0_0 = arith.constant 0 : index
    %0 = vector.load %arg1[%c0, %c0_0] : memref<8x32xbf16, #tpu.memory_space<vmem>>, vector<8x32xbf16>
    %c0_1 = arith.constant 0 : index
    %c0_2 = arith.constant 0 : index
    %1 = vector.load %arg2[%c0_1, %c0_2] : memref<32x416xbf16, #tpu.memory_space<vmem>>, vector<32x416xbf16>
    %cst = arith.constant dense<0.000000e+00> : vector<8x416xf32>
    %2 = tpu.matmul %0, %1, %cst {dimension_numbers = #tpu.dot_dimension_numbers<[1], [0], [0], [1], [0, 0, 1, 1], [], []>} : vector<8x32xbf16>, vector<32x416xbf16>, vector<8x416xf32> -> vector<8x416xf32>
    %c0_3 = arith.constant 0 : index
    %c0_4 = arith.constant 0 : index
    %3 = vector.load %arg3[%c0_3, %c0_4] : memref<1x416xf32, #tpu.memory_space<vmem>>, vector<1x416xf32>
    %4 = vector.broadcast %3 : vector<1x416xf32> to vector<8x416xf32>
    %5 = arith.addf %2, %4 : vector<8x416xf32>
    %6 = arith.truncf %5 : vector<8x416xf32> to vector<8x416xbf16>
    %c0_5 = arith.constant 0 : index
    %c0_6 = arith.constant 0 : index
    %7 = vector.load %arg4[%c0_5, %c0_6] : memref<8x416xbf16, #tpu.memory_space<vmem>>, vector<8x416xbf16>
    tpu.vector_store %arg4[%c0_5, %c0_6], %6 {strides = array<i32>} : memref<8x416xbf16, #tpu.memory_space<vmem>>, vector<8x416xbf16>,
    return
  }
  func.func @transform_0(%arg0: i32) -> (i32, i32) {
    %c0_i32 = arith.constant 0 : i32
    %c0_i32_0 = arith.constant 0 : i32
    return %arg0, %c0_i32 : i32, i32
  }
  func.func @transform_1(%arg0: i32) -> (i32, i32) {
    %c0_i32 = arith.constant 0 : i32
    %c0_i32_0 = arith.constant 0 : i32
    %c0_i32_1 = arith.constant 0 : i32
    return %c0_i32, %c0_i32_0 : i32, i32
  }
  func.func @transform_2(%arg0: i32) -> (i32, i32) {
    %c0_i32 = arith.constant 0 : i32
    %c0_i32_0 = arith.constant 0 : i32
    %c0_i32_1 = arith.constant 0 : i32
    return %c0_i32, %c0_i32_0 : i32, i32
  }
  func.func @transform_3(%arg0: i32) -> (i32, i32) {
    %c0_i32 = arith.constant 0 : i32
    %c0_i32_0 = arith.constant 0 : i32
    return %arg0, %c0_i32 : i32, i32
  }
}

module attributes {stable_mosaic.version = 11 : i64} {
  func.func @_combine_kernel(%arg0: i32, %arg1: memref<8x128xf32, #tpu.memory_space<vmem>>, %arg2: memref<8x4xf32, #tpu.memory_space<vmem>>, %arg3: memref<8x32xbf16, #tpu.memory_space<vmem>>, %arg4: memref<4x128xf32, #tpu.memory_space<vmem>>, %arg5: memref<128x32xf32, #tpu.memory_space<vmem>>, %arg6: memref<8x32xbf16, #tpu.memory_space<vmem>>) attributes {dimension_semantics = [#tpu.dimension_semantics<parallel>], iteration_bounds = array<i64: 2>, scalar_prefetch = 0 : i64, scratch_operands = 0 : i64, tpu.core_type = #tpu.core_type<tc>, window_params = [{transform_indices = @transform_0, window_bounds = array<i64: 8, 128>}, {transform_indices = @transform_1, window_bounds = array<i64: 8, 4>}, {transform_indices = @transform_2, window_bounds = array<i64: 8, 32>}, {pipeline_mode = #tpu.pipeline_mode<synchronous>, transform_indices = @transform_3, window_bounds = array<i64: 4, 128>}, {pipeline_mode = #tpu.pipeline_mode<synchronous>, transform_indices = @transform_4, window_bounds = array<i64: 128, 32>}, {transform_indices = @transform_5, window_bounds = array<i64: 8, 32>}]} {
    %c0 = arith.constant 0 : index
    %c0_0 = arith.constant 0 : index
    %0 = vector.load %arg2[%c0, %c0_0] : memref<8x4xf32, #tpu.memory_space<vmem>>, vector<8x4xf32>
    %c0_1 = arith.constant 0 : index
    %c0_2 = arith.constant 0 : index
    %1 = vector.load %arg4[%c0_1, %c0_2] : memref<4x128xf32, #tpu.memory_space<vmem>>, vector<4x128xf32>
    %cst = arith.constant dense<0.000000e+00> : vector<8x128xf32>
    %2 = tpu.matmul %0, %1, %cst {dimension_numbers = #tpu.dot_dimension_numbers<[1], [0], [0], [1], [0, 0, 1, 1], [], []>} : vector<8x4xf32>, vector<4x128xf32>, vector<8x128xf32> -> vector<8x128xf32>
    %cst_3 = arith.constant 1.000000e-16 : f32
    %3 = vector.broadcast %cst_3 : f32 to vector<8x128xf32>
    %4 = arith.addf %2, %3 : vector<8x128xf32>
    %5 = tpu.reciprocal %4 {approx = true} : vector<8x128xf32> -> vector<8x128xf32>
    %c0_4 = arith.constant 0 : index
    %c0_5 = arith.constant 0 : index
    %6 = vector.load %arg1[%c0_4, %c0_5] : memref<8x128xf32, #tpu.memory_space<vmem>>, vector<8x128xf32>
    %7 = arith.mulf %6, %5 : vector<8x128xf32>
    %c0_6 = arith.constant 0 : index
    %c0_7 = arith.constant 0 : index
    %8 = vector.load %arg5[%c0_6, %c0_7] : memref<128x32xf32, #tpu.memory_space<vmem>>, vector<128x32xf32>
    %cst_8 = arith.constant dense<0.000000e+00> : vector<8x32xf32>
    %9 = tpu.matmul %7, %8, %cst_8 {dimension_numbers = #tpu.dot_dimension_numbers<[1], [0], [0], [1], [0, 0, 1, 1], [], []>} : vector<8x128xf32>, vector<128x32xf32>, vector<8x32xf32> -> vector<8x32xf32>
    %c0_9 = arith.constant 0 : index
    %c0_10 = arith.constant 0 : index
    %10 = vector.load %arg3[%c0_9, %c0_10] : memref<8x32xbf16, #tpu.memory_space<vmem>>, vector<8x32xbf16>
    %11 = arith.extf %10 : vector<8x32xbf16> to vector<8x32xf32>
    %12 = arith.addf %9, %11 : vector<8x32xf32>
    %cst_11 = arith.constant 0.000000e+00 : f32
    %13 = vector.broadcast %cst_11 : f32 to vector<8x32xf32>
    %14 = arith.maximumf %12, %13 : vector<8x32xf32>
    %15 = arith.truncf %14 : vector<8x32xf32> to vector<8x32xbf16>
    %c0_12 = arith.constant 0 : index
    %c0_13 = arith.constant 0 : index
    %16 = vector.load %arg6[%c0_12, %c0_13] : memref<8x32xbf16, #tpu.memory_space<vmem>>, vector<8x32xbf16>
    tpu.vector_store %arg6[%c0_12, %c0_13], %15 {strides = array<i32>} : memref<8x32xbf16, #tpu.memory_space<vmem>>, vector<8x32xbf16>,
    return
  }
  func.func @transform_0(%arg0: i32) -> (i32, i32) {
    %c0_i32 = arith.constant 0 : i32
    %c0_i32_0 = arith.constant 0 : i32
    return %arg0, %c0_i32 : i32, i32
  }
  func.func @transform_1(%arg0: i32) -> (i32, i32) {
    %c0_i32 = arith.constant 0 : i32
    %c0_i32_0 = arith.constant 0 : i32
    return %arg0, %c0_i32 : i32, i32
  }
  func.func @transform_2(%arg0: i32) -> (i32, i32) {
    %c0_i32 = arith.constant 0 : i32
    %c0_i32_0 = arith.constant 0 : i32
    return %arg0, %c0_i32 : i32, i32
  }
  func.func @transform_3(%arg0: i32) -> (i32, i32) {
    %c0_i32 = arith.constant 0 : i32
    %c0_i32_0 = arith.constant 0 : i32
    %c0_i32_1 = arith.constant 0 : i32
    return %c0_i32, %c0_i32_0 : i32, i32
  }
  func.func @transform_4(%arg0: i32) -> (i32, i32) {
    %c0_i32 = arith.constant 0 : i32
    %c0_i32_0 = arith.constant 0 : i32
    %c0_i32_1 = arith.constant 0 : i32
    return %c0_i32, %c0_i32_0 : i32, i32
  }
  func.func @transform_5(%arg0: i32) -> (i32, i32) {
    %c0_i32 = arith.constant 0 : i32
    %c0_i32_0 = arith.constant 0 : i32
    return %arg0, %c0_i32 : i32, i32
  }
}

module attributes {stable_mosaic.version = 11 : i64} {
  func.func @_edge_mlp_kernel(%arg0: i32, %arg1: memref<16x32xbf16, #tpu.memory_space<vmem>>, %arg2: memref<16x4xbf16, #tpu.memory_space<vmem>>, %arg3: memref<16x32xbf16, #tpu.memory_space<vmem>>, %arg4: memref<32x32xbf16, #tpu.memory_space<vmem>>, %arg5: memref<4x32xbf16, #tpu.memory_space<vmem>>, %arg6: memref<32x32xbf16, #tpu.memory_space<vmem>>, %arg7: memref<1x32xf32, #tpu.memory_space<vmem>>, %arg8: memref<1x32xf32, #tpu.memory_space<vmem>>, %arg9: memref<1x1xf32, #tpu.memory_space<vmem>>, %arg10: memref<16x1xf32, #tpu.memory_space<vmem>>) attributes {dimension_semantics = [#tpu.dimension_semantics<parallel>], iteration_bounds = array<i64: 2>, scalar_prefetch = 0 : i64, scratch_operands = 0 : i64, tpu.core_type = #tpu.core_type<tc>, window_params = [{transform_indices = @transform_0, window_bounds = array<i64: 16, 32>}, {transform_indices = @transform_1, window_bounds = array<i64: 16, 4>}, {transform_indices = @transform_2, window_bounds = array<i64: 16, 32>}, {pipeline_mode = #tpu.pipeline_mode<synchronous>, transform_indices = @transform_3, window_bounds = array<i64: 32, 32>}, {pipeline_mode = #tpu.pipeline_mode<synchronous>, transform_indices = @transform_4, window_bounds = array<i64: 4, 32>}, {pipeline_mode = #tpu.pipeline_mode<synchronous>, transform_indices = @transform_5, window_bounds = array<i64: 32, 32>}, {pipeline_mode = #tpu.pipeline_mode<synchronous>, transform_indices = @transform_6, window_bounds = array<i64: 1, 32>}, {pipeline_mode = #tpu.pipeline_mode<synchronous>, transform_indices = @transform_7, window_bounds = array<i64: 1, 32>}, {pipeline_mode = #tpu.pipeline_mode<synchronous>, transform_indices = @transform_8, window_bounds = array<i64: 1, 1>}, {transform_indices = @transform_9, window_bounds = array<i64: 16, 1>}]} {
    %c0 = arith.constant 0 : index
    %c0_0 = arith.constant 0 : index
    %0 = vector.load %arg1[%c0, %c0_0] : memref<16x32xbf16, #tpu.memory_space<vmem>>, vector<16x32xbf16>
    %c0_1 = arith.constant 0 : index
    %c0_2 = arith.constant 0 : index
    %1 = vector.load %arg4[%c0_1, %c0_2] : memref<32x32xbf16, #tpu.memory_space<vmem>>, vector<32x32xbf16>
    %cst = arith.constant dense<0.000000e+00> : vector<16x32xf32>
    %2 = tpu.matmul %0, %1, %cst {dimension_numbers = #tpu.dot_dimension_numbers<[1], [0], [0], [1], [0, 0, 1, 1], [], []>} : vector<16x32xbf16>, vector<32x32xbf16>, vector<16x32xf32> -> vector<16x32xf32>
    %c0_3 = arith.constant 0 : index
    %c0_4 = arith.constant 0 : index
    %3 = vector.load %arg2[%c0_3, %c0_4] : memref<16x4xbf16, #tpu.memory_space<vmem>>, vector<16x4xbf16>
    %c0_5 = arith.constant 0 : index
    %c0_6 = arith.constant 0 : index
    %4 = vector.load %arg5[%c0_5, %c0_6] : memref<4x32xbf16, #tpu.memory_space<vmem>>, vector<4x32xbf16>
    %cst_7 = arith.constant dense<0.000000e+00> : vector<16x32xf32>
    %5 = tpu.matmul %3, %4, %cst_7 {dimension_numbers = #tpu.dot_dimension_numbers<[1], [0], [0], [1], [0, 0, 1, 1], [], []>} : vector<16x4xbf16>, vector<4x32xbf16>, vector<16x32xf32> -> vector<16x32xf32>
    %6 = arith.addf %2, %5 : vector<16x32xf32>
    %c0_8 = arith.constant 0 : index
    %c0_9 = arith.constant 0 : index
    %7 = vector.load %arg3[%c0_8, %c0_9] : memref<16x32xbf16, #tpu.memory_space<vmem>>, vector<16x32xbf16>
    %c0_10 = arith.constant 0 : index
    %c0_11 = arith.constant 0 : index
    %8 = vector.load %arg6[%c0_10, %c0_11] : memref<32x32xbf16, #tpu.memory_space<vmem>>, vector<32x32xbf16>
    %cst_12 = arith.constant dense<0.000000e+00> : vector<16x32xf32>
    %9 = tpu.matmul %7, %8, %cst_12 {dimension_numbers = #tpu.dot_dimension_numbers<[1], [0], [0], [1], [0, 0, 1, 1], [], []>} : vector<16x32xbf16>, vector<32x32xbf16>, vector<16x32xf32> -> vector<16x32xf32>
    %10 = arith.addf %6, %9 : vector<16x32xf32>
    %c0_13 = arith.constant 0 : index
    %c0_14 = arith.constant 0 : index
    %11 = vector.load %arg7[%c0_13, %c0_14] : memref<1x32xf32, #tpu.memory_space<vmem>>, vector<1x32xf32>
    %12 = vector.broadcast %11 : vector<1x32xf32> to vector<16x32xf32>
    %13 = arith.addf %10, %12 : vector<16x32xf32>
    %cst_15 = arith.constant 0.000000e+00 : f32
    %14 = vector.broadcast %cst_15 : f32 to vector<16x32xf32>
    %15 = arith.maximumf %13, %14 : vector<16x32xf32>
    %c0_16 = arith.constant 0 : index
    %c0_17 = arith.constant 0 : index
    %16 = vector.load %arg8[%c0_16, %c0_17] : memref<1x32xf32, #tpu.memory_space<vmem>>, vector<1x32xf32>
    %17 = vector.broadcast %16 : vector<1x32xf32> to vector<16x32xf32>
    %18 = arith.mulf %15, %17 : vector<16x32xf32>
    %cst_18 = arith.constant dense<0.000000e+00> : vector<16xf32>
    %19 = vector.multi_reduction <add>, %18, %cst_18 [1] : vector<16x32xf32> to vector<16xf32>
    %20 = vector.shape_cast %19 : vector<16xf32> to vector<16x1xf32>
    %c0_19 = arith.constant 0 : index
    %c0_20 = arith.constant 0 : index
    %21 = vector.load %arg9[%c0_19, %c0_20] : memref<1x1xf32, #tpu.memory_space<vmem>>, vector<1x1xf32>
    %22 = vector.broadcast %21 : vector<1x1xf32> to vector<16x1xf32>
    %23 = arith.addf %20, %22 : vector<16x1xf32>
    %c0_21 = arith.constant 0 : index
    %c0_22 = arith.constant 0 : index
    %24 = vector.load %arg10[%c0_21, %c0_22] : memref<16x1xf32, #tpu.memory_space<vmem>>, vector<16x1xf32>
    tpu.vector_store %arg10[%c0_21, %c0_22], %23 {strides = array<i32>} : memref<16x1xf32, #tpu.memory_space<vmem>>, vector<16x1xf32>,
    return
  }
  func.func @transform_0(%arg0: i32) -> (i32, i32) {
    %c0_i32 = arith.constant 0 : i32
    %c0_i32_0 = arith.constant 0 : i32
    return %arg0, %c0_i32 : i32, i32
  }
  func.func @transform_1(%arg0: i32) -> (i32, i32) {
    %c0_i32 = arith.constant 0 : i32
    %c0_i32_0 = arith.constant 0 : i32
    return %arg0, %c0_i32 : i32, i32
  }
  func.func @transform_2(%arg0: i32) -> (i32, i32) {
    %c0_i32 = arith.constant 0 : i32
    %c0_i32_0 = arith.constant 0 : i32
    return %arg0, %c0_i32 : i32, i32
  }
  func.func @transform_3(%arg0: i32) -> (i32, i32) {
    %c0_i32 = arith.constant 0 : i32
    %c0_i32_0 = arith.constant 0 : i32
    %c0_i32_1 = arith.constant 0 : i32
    return %c0_i32, %c0_i32_0 : i32, i32
  }
  func.func @transform_4(%arg0: i32) -> (i32, i32) {
    %c0_i32 = arith.constant 0 : i32
    %c0_i32_0 = arith.constant 0 : i32
    %c0_i32_1 = arith.constant 0 : i32
    return %c0_i32, %c0_i32_0 : i32, i32
  }
  func.func @transform_5(%arg0: i32) -> (i32, i32) {
    %c0_i32 = arith.constant 0 : i32
    %c0_i32_0 = arith.constant 0 : i32
    %c0_i32_1 = arith.constant 0 : i32
    return %c0_i32, %c0_i32_0 : i32, i32
  }
  func.func @transform_6(%arg0: i32) -> (i32, i32) {
    %c0_i32 = arith.constant 0 : i32
    %c0_i32_0 = arith.constant 0 : i32
    %c0_i32_1 = arith.constant 0 : i32
    return %c0_i32, %c0_i32_0 : i32, i32
  }
  func.func @transform_7(%arg0: i32) -> (i32, i32) {
    %c0_i32 = arith.constant 0 : i32
    %c0_i32_0 = arith.constant 0 : i32
    %c0_i32_1 = arith.constant 0 : i32
    return %c0_i32, %c0_i32_0 : i32, i32
  }
  func.func @transform_8(%arg0: i32) -> (i32, i32) {
    %c0_i32 = arith.constant 0 : i32
    %c0_i32_0 = arith.constant 0 : i32
    %c0_i32_1 = arith.constant 0 : i32
    return %c0_i32, %c0_i32_0 : i32, i32
  }
  func.func @transform_9(%arg0: i32) -> (i32, i32) {
    %c0_i32 = arith.constant 0 : i32
    %c0_i32_0 = arith.constant 0 : i32
    return %arg0, %c0_i32 : i32, i32
  }
}

</mosaic_0001>

<llo_original>
// kernel: edge_gnn_classifier.11
$region0: #{edge_gnn_classifier.11}
  #allocation0 [shape = 'u32[]', space=smem, size = 0x4, offset = 0x4, fixed_abs, tag = 'smem constant byte address 0x4 - core index']
  #allocation1 [shape = 'u32[144,128]{1,0:T(1,128)}', space=vmem, size = 0x12000, scoped, tag = 'internal scratch']
  %s0 = inlined_call_operand.vmem [shape: bf16[16,8], index: 0, kind: input, shape index: {}]
  %s1 = inlined_call_operand.vmem [shape: bf16[8,416], index: 1, kind: input, shape index: {}]
  %s2 = inlined_call_operand.vmem [shape: f32[1,416], index: 2, kind: input, shape index: {}]
  %s3 = inlined_call_operand.vmem [shape: bf16[16,416], index: 3, kind: output, shape index: {}]
  %s4 = sld [smem:[#allocation0]]
  $region45: #{edge_gnn_classifier.11} parent=0
    _
  %s6 = ssub.s32 1, %s4
  %s7 = scalar_select 0, %s6, %s4
  loop: start=0, step=1, limit=4
  $region2: #{edge_gnn_classifier.11} parent=0 // loop_pre_header
    _
  $region3: #{edge_gnn_classifier.11} parent=0 // loop_header
    %s9 = sphi 0, %s13
    %p10 = scmp.ge.s32.totalorder %s9, 4
    %s19 = sphi 0, %s21
    %s22 = sphi 0, %s19
    %s23 = sphi 0, %s22
    %s39 = sphi 0, %s23
    %s43 = sphi 0, %s43
    %s45 = sphi 0, %s43
    %s46 = sphi 0, %s45
    %s60 = sphi 0, %s46
    %s64 = sphi 0, %s64
    %s66 = sphi 0, %s64
    %s67 = sphi 0, %s66
    %s81 = sphi 0, %s67
    %s87 = sphi 0, %s89
    %s90 = sphi 0, %s87
    %s91 = sphi 0, %s90
    %s107 = sphi 0, %s91
  $region4: #{edge_gnn_classifier.11} parent=0 // loop_header_branch
    %12 = sbr.rel (%p10) target = $region8
  $region5: #{edge_gnn_classifier.11} parent=0 // loop_body
    %s14 = ssub.s32 %s9, 1
    %s15 = ssub.s32 %s9, 2
    %s16 = sadd.s32 %s9, 1
    %s17 = ssub.s32 %s9, %s16
    %p18 = scmp.eq.s32.totalorder %s17, 0
    %s20 = sadd.s32 %s19, 1
    %s21 = scalar_select %p18, %s19, %s20
    %p24 = pneg %p18
    %p25 = scmp.eq.s32.totalorder %s9, 1
    %p26 = por %p24, %p25
    %p27 = scmp.ne.s32.totalorder %s19, %s22
    %p28 = scmp.eq.s32.totalorder %s9, 0
    %p29 = por %p27, %p28
    %p30 = scmp.ne.s32.totalorder %s19, %s22
    %p31 = scmp.eq.s32.totalorder %s14, 1
    %p32 = por %p30, %p31
    %p33 = scmp.ne.s32.totalorder %s22, %s23
    %p34 = scmp.eq.s32.totalorder %s14, 0
    %p35 = por %p33, %p34
    %p36 = scmp.ne.s32.totalorder %s22, %s23
    %p37 = scmp.eq.s32.totalorder %s15, 1
    %p38 = por %p36, %p37
    %p40 = scmp.ne.s32.totalorder %s23, %s39
    %p41 = scmp.eq.s32.totalorder %s15, 0
    %p42 = por %p40, %p41
    %s44 = sadd.s32 %s43, 1
    %p47 = scmp.eq.s32.totalorder %s9, 1
    %p48 = scmp.ne.s32.totalorder %s43, %s45
    %p49 = scmp.eq.s32.totalorder %s9, 0
    %p50 = por %p48, %p49
    %p51 = scmp.ne.s32.totalorder %s43, %s45
    %p52 = scmp.eq.s32.totalorder %s14, 1
    %p53 = por %p51, %p52
    %p54 = scmp.ne.s32.totalorder %s45, %s46
    %p55 = scmp.eq.s32.totalorder %s14, 0
    %p56 = por %p54, %p55
    %p57 = scmp.ne.s32.totalorder %s45, %s46
    %p58 = scmp.eq.s32.totalorder %s15, 1
    %p59 = por %p57, %p58
    %p61 = scmp.ne.s32.totalorder %s46, %s60
    %p62 = scmp.eq.s32.totalorder %s15, 0
    %p63 = por %p61, %p62
    %s65 = sadd.s32 %s64, 1
    %p68 = scmp.eq.s32.totalorder %s9, 1
    %p69 = scmp.ne.s32.totalorder %s64, %s66
    %p70 = scmp.eq.s32.totalorder %s9, 0
    %p71 = por %p69, %p70
    %p72 = scmp.ne.s32.totalorder %s64, %s66
    %p73 = scmp.eq.s32.totalorder %s14, 1
    %p74 = por %p72, %p73
    %p75 = scmp.ne.s32.totalorder %s66, %s67
    %p76 = scmp.eq.s32.totalorder %s14, 0
    %p77 = por %p75, %p76
    %p78 = scmp.ne.s32.totalorder %s66, %s67
    %p79 = scmp.eq.s32.totalorder %s15, 1
    %p80 = por %p78, %p79
    %p82 = scmp.ne.s32.totalorder %s67, %s81
    %p83 = scmp.eq.s32.totalorder %s15, 0
    %p84 = por %p82, %p83
    %s85 = ssub.s32 %s9, %s16
    %p86 = scmp.eq.s32.totalorder %s85, 0
    %s88 = sadd.s32 %s87, 1
    %s89 = scalar_select %p86, %s87, %s88
    %p92 = pneg %p86
    %p93 = scmp.eq.s32.totalorder %s9, 1
    %p94 = por %p92, %p93
    %p95 = scmp.ne.s32.totalorder %s87, %s90
    %p96 = scmp.eq.s32.totalorder %s9, 0
    %p97 = por %p95, %p96
    %p98 = scmp.ne.s32.totalorder %s87, %s90
    %p99 = scmp.eq.s32.totalorder %s14, 1
    %p100 = por %p98, %p99
    %p101 = scmp.ne.s32.totalorder %s90, %s91
    %p102 = scmp.eq.s32.totalorder %s14, 0
    %p103 = por %p101, %p102
    %p104 = scmp.ne.s32.totalorder %s90, %s91
    %p105 = scmp.eq.s32.totalorder %s15, 1
    %p106 = por %p104, %p105
    %p108 = scmp.ne.s32.totalorder %s91, %s107
    %p109 = scmp.eq.s32.totalorder %s15, 0
    %p110 = por %p108, %p109
    %p111 = scmp.le.s32.totalorder 1, %s9
    %p112 = scmp.lt.s32.totalorder %s9, 3
    %p113 = pnand %p111, %p112
    %p114 = pneg %p113
    // Predicated region
    $region9: #{edge_gnn_classifier.11} parent=5 // pred_check
      _
    $region10: #{edge_gnn_classifier.11} parent=5 // pred_check_branch
      %116 = sbr.rel (%p113) target = $region12
    $region11: #{edge_gnn_classifier.11} parent=5 // pred_region
      %s117 = ssub.s32 %s9, 1
      // Predicated region
      $region13: #{edge_gnn_classifier.11} parent=11 // pred_check
        %p118 = pneg %p56
      $region14: #{edge_gnn_classifier.11} parent=11 // pred_check_branch
        %120 = sbr.rel (%p118) target = $region16
      $region15: #{edge_gnn_classifier.11} parent=11 // pred_region
        _
      $region16: #{edge_gnn_classifier.11} parent=11 // pred_fallthru
        _
      // Predicated region
      $region17: #{edge_gnn_classifier.11} parent=11 // pred_check
        %p121 = pneg %p77
      $region18: #{edge_gnn_classifier.11} parent=11 // pred_check_branch
        %123 = sbr.rel (%p121) target = $region20
      $region19: #{edge_gnn_classifier.11} parent=11 // pred_region
        _
      $region20: #{edge_gnn_classifier.11} parent=11 // pred_fallthru
        _
    $region12: #{edge_gnn_classifier.11} parent=5 // pred_fallthru
      _
    %p124 = scmp.lt.s32.totalorder %s9, 2
    // Predicated region
    $region21: #{edge_gnn_classifier.11} parent=5 // pred_check
      %p125 = pneg %p124
    $region22: #{edge_gnn_classifier.11} parent=5 // pred_check_branch
      %127 = sbr.rel (%p125) target = $region24
    $region23: #{edge_gnn_classifier.11} parent=5 // pred_region
      // Predicated region
      $region25: #{edge_gnn_classifier.11} parent=23 // pred_check
        %p128 = pneg %p29
      $region26: #{edge_gnn_classifier.11} parent=23 // pred_check_branch
        %130 = sbr.rel (%p128) target = $region28
      $region27: #{edge_gnn_classifier.11} parent=23 // pred_region
        %p131 = scmp.lt.s32.totalorder %s9, 1
        %s132 = scalar_select %p131, %s9, 1
        %s133 = smul.addr %s132, 4
        %s134 = scalar_lea.vmem %s0, %s133
      $region28: #{edge_gnn_classifier.11} parent=23 // pred_fallthru
        _
    $region24: #{edge_gnn_classifier.11} parent=5 // pred_fallthru
      _
    %p135 = scmp.le.s32.totalorder 1, %s9
    %p136 = scmp.lt.s32.totalorder %s9, 3
    %p137 = pnand %p135, %p136
    %p138 = pneg %p137
    // Predicated region
    $region29: #{edge_gnn_classifier.11} parent=5 // pred_check
      _
    $region30: #{edge_gnn_classifier.11} parent=5 // pred_check_branch
      %140 = sbr.rel (%p137) target = $region32
    $region31: #{edge_gnn_classifier.11} parent=5 // pred_region
      %s141 = ssub.s32 %s9, 1
      %p142 = scmp.lt.s32.totalorder %s14, 1
      %s143 = scalar_select %p142, %s14, 1
      %s144 = smul.addr %s143, 4
      %s145 = scalar_lea.vmem %s0, %s144
      %p146 = pneg %p35
      %p147 = pneg %p32
      %p148 = pneg %p56
      %p149 = pneg %p53
      %p150 = pneg %p77
      %p151 = pneg %p74
      %p152 = pneg %p103
      %p153 = pneg %p100
      %p154 = scmp.lt.s32.totalorder %s14, 1
      %s155 = scalar_select %p154, %s14, 1
      %s156 = smul.addr %s155, 4
      %s157 = smul.addr %s156, 4
      %s158 = scalar_lea.vmem %s3, %s157
      %p159 = scmp.lt.s32.totalorder %s14, 1
      %s160 = scalar_select %p159, %s14, 1
      %s161 = smul.addr %s160, 4
      %s162 = scalar_lea.vmem %s0, %s161
      %p163 = scmp.lt.s32.totalorder %s14, 1
      %s164 = scalar_select %p163, %s14, 1
      %s165 = smul.addr %s164, 4
      %s166 = smul.addr %s165, 4
      %s167 = scalar_lea.vmem %s3, %s166
      %v169 = vld [vmem:[%s162] sm:$0xf]
      %v170 = vld [vmem:[%s1] sm:$0xff]
      %v171 = vld [vmem:[%s1 + $0x8] sm:$0xff]
      %v172 = vld [vmem:[%s2] sm:$0xf]
      %v174 = vlaneseq
      %v175 = vshrl.u32 %v174, 7
      %v176 = vsub.s32 0, %v175
      %v177 = vrot.slane %v172, %v176
      %v178 = vlaneseq
      %v179 = vshrl.u32 %v178, 7
      %v180 = vsub.s32 1, %v179
      %v181 = vrot.slane %v172, %v180
      %v182 = vlaneseq
      %v183 = vshrl.u32 %v182, 7
      %v184 = vsub.s32 2, %v183
      %v185 = vrot.slane %v172, %v184
      %v186 = vlaneseq
      %v187 = vshrl.u32 %v186, 7
      %v188 = vsub.s32 3, %v187
      %v189 = vrot.slane %v172, %v188
      %v196 = vunpack.c.l.b16 %v170
      %v197 = vunpack.c.h.b16 %v170
      %v198 = vunpack.c.l.b16 %v171
      %v199 = vunpack.c.h.b16 %v171
      %v200 = vpack.c.b16 %v196, %v196
      %v201 = vpack.c.b16 %v197, %v197
      %v202 = vpack.c.b16 %v198, %v198
      %v203 = vpack.c.b16 %v199, %v199
      %vm204 = vcmask 64512
      %v206 = vsel %vm204, %v169, 0
      %vm208 = vcmask 1043456
      %v210 = vsel %vm208, %v200, 0
      %v213 = vsel %vm208, %v201, 0
      %v216 = vsel %vm208, %v202, 0
      %v219 = vsel %vm208, %v203, 0
      %221 = vmatprep.subr.bf16.mxu0 0
      %222 = vmatpush1.bf16.msra.mxu0 0
      %223 = vmatprep.subr.bf16.mxu0 0
      %224 = vmatpush1.bf16.msra.mxu0 0
      %225 = vmatprep.subr.bf16.mxu0 0
      %226 = vmatpush1.bf16.msra.mxu0 0
      %227 = vmatprep.subr.bf16.mxu0 0
      %228 = vmatpush1.bf16.msra.mxu0 0
      %229 = vmatprep.subr.bf16.mxu0 0
      %230 = vmatpush1.bf16.msra.mxu0 0
      %231 = vmatprep.subr.bf16.mxu0 0
      %232 = vmatpush1.bf16.msra.mxu0 0
      %233 = vmatprep.subr.bf16.mxu0 0
      %234 = vmatpush1.bf16.msra.mxu0 0
      %235 = vmatprep.subr.bf16.mxu0 %v213
      %236 = vmatpush1.bf16.msra.mxu0 %v210
      %237 = vmatprep.subr.bf16.mxu0 0
      %238 = vmatpush2.bf16.msra.mxu0 0
      %239 = vmatprep.subr.bf16.mxu0 0
      %240 = vmatpush2.bf16.msra.mxu0 0
      %241 = vmatprep.subr.bf16.mxu0 0
      %242 = vmatpush2.bf16.msra.mxu0 0
      %243 = vmatprep.subr.bf16.mxu0 0
      %244 = vmatpush2.bf16.msra.mxu0 0
      %245 = vmatprep.subr.bf16.mxu0 0
      %246 = vmatpush2.bf16.msra.mxu0 0
      %247 = vmatprep.subr.bf16.mxu0 0
      %248 = vmatpush2.bf16.msra.mxu0 0
      %249 = vmatprep.subr.bf16.mxu0 0
      %250 = vmatpush2.bf16.msra.mxu0 0
      %251 = vmatprep.subr.bf16.mxu0 0
      %252 = vmatpush2.bf16.msra.mxu0 0
      %253 = vmatprep.mubr.bf16.mxu0 0
      %254 = vmatmul.mubr.bf16.gmra.mxu0 %v206
      %v255 = vpop.f32.mrf.mxu0
      %v256 = vadd.f32 %v177, %v255
      %v257 = vpop.f32.mrf.mxu0
      %v258 = vadd.f32 %v181, %v257
      %v259 = vpop.f32.mrf.mxu0
      %v260 = vpop.f32.mrf.mxu0
      %261 = vdwg.mxu0
      %262 = vmatprep.subr.bf16.mxu0 0
      %263 = vmatpush1.bf16.msra.mxu0 0
      %264 = vmatprep.subr.bf16.mxu0 0
      %265 = vmatpush1.bf16.msra.mxu0 0
      %266 = vmatprep.subr.bf16.mxu0 0
      %267 = vmatpush1.bf16.msra.mxu0 0
      %268 = vmatprep.subr.bf16.mxu0 0
      %269 = vmatpush1.bf16.msra.mxu0 0
      %270 = vmatprep.subr.bf16.mxu0 0
      %271 = vmatpush1.bf16.msra.mxu0 0
      %272 = vmatprep.subr.bf16.mxu0 0
      %273 = vmatpush1.bf16.msra.mxu0 0
      %274 = vmatprep.subr.bf16.mxu0 0
      %275 = vmatpush1.bf16.msra.mxu0 0
      %276 = vmatprep.subr.bf16.mxu0 %v219
      %277 = vmatpush1.bf16.msra.mxu0 %v216
      %278 = vmatprep.subr.bf16.mxu0 0
      %279 = vmatpush2.bf16.msra.mxu0 0
      %280 = vmatprep.subr.bf16.mxu0 0
      %281 = vmatpush2.bf16.msra.mxu0 0
      %282 = vmatprep.subr.bf16.mxu0 0
      %283 = vmatpush2.bf16.msra.mxu0 0
      %284 = vmatprep.subr.bf16.mxu0 0
      %285 = vmatpush2.bf16.msra.mxu0 0
      %286 = vmatprep.subr.bf16.mxu0 0
      %287 = vmatpush2.bf16.msra.mxu0 0
      %288 = vmatprep.subr.bf16.mxu0 0
      %289 = vmatpush2.bf16.msra.mxu0 0
      %290 = vmatprep.subr.bf16.mxu0 0
      %291 = vmatpush2.bf16.msra.mxu0 0
      %292 = vmatprep.subr.bf16.mxu0 0
      %293 = vmatpush2.bf16.msra.mxu0 0
      %294 = vmatprep.mubr.bf16.mxu0 0
      %295 = vmatmul.mubr.bf16.gmra.mxu0 %v206
      %v296 = vpop.f32.mrf.mxu0
      %v297 = vadd.f32 %v185, %v296
      %v298 = vpop.f32.mrf.mxu0
      %v299 = vadd.f32 %v189, %v298
      %v300 = vpop.f32.mrf.mxu0
      %v301 = vpop.f32.mrf.mxu0
      %302 = vdwg.mxu0
      %v303 = vpack.c.bf16 %v256, %v256
      %v304 = vpack.c.bf16 %v258, %v258
      %v305 = vpack.c.bf16 %v297, %v297
      %v306 = vpack.c.bf16 %v299, %v299
      %v311 = vunpack.c.l.b16 %v303
      %v312 = vunpack.c.l.b16 %v304
      %v313 = vunpack.c.l.b16 %v305
      %v314 = vunpack.c.l.b16 %v306
      %v315 = vpack.c.b16 %v312, %v311
      %v316 = vpack.c.b16 %v314, %v313
      %319 = vst [vmem:[%s167] sm:$0xff] %v315
      %vm320 = vcmask 261124
      %vm321 = vmor %vm320, %vm208
      %322 = vst.msk [vmem:[%s167 + $0x8] sm:$0xff] %vm321, %v316
      %p323 = scmp.lt.s32.totalorder %s14, 1
      %s324 = scalar_select %p323, %s14, 1
      %s325 = smul.addr %s324, 4
      %s326 = smul.addr %s325, 4
      %s327 = scalar_lea.vmem %s3, %s326
      // Predicated region
      $region33: #{edge_gnn_classifier.11} parent=31 // pred_check
        %p328 = pneg %p100
      $region34: #{edge_gnn_classifier.11} parent=31 // pred_check_branch
        %330 = sbr.rel (%p328) target = $region36
      $region35: #{edge_gnn_classifier.11} parent=31 // pred_region
        _
      $region36: #{edge_gnn_classifier.11} parent=31 // pred_fallthru
        _
    $region32: #{edge_gnn_classifier.11} parent=5 // pred_fallthru
      _
    %p331 = scmp.le.s32.totalorder 2, %s9
    // Predicated region
    $region37: #{edge_gnn_classifier.11} parent=5 // pred_check
      %p332 = pneg %p331
    $region38: #{edge_gnn_classifier.11} parent=5 // pred_check_branch
      %334 = sbr.rel (%p332) target = $region40
    $region39: #{edge_gnn_classifier.11} parent=5 // pred_region
      %s335 = ssub.s32 %s9, 2
      // Predicated region
      $region41: #{edge_gnn_classifier.11} parent=39 // pred_check
        %p336 = pneg %p106
      $region42: #{edge_gnn_classifier.11} parent=39 // pred_check_branch
        %338 = sbr.rel (%p336) target = $region44
      $region43: #{edge_gnn_classifier.11} parent=39 // pred_region
        %p339 = scmp.lt.s32.totalorder %s15, 1
        %s340 = scalar_select %p339, %s15, 1
        %s341 = smul.addr %s340, 4
        %s342 = smul.addr %s341, 4
        %s343 = scalar_lea.vmem %s3, %s342
      $region44: #{edge_gnn_classifier.11} parent=39 // pred_fallthru
        _
    $region40: #{edge_gnn_classifier.11} parent=5 // pred_fallthru
      _
  $region6: #{edge_gnn_classifier.11} parent=0 // loop_footer
    %s13 = sadd.s32 1, %s9
  $region7: #{edge_gnn_classifier.11} parent=0 // loop_footer_branch
    %8 = sbr.rel target = $region3
  $region8: #{edge_gnn_classifier.11} parent=0 // loop_exit
    _

// kernel: edge_gnn_classifier.17
$region0: #{edge_gnn_classifier.17}
  #allocation0 [shape = 'u32[]', space=smem, size = 0x4, offset = 0x4, fixed_abs, tag = 'smem constant byte address 0x4 - core index']
  #allocation1 [shape = 'u32[144,128]{1,0:T(1,128)}', space=vmem, size = 0x12000, scoped, tag = 'internal scratch']
  %s0 = inlined_call_operand.vmem [shape: bf16[32,4], index: 0, kind: input, shape index: {}]
  %s1 = inlined_call_operand.vmem [shape: bf16[4,128], index: 1, kind: input, shape index: {}]
  %s2 = inlined_call_operand.vmem [shape: f32[1,128], index: 2, kind: input, shape index: {}]
  %s3 = inlined_call_operand.vmem [shape: bf16[32,128], index: 3, kind: output, shape index: {}]
  %s4 = sld [smem:[#allocation0]]
  $region45: #{edge_gnn_classifier.17} parent=0
    _
  %s6 = ssub.s32 1, %s4
  %s7 = scalar_select 0, %s6, %s4
  loop: start=0, step=1, limit=4
  $region2: #{edge_gnn_classifier.17} parent=0 // loop_pre_header
    _
  $region3: #{edge_gnn_classifier.17} parent=0 // loop_header
    %s9 = sphi 0, %s13
    %p10 = scmp.ge.s32.totalorder %s9, 4
    %s19 = sphi 0, %s21
    %s22 = sphi 0, %s19
    %s23 = sphi 0, %s22
    %s39 = sphi 0, %s23
    %s43 = sphi 0, %s43
    %s45 = sphi 0, %s43
    %s46 = sphi 0, %s45
    %s60 = sphi 0, %s46
    %s64 = sphi 0, %s64
    %s66 = sphi 0, %s64
    %s67 = sphi 0, %s66
    %s81 = sphi 0, %s67
    %s87 = sphi 0, %s89
    %s90 = sphi 0, %s87
    %s91 = sphi 0, %s90
    %s107 = sphi 0, %s91
  $region4: #{edge_gnn_classifier.17} parent=0 // loop_header_branch
    %12 = sbr.rel (%p10) target = $region8
  $region5: #{edge_gnn_classifier.17} parent=0 // loop_body
    %s14 = ssub.s32 %s9, 1
    %s15 = ssub.s32 %s9, 2
    %s16 = sadd.s32 %s9, 1
    %s17 = ssub.s32 %s9, %s16
    %p18 = scmp.eq.s32.totalorder %s17, 0
    %s20 = sadd.s32 %s19, 1
    %s21 = scalar_select %p18, %s19, %s20
    %p24 = pneg %p18
    %p25 = scmp.eq.s32.totalorder %s9, 1
    %p26 = por %p24, %p25
    %p27 = scmp.ne.s32.totalorder %s19, %s22
    %p28 = scmp.eq.s32.totalorder %s9, 0
    %p29 = por %p27, %p28
    %p30 = scmp.ne.s32.totalorder %s19, %s22
    %p31 = scmp.eq.s32.totalorder %s14, 1
    %p32 = por %p30, %p31
    %p33 = scmp.ne.s32.totalorder %s22, %s23
    %p34 = scmp.eq.s32.totalorder %s14, 0
    %p35 = por %p33, %p34
    %p36 = scmp.ne.s32.totalorder %s22, %s23
    %p37 = scmp.eq.s32.totalorder %s15, 1
    %p38 = por %p36, %p37
    %p40 = scmp.ne.s32.totalorder %s23, %s39
    %p41 = scmp.eq.s32.totalorder %s15, 0
    %p42 = por %p40, %p41
    %s44 = sadd.s32 %s43, 1
    %p47 = scmp.eq.s32.totalorder %s9, 1
    %p48 = scmp.ne.s32.totalorder %s43, %s45
    %p49 = scmp.eq.s32.totalorder %s9, 0
    %p50 = por %p48, %p49
    %p51 = scmp.ne.s32.totalorder %s43, %s45
    %p52 = scmp.eq.s32.totalorder %s14, 1
    %p53 = por %p51, %p52
    %p54 = scmp.ne.s32.totalorder %s45, %s46
    %p55 = scmp.eq.s32.totalorder %s14, 0
    %p56 = por %p54, %p55
    %p57 = scmp.ne.s32.totalorder %s45, %s46
    %p58 = scmp.eq.s32.totalorder %s15, 1
    %p59 = por %p57, %p58
    %p61 = scmp.ne.s32.totalorder %s46, %s60
    %p62 = scmp.eq.s32.totalorder %s15, 0
    %p63 = por %p61, %p62
    %s65 = sadd.s32 %s64, 1
    %p68 = scmp.eq.s32.totalorder %s9, 1
    %p69 = scmp.ne.s32.totalorder %s64, %s66
    %p70 = scmp.eq.s32.totalorder %s9, 0
    %p71 = por %p69, %p70
    %p72 = scmp.ne.s32.totalorder %s64, %s66
    %p73 = scmp.eq.s32.totalorder %s14, 1
    %p74 = por %p72, %p73
    %p75 = scmp.ne.s32.totalorder %s66, %s67
    %p76 = scmp.eq.s32.totalorder %s14, 0
    %p77 = por %p75, %p76
    %p78 = scmp.ne.s32.totalorder %s66, %s67
    %p79 = scmp.eq.s32.totalorder %s15, 1
    %p80 = por %p78, %p79
    %p82 = scmp.ne.s32.totalorder %s67, %s81
    %p83 = scmp.eq.s32.totalorder %s15, 0
    %p84 = por %p82, %p83
    %s85 = ssub.s32 %s9, %s16
    %p86 = scmp.eq.s32.totalorder %s85, 0
    %s88 = sadd.s32 %s87, 1
    %s89 = scalar_select %p86, %s87, %s88
    %p92 = pneg %p86
    %p93 = scmp.eq.s32.totalorder %s9, 1
    %p94 = por %p92, %p93
    %p95 = scmp.ne.s32.totalorder %s87, %s90
    %p96 = scmp.eq.s32.totalorder %s9, 0
    %p97 = por %p95, %p96
    %p98 = scmp.ne.s32.totalorder %s87, %s90
    %p99 = scmp.eq.s32.totalorder %s14, 1
    %p100 = por %p98, %p99
    %p101 = scmp.ne.s32.totalorder %s90, %s91
    %p102 = scmp.eq.s32.totalorder %s14, 0
    %p103 = por %p101, %p102
    %p104 = scmp.ne.s32.totalorder %s90, %s91
    %p105 = scmp.eq.s32.totalorder %s15, 1
    %p106 = por %p104, %p105
    %p108 = scmp.ne.s32.totalorder %s91, %s107
    %p109 = scmp.eq.s32.totalorder %s15, 0
    %p110 = por %p108, %p109
    %p111 = scmp.le.s32.totalorder 1, %s9
    %p112 = scmp.lt.s32.totalorder %s9, 3
    %p113 = pnand %p111, %p112
    %p114 = pneg %p113
    // Predicated region
    $region9: #{edge_gnn_classifier.17} parent=5 // pred_check
      _
    $region10: #{edge_gnn_classifier.17} parent=5 // pred_check_branch
      %116 = sbr.rel (%p113) target = $region12
    $region11: #{edge_gnn_classifier.17} parent=5 // pred_region
      %s117 = ssub.s32 %s9, 1
      // Predicated region
      $region13: #{edge_gnn_classifier.17} parent=11 // pred_check
        %p118 = pneg %p56
      $region14: #{edge_gnn_classifier.17} parent=11 // pred_check_branch
        %120 = sbr.rel (%p118) target = $region16
      $region15: #{edge_gnn_classifier.17} parent=11 // pred_region
        _
      $region16: #{edge_gnn_classifier.17} parent=11 // pred_fallthru
        _
      // Predicated region
      $region17: #{edge_gnn_classifier.17} parent=11 // pred_check
        %p121 = pneg %p77
      $region18: #{edge_gnn_classifier.17} parent=11 // pred_check_branch
        %123 = sbr.rel (%p121) target = $region20
      $region19: #{edge_gnn_classifier.17} parent=11 // pred_region
        _
      $region20: #{edge_gnn_classifier.17} parent=11 // pred_fallthru
        _
    $region12: #{edge_gnn_classifier.17} parent=5 // pred_fallthru
      _
    %p124 = scmp.lt.s32.totalorder %s9, 2
    // Predicated region
    $region21: #{edge_gnn_classifier.17} parent=5 // pred_check
      %p125 = pneg %p124
    $region22: #{edge_gnn_classifier.17} parent=5 // pred_check_branch
      %127 = sbr.rel (%p125) target = $region24
    $region23: #{edge_gnn_classifier.17} parent=5 // pred_region
      // Predicated region
      $region25: #{edge_gnn_classifier.17} parent=23 // pred_check
        %p128 = pneg %p29
      $region26: #{edge_gnn_classifier.17} parent=23 // pred_check_branch
        %130 = sbr.rel (%p128) target = $region28
      $region27: #{edge_gnn_classifier.17} parent=23 // pred_region
        %s131 = smul.u32 2, %s9
        %p132 = scmp.lt.s32.totalorder %s131, 3
        %s133 = scalar_select %p132, %s131, 3
        %s134 = smul.addr %s133, 4
        %s135 = scalar_lea.vmem %s0, %s134
        %s136 = smul.u32 2, %s9
      $region28: #{edge_gnn_classifier.17} parent=23 // pred_fallthru
        _
    $region24: #{edge_gnn_classifier.17} parent=5 // pred_fallthru
      _
    %p137 = scmp.le.s32.totalorder 1, %s9
    %p138 = scmp.lt.s32.totalorder %s9, 3
    %p139 = pnand %p137, %p138
    %p140 = pneg %p139
    // Predicated region
    $region29: #{edge_gnn_classifier.17} parent=5 // pred_check
      _
    $region30: #{edge_gnn_classifier.17} parent=5 // pred_check_branch
      %142 = sbr.rel (%p139) target = $region32
    $region31: #{edge_gnn_classifier.17} parent=5 // pred_region
      %s143 = ssub.s32 %s9, 1
      %s144 = smul.u32 2, %s14
      %p145 = scmp.lt.s32.totalorder %s144, 3
      %s146 = scalar_select %p145, %s144, 3
      %s147 = smul.addr %s146, 4
      %s148 = scalar_lea.vmem %s0, %s147
      %p149 = pneg %p35
      %p150 = pneg %p32
      %p151 = pneg %p56
      %p152 = pneg %p53
      %p153 = pneg %p77
      %p154 = pneg %p74
      %p155 = pneg %p103
      %p156 = pneg %p100
      %s157 = smul.u32 2, %s14
      %p158 = scmp.lt.s32.totalorder %s157, 3
      %s159 = scalar_select %p158, %s157, 3
      %s160 = smul.addr %s159, 4
      %s161 = scalar_lea.vmem %s3, %s160
      %s162 = smul.u32 2, %s14
      %p163 = scmp.lt.s32.totalorder %s162, 3
      %s164 = scalar_select %p163, %s162, 3
      %s165 = smul.addr %s164, 4
      %s166 = scalar_lea.vmem %s0, %s165
      %s167 = smul.u32 2, %s14
      %s168 = smul.u32 2, %s14
      %p169 = scmp.lt.s32.totalorder %s168, 3
      %s170 = scalar_select %p169, %s168, 3
      %s171 = smul.addr %s170, 4
      %s172 = scalar_lea.vmem %s3, %s171
      %s173 = smul.u32 2, %s14
      %v175 = vld [vmem:[%s166] sm:$0xf]
      %v176 = vld [vmem:[%s166 + $0x4] sm:$0xf]
      %v177 = vld [vmem:[%s1] sm:$0x3]
      %v178 = vld [vmem:[%s2] sm:$0x1]
      %v180 = vlaneseq
      %v181 = vshrl.u32 %v180, 7
      %v182 = vsub.s32 0, %v181
      %v183 = vrot.slane %v178, %v182
      %v187 = vunpack.c.l.b16 %v175
      %v188 = vunpack.c.l.b16 %v176
      %v189 = vpack.c.b16 %v188, %v187
      %vm190 = vcmask 31744
      %v192 = vsel %vm190, %v189, 0
      %vm194 = vcmask 1041408
      %v196 = vsel %vm194, %v177, 0
      %198 = vmatprep.subr.bf16.mxu0 0
      %199 = vmatpush1.bf16.msra.mxu0 0
      %200 = vmatprep.subr.bf16.mxu0 0
      %201 = vmatpush1.bf16.msra.mxu0 0
      %202 = vmatprep.subr.bf16.mxu0 0
      %203 = vmatpush1.bf16.msra.mxu0 0
      %204 = vmatprep.subr.bf16.mxu0 0
      %205 = vmatpush1.bf16.msra.mxu0 0
      %206 = vmatprep.subr.bf16.mxu0 0
      %207 = vmatpush1.bf16.msra.mxu0 0
      %208 = vmatprep.subr.bf16.mxu0 0
      %209 = vmatpush1.bf16.msra.mxu0 0
      %210 = vmatprep.subr.bf16.mxu0 0
      %211 = vmatpush1.bf16.msra.mxu0 0
      %212 = vmatprep.subr.bf16.mxu0 0
      %213 = vmatpush1.bf16.msra.mxu0 %v196
      %214 = vmatprep.subr.bf16.mxu0 0
      %215 = vmatpush2.bf16.msra.mxu0 0
      %216 = vmatprep.subr.bf16.mxu0 0
      %217 = vmatpush2.bf16.msra.mxu0 0
      %218 = vmatprep.subr.bf16.mxu0 0
      %219 = vmatpush2.bf16.msra.mxu0 0
      %220 = vmatprep.subr.bf16.mxu0 0
      %221 = vmatpush2.bf16.msra.mxu0 0
      %222 = vmatprep.subr.bf16.mxu0 0
      %223 = vmatpush2.bf16.msra.mxu0 0
      %224 = vmatprep.subr.bf16.mxu0 0
      %225 = vmatpush2.bf16.msra.mxu0 0
      %226 = vmatprep.subr.bf16.mxu0 0
      %227 = vmatpush2.bf16.msra.mxu0 0
      %228 = vmatprep.subr.bf16.mxu0 0
      %229 = vmatpush2.bf16.msra.mxu0 0
      %230 = vmatprep.mubr.bf16.mxu0 0
      %231 = vmatmul.mubr.bf16.gmra.mxu0 %v192
      %v232 = vpop.f32.mrf.mxu0
      %v233 = vadd.f32 %v183, %v232
      %v234 = vpop.f32.mrf.mxu0
      %v235 = vpop.f32.mrf.mxu0
      %v236 = vadd.f32 %v183, %v235
      %v237 = vpop.f32.mrf.mxu0
      %238 = vdwg.mxu0
      %v239 = vpack.c.bf16 %v236, %v233
      %v241 = vunpack.c.l.b16 %v239
      %v242 = vunpack.c.h.b16 %v239
      %v243 = vpack.c.b16 %v241, %v241
      %v244 = vpack.c.b16 %v242, %v242
      %247 = vst [vmem:[%s172] sm:$0xf] %v243
      %248 = vst [vmem:[%s172 + $0x4] sm:$0xf] %v244
      %s249 = smul.u32 2, %s14
      %p250 = scmp.lt.s32.totalorder %s249, 3
      %s251 = scalar_select %p250, %s249, 3
      %s252 = smul.addr %s251, 4
      %s253 = scalar_lea.vmem %s3, %s252
      // Predicated region
      $region33: #{edge_gnn_classifier.17} parent=31 // pred_check
        %p254 = pneg %p100
      $region34: #{edge_gnn_classifier.17} parent=31 // pred_check_branch
        %256 = sbr.rel (%p254) target = $region36
      $region35: #{edge_gnn_classifier.17} parent=31 // pred_region
        %s257 = smul.u32 2, %s14
      $region36: #{edge_gnn_classifier.17} parent=31 // pred_fallthru
        _
    $region32: #{edge_gnn_classifier.17} parent=5 // pred_fallthru
      _
    %p258 = scmp.le.s32.totalorder 2, %s9
    // Predicated region
    $region37: #{edge_gnn_classifier.17} parent=5 // pred_check
      %p259 = pneg %p258
    $region38: #{edge_gnn_classifier.17} parent=5 // pred_check_branch
      %261 = sbr.rel (%p259) target = $region40
    $region39: #{edge_gnn_classifier.17} parent=5 // pred_region
      %s262 = ssub.s32 %s9, 2
      // Predicated region
      $region41: #{edge_gnn_classifier.17} parent=39 // pred_check
        %p263 = pneg %p106
      $region42: #{edge_gnn_classifier.17} parent=39 // pred_check_branch
        %265 = sbr.rel (%p263) target = $region44
      $region43: #{edge_gnn_classifier.17} parent=39 // pred_region
        %s266 = smul.u32 2, %s15
        %p267 = scmp.lt.s32.totalorder %s266, 3
        %s268 = scalar_select %p267, %s266, 3
        %s269 = smul.addr %s268, 4
        %s270 = scalar_lea.vmem %s3, %s269
      $region44: #{edge_gnn_classifier.17} parent=39 // pred_fallthru
        _
    $region40: #{edge_gnn_classifier.17} parent=5 // pred_fallthru
      _
  $region6: #{edge_gnn_classifier.17} parent=0 // loop_footer
    %s13 = sadd.s32 1, %s9
  $region7: #{edge_gnn_classifier.17} parent=0 // loop_footer_branch
    %8 = sbr.rel target = $region3
  $region8: #{edge_gnn_classifier.17} parent=0 // loop_exit
    _

// kernel: edge_gnn_classifier.13
$region0: #{edge_gnn_classifier.13}
  #allocation0 [shape = 'u32[]', space=smem, size = 0x4, offset = 0x4, fixed_abs, tag = 'smem constant byte address 0x4 - core index']
  #allocation1 [shape = 'u32[144,128]{1,0:T(1,128)}', space=vmem, size = 0x12000, scoped, tag = 'internal scratch']
  %s0 = inlined_call_operand.vmem [shape: bf16[32,128], index: 0, kind: input, shape index: {}]
  %s1 = inlined_call_operand.vmem [shape: bf16[32,128], index: 1, kind: input, shape index: {}]
  %s2 = inlined_call_operand.vmem [shape: bf16[32,128], index: 2, kind: input, shape index: {}]
  %s3 = inlined_call_operand.vmem [shape: bf16[32,128], index: 3, kind: input, shape index: {}]
  %s4 = inlined_call_operand.vmem [shape: f32[128,4], index: 4, kind: input, shape index: {}]
  %s5 = inlined_call_operand.vmem [shape: f32[32,4], index: 5, kind: output, shape index: {0}]
  %s6 = inlined_call_operand.vmem [shape: bf16[32,128], index: 6, kind: output, shape index: {1}]
  %7 = xla_tuple %s5, %s6
  %s8 = sld [smem:[#allocation0]]
  $region61: #{edge_gnn_classifier.13} parent=0
    _
  %s10 = ssub.s32 1, %s8
  %s11 = scalar_select 0, %s10, %s8
  loop: start=0, step=1, limit=4
  $region2: #{edge_gnn_classifier.13} parent=0 // loop_pre_header
    _
  $region3: #{edge_gnn_classifier.13} parent=0 // loop_header
    %s13 = sphi 0, %s17
    %p14 = scmp.ge.s32.totalorder %s13, 4
    %s23 = sphi 0, %s25
    %s26 = sphi 0, %s23
    %s27 = sphi 0, %s26
    %s43 = sphi 0, %s27
    %s49 = sphi 0, %s51
    %s52 = sphi 0, %s49
    %s53 = sphi 0, %s52
    %s69 = sphi 0, %s53
    %s75 = sphi 0, %s77
    %s78 = sphi 0, %s75
    %s79 = sphi 0, %s78
    %s95 = sphi 0, %s79
    %s101 = sphi 0, %s103
    %s104 = sphi 0, %s101
    %s105 = sphi 0, %s104
    %s121 = sphi 0, %s105
    %s125 = sphi 0, %s125
    %s127 = sphi 0, %s125
    %s128 = sphi 0, %s127
    %s142 = sphi 0, %s128
    %s148 = sphi 0, %s150
    %s151 = sphi 0, %s148
    %s152 = sphi 0, %s151
    %s168 = sphi 0, %s152
    %s174 = sphi 0, %s176
    %s177 = sphi 0, %s174
    %s178 = sphi 0, %s177
    %s194 = sphi 0, %s178
  $region4: #{edge_gnn_classifier.13} parent=0 // loop_header_branch
    %16 = sbr.rel (%p14) target = $region8
  $region5: #{edge_gnn_classifier.13} parent=0 // loop_body
    %s18 = ssub.s32 %s13, 1
    %s19 = ssub.s32 %s13, 2
    %s20 = sadd.s32 %s13, 1
    %s21 = ssub.s32 %s13, %s20
    %p22 = scmp.eq.s32.totalorder %s21, 0
    %s24 = sadd.s32 %s23, 1
    %s25 = scalar_select %p22, %s23, %s24
    %p28 = pneg %p22
    %p29 = scmp.eq.s32.totalorder %s13, 1
    %p30 = por %p28, %p29
    %p31 = scmp.ne.s32.totalorder %s23, %s26
    %p32 = scmp.eq.s32.totalorder %s13, 0
    %p33 = por %p31, %p32
    %p34 = scmp.ne.s32.totalorder %s23, %s26
    %p35 = scmp.eq.s32.totalorder %s18, 1
    %p36 = por %p34, %p35
    %p37 = scmp.ne.s32.totalorder %s26, %s27
    %p38 = scmp.eq.s32.totalorder %s18, 0
    %p39 = por %p37, %p38
    %p40 = scmp.ne.s32.totalorder %s26, %s27
    %p41 = scmp.eq.s32.totalorder %s19, 1
    %p42 = por %p40, %p41
    %p44 = scmp.ne.s32.totalorder %s27, %s43
    %p45 = scmp.eq.s32.totalorder %s19, 0
    %p46 = por %p44, %p45
    %s47 = ssub.s32 %s13, %s20
    %p48 = scmp.eq.s32.totalorder %s47, 0
    %s50 = sadd.s32 %s49, 1
    %s51 = scalar_select %p48, %s49, %s50
    %p54 = pneg %p48
    %p55 = scmp.eq.s32.totalorder %s13, 1
    %p56 = por %p54, %p55
    %p57 = scmp.ne.s32.totalorder %s49, %s52
    %p58 = scmp.eq.s32.totalorder %s13, 0
    %p59 = por %p57, %p58
    %p60 = scmp.ne.s32.totalorder %s49, %s52
    %p61 = scmp.eq.s32.totalorder %s18, 1
    %p62 = por %p60, %p61
    %p63 = scmp.ne.s32.totalorder %s52, %s53
    %p64 = scmp.eq.s32.totalorder %s18, 0
    %p65 = por %p63, %p64
    %p66 = scmp.ne.s32.totalorder %s52, %s53
    %p67 = scmp.eq.s32.totalorder %s19, 1
    %p68 = por %p66, %p67
    %p70 = scmp.ne.s32.totalorder %s53, %s69
    %p71 = scmp.eq.s32.totalorder %s19, 0
    %p72 = por %p70, %p71
    %s73 = ssub.s32 %s13, %s20
    %p74 = scmp.eq.s32.totalorder %s73, 0
    %s76 = sadd.s32 %s75, 1
    %s77 = scalar_select %p74, %s75, %s76
    %p80 = pneg %p74
    %p81 = scmp.eq.s32.totalorder %s13, 1
    %p82 = por %p80, %p81
    %p83 = scmp.ne.s32.totalorder %s75, %s78
    %p84 = scmp.eq.s32.totalorder %s13, 0
    %p85 = por %p83, %p84
    %p86 = scmp.ne.s32.totalorder %s75, %s78
    %p87 = scmp.eq.s32.totalorder %s18, 1
    %p88 = por %p86, %p87
    %p89 = scmp.ne.s32.totalorder %s78, %s79
    %p90 = scmp.eq.s32.totalorder %s18, 0
    %p91 = por %p89, %p90
    %p92 = scmp.ne.s32.totalorder %s78, %s79
    %p93 = scmp.eq.s32.totalorder %s19, 1
    %p94 = por %p92, %p93
    %p96 = scmp.ne.s32.totalorder %s79, %s95
    %p97 = scmp.eq.s32.totalorder %s19, 0
    %p98 = por %p96, %p97
    %s99 = ssub.s32 %s13, %s20
    %p100 = scmp.eq.s32.totalorder %s99, 0
    %s102 = sadd.s32 %s101, 1
    %s103 = scalar_select %p100, %s101, %s102
    %p106 = pneg %p100
    %p107 = scmp.eq.s32.totalorder %s13, 1
    %p108 = por %p106, %p107
    %p109 = scmp.ne.s32.totalorder %s101, %s104
    %p110 = scmp.eq.s32.totalorder %s13, 0
    %p111 = por %p109, %p110
    %p112 = scmp.ne.s32.totalorder %s101, %s104
    %p113 = scmp.eq.s32.totalorder %s18, 1
    %p114 = por %p112, %p113
    %p115 = scmp.ne.s32.totalorder %s104, %s105
    %p116 = scmp.eq.s32.totalorder %s18, 0
    %p117 = por %p115, %p116
    %p118 = scmp.ne.s32.totalorder %s104, %s105
    %p119 = scmp.eq.s32.totalorder %s19, 1
    %p120 = por %p118, %p119
    %p122 = scmp.ne.s32.totalorder %s105, %s121
    %p123 = scmp.eq.s32.totalorder %s19, 0
    %p124 = por %p122, %p123
    %s126 = sadd.s32 %s125, 1
    %p129 = scmp.eq.s32.totalorder %s13, 1
    %p130 = scmp.ne.s32.totalorder %s125, %s127
    %p131 = scmp.eq.s32.totalorder %s13, 0
    %p132 = por %p130, %p131
    %p133 = scmp.ne.s32.totalorder %s125, %s127
    %p134 = scmp.eq.s32.totalorder %s18, 1
    %p135 = por %p133, %p134
    %p136 = scmp.ne.s32.totalorder %s127, %s128
    %p137 = scmp.eq.s32.totalorder %s18, 0
    %p138 = por %p136, %p137
    %p139 = scmp.ne.s32.totalorder %s127, %s128
    %p140 = scmp.eq.s32.totalorder %s19, 1
    %p141 = por %p139, %p140
    %p143 = scmp.ne.s32.totalorder %s128, %s142
    %p144 = scmp.eq.s32.totalorder %s19, 0
    %p145 = por %p143, %p144
    %s146 = ssub.s32 %s13, %s20
    %p147 = scmp.eq.s32.totalorder %s146, 0
    %s149 = sadd.s32 %s148, 1
    %s150 = scalar_select %p147, %s148, %s149
    %p153 = pneg %p147
    %p154 = scmp.eq.s32.totalorder %s13, 1
    %p155 = por %p153, %p154
    %p156 = scmp.ne.s32.totalorder %s148, %s151
    %p157 = scmp.eq.s32.totalorder %s13, 0
    %p158 = por %p156, %p157
    %p159 = scmp.ne.s32.totalorder %s148, %s151
    %p160 = scmp.eq.s32.totalorder %s18, 1
    %p161 = por %p159, %p160
    %p162 = scmp.ne.s32.totalorder %s151, %s152
    %p163 = scmp.eq.s32.totalorder %s18, 0
    %p164 = por %p162, %p163
    %p165 = scmp.ne.s32.totalorder %s151, %s152
    %p166 = scmp.eq.s32.totalorder %s19, 1
    %p167 = por %p165, %p166
    %p169 = scmp.ne.s32.totalorder %s152, %s168
    %p170 = scmp.eq.s32.totalorder %s19, 0
    %p171 = por %p169, %p170
    %s172 = ssub.s32 %s13, %s20
    %p173 = scmp.eq.s32.totalorder %s172, 0
    %s175 = sadd.s32 %s174, 1
    %s176 = scalar_select %p173, %s174, %s175
    %p179 = pneg %p173
    %p180 = scmp.eq.s32.totalorder %s13, 1
    %p181 = por %p179, %p180
    %p182 = scmp.ne.s32.totalorder %s174, %s177
    %p183 = scmp.eq.s32.totalorder %s13, 0
    %p184 = por %p182, %p183
    %p185 = scmp.ne.s32.totalorder %s174, %s177
    %p186 = scmp.eq.s32.totalorder %s18, 1
    %p187 = por %p185, %p186
    %p188 = scmp.ne.s32.totalorder %s177, %s178
    %p189 = scmp.eq.s32.totalorder %s18, 0
    %p190 = por %p188, %p189
    %p191 = scmp.ne.s32.totalorder %s177, %s178
    %p192 = scmp.eq.s32.totalorder %s19, 1
    %p193 = por %p191, %p192
    %p195 = scmp.ne.s32.totalorder %s178, %s194
    %p196 = scmp.eq.s32.totalorder %s19, 0
    %p197 = por %p195, %p196
    %p198 = scmp.le.s32.totalorder 1, %s13
    %p199 = scmp.lt.s32.totalorder %s13, 3
    %p200 = pnand %p198, %p199
    %p201 = pneg %p200
    // Predicated region
    $region9: #{edge_gnn_classifier.13} parent=5 // pred_check
      _
    $region10: #{edge_gnn_classifier.13} parent=5 // pred_check_branch
      %203 = sbr.rel (%p200) target = $region12
    $region11: #{edge_gnn_classifier.13} parent=5 // pred_region
      %s204 = ssub.s32 %s13, 1
      // Predicated region
      $region13: #{edge_gnn_classifier.13} parent=11 // pred_check
        %p205 = pneg %p138
      $region14: #{edge_gnn_classifier.13} parent=11 // pred_check_branch
        %207 = sbr.rel (%p205) target = $region16
      $region15: #{edge_gnn_classifier.13} parent=11 // pred_region
        _
      $region16: #{edge_gnn_classifier.13} parent=11 // pred_fallthru
        _
    $region12: #{edge_gnn_classifier.13} parent=5 // pred_fallthru
      _
    %p208 = scmp.lt.s32.totalorder %s13, 2
    // Predicated region
    $region17: #{edge_gnn_classifier.13} parent=5 // pred_check
      %p209 = pneg %p208
    $region18: #{edge_gnn_classifier.13} parent=5 // pred_check_branch
      %211 = sbr.rel (%p209) target = $region20
    $region19: #{edge_gnn_classifier.13} parent=5 // pred_region
      // Predicated region
      $region21: #{edge_gnn_classifier.13} parent=19 // pred_check
        %p212 = pneg %p33
      $region22: #{edge_gnn_classifier.13} parent=19 // pred_check_branch
        %214 = sbr.rel (%p212) target = $region24
      $region23: #{edge_gnn_classifier.13} parent=19 // pred_region
        %s215 = smul.u32 2, %s13
        %p216 = scmp.lt.s32.totalorder %s215, 3
        %s217 = scalar_select %p216, %s215, 3
        %s218 = smul.addr %s217, 4
        %s219 = scalar_lea.vmem %s0, %s218
        %s220 = smul.u32 2, %s13
      $region24: #{edge_gnn_classifier.13} parent=19 // pred_fallthru
        _
      // Predicated region
      $region25: #{edge_gnn_classifier.13} parent=19 // pred_check
        %p221 = pneg %p59
      $region26: #{edge_gnn_classifier.13} parent=19 // pred_check_branch
        %223 = sbr.rel (%p221) target = $region28
      $region27: #{edge_gnn_classifier.13} parent=19 // pred_region
        %s224 = smul.u32 2, %s13
        %p225 = scmp.lt.s32.totalorder %s224, 3
        %s226 = scalar_select %p225, %s224, 3
        %s227 = smul.addr %s226, 4
        %s228 = scalar_lea.vmem %s1, %s227
        %s229 = smul.u32 2, %s13
      $region28: #{edge_gnn_classifier.13} parent=19 // pred_fallthru
        _
      // Predicated region
      $region29: #{edge_gnn_classifier.13} parent=19 // pred_check
        %p230 = pneg %p85
      $region30: #{edge_gnn_classifier.13} parent=19 // pred_check_branch
        %232 = sbr.rel (%p230) target = $region32
      $region31: #{edge_gnn_classifier.13} parent=19 // pred_region
        %s233 = smul.u32 2, %s13
        %p234 = scmp.lt.s32.totalorder %s233, 3
        %s235 = scalar_select %p234, %s233, 3
        %s236 = smul.addr %s235, 4
        %s237 = scalar_lea.vmem %s2, %s236
        %s238 = smul.u32 2, %s13
      $region32: #{edge_gnn_classifier.13} parent=19 // pred_fallthru
        _
      // Predicated region
      $region33: #{edge_gnn_classifier.13} parent=19 // pred_check
        %p239 = pneg %p111
      $region34: #{edge_gnn_classifier.13} parent=19 // pred_check_branch
        %241 = sbr.rel (%p239) target = $region36
      $region35: #{edge_gnn_classifier.13} parent=19 // pred_region
        %s242 = smul.u32 2, %s13
        %p243 = scmp.lt.s32.totalorder %s242, 3
        %s244 = scalar_select %p243, %s242, 3
        %s245 = smul.addr %s244, 4
        %s246 = scalar_lea.vmem %s3, %s245
        %s247 = smul.u32 2, %s13
      $region36: #{edge_gnn_classifier.13} parent=19 // pred_fallthru
        _
    $region20: #{edge_gnn_classifier.13} parent=5 // pred_fallthru
      _
    %p248 = scmp.le.s32.totalorder 1, %s13
    %p249 = scmp.lt.s32.totalorder %s13, 3
    %p250 = pnand %p248, %p249
    %p251 = pneg %p250
    // Predicated region
    $region37: #{edge_gnn_classifier.13} parent=5 // pred_check
      _
    $region38: #{edge_gnn_classifier.13} parent=5 // pred_check_branch
      %253 = sbr.rel (%p250) target = $region40
    $region39: #{edge_gnn_classifier.13} parent=5 // pred_region
      %s254 = ssub.s32 %s13, 1
      %s255 = smul.u32 2, %s18
      %p256 = scmp.lt.s32.totalorder %s255, 3
      %s257 = scalar_select %p256, %s255, 3
      %s258 = smul.addr %s257, 4
      %s259 = scalar_lea.vmem %s0, %s258
      %p260 = pneg %p39
      %p261 = pneg %p36
      %s262 = smul.u32 2, %s18
      %p263 = scmp.lt.s32.totalorder %s262, 3
      %s264 = scalar_select %p263, %s262, 3
      %s265 = smul.addr %s264, 4
      %s266 = scalar_lea.vmem %s1, %s265
      %p267 = pneg %p65
      %p268 = pneg %p62
      %s269 = smul.u32 2, %s18
      %p270 = scmp.lt.s32.totalorder %s269, 3
      %s271 = scalar_select %p270, %s269, 3
      %s272 = smul.addr %s271, 4
      %s273 = scalar_lea.vmem %s2, %s272
      %p274 = pneg %p91
      %p275 = pneg %p88
      %s276 = smul.u32 2, %s18
      %p277 = scmp.lt.s32.totalorder %s276, 3
      %s278 = scalar_select %p277, %s276, 3
      %s279 = smul.addr %s278, 4
      %s280 = scalar_lea.vmem %s3, %s279
      %p281 = pneg %p117
      %p282 = pneg %p114
      %p283 = pneg %p138
      %p284 = pneg %p135
      %p285 = pneg %p164
      %p286 = pneg %p161
      %s287 = smul.u32 2, %s18
      %p288 = scmp.lt.s32.totalorder %s287, 3
      %s289 = scalar_select %p288, %s287, 3
      %s290 = smul.addr %s289, 8
      %s291 = scalar_lea.vmem %s5, %s290
      %p292 = pneg %p190
      %p293 = pneg %p187
      %s294 = smul.u32 2, %s18
      %p295 = scmp.lt.s32.totalorder %s294, 3
      %s296 = scalar_select %p295, %s294, 3
      %s297 = smul.addr %s296, 4
      %s298 = scalar_lea.vmem %s6, %s297
      %s299 = smul.u32 2, %s18
      %p300 = scmp.lt.s32.totalorder %s299, 3
      %s301 = scalar_select %p300, %s299, 3
      %s302 = smul.addr %s301, 4
      %s303 = scalar_lea.vmem %s0, %s302
      %s304 = smul.u32 2, %s18
      %s305 = smul.u32 2, %s18
      %p306 = scmp.lt.s32.totalorder %s305, 3
      %s307 = scalar_select %p306, %s305, 3
      %s308 = smul.addr %s307, 4
      %s309 = scalar_lea.vmem %s1, %s308
      %s310 = smul.u32 2, %s18
      %s311 = smul.u32 2, %s18
      %p312 = scmp.lt.s32.totalorder %s311, 3
      %s313 = scalar_select %p312, %s311, 3
      %s314 = smul.addr %s313, 4
      %s315 = scalar_lea.vmem %s2, %s314
      %s316 = smul.u32 2, %s18
      %s317 = smul.u32 2, %s18
      %p318 = scmp.lt.s32.totalorder %s317, 3
      %s319 = scalar_select %p318, %s317, 3
      %s320 = smul.addr %s319, 4
      %s321 = scalar_lea.vmem %s3, %s320
      %s322 = smul.u32 2, %s18
      %s323 = smul.u32 2, %s18
      %p324 = scmp.lt.s32.totalorder %s323, 3
      %s325 = scalar_select %p324, %s323, 3
      %s326 = smul.addr %s325, 8
      %s327 = scalar_lea.vmem %s5, %s326
      %s328 = smul.u32 2, %s18
      %s329 = smul.u32 2, %s18
      %p330 = scmp.lt.s32.totalorder %s329, 3
      %s331 = scalar_select %p330, %s329, 3
      %s332 = smul.addr %s331, 4
      %s333 = scalar_lea.vmem %s6, %s332
      %s334 = smul.u32 2, %s18
      %v335 = vld [vmem:[%s321] sm:$0xf]
      %v336 = vld [vmem:[%s321 + $0x4] sm:$0xf]
      %v337 = vld [vmem:[%s315] sm:$0xf]
      %v338 = vld [vmem:[%s315 + $0x4] sm:$0xf]
      %v339 = vadd.bf16 %v337, %v335
      %v340 = vadd.bf16 %v338, %v336
      %341 = vst [vmem:[%s333] sm:$0xf] %v339
      %342 = vst [vmem:[%s333 + $0x4] sm:$0xf] %v340
      %v343 = vld [vmem:[%s309] sm:$0xf]
      %v344 = vld [vmem:[%s309 + $0x4] sm:$0xf]
      %v345 = vunpack.c.l.bf16 %v343
      %v346 = vunpack.c.l.bf16 %v344
      %v347 = vunpack.c.l.bf16 %v335
      %v348 = vunpack.c.l.bf16 %v336
      %v349 = vadd.f32 %v345, %v347
      %v350 = vadd.f32 %v346, %v348
      %v351 = vld [vmem:[%s303] sm:$0xf]
      %v352 = vld [vmem:[%s303 + $0x4] sm:$0xf]
      %v353 = vunpack.c.l.bf16 %v351
      %v354 = vunpack.c.l.bf16 %v352
      %v355 = vmul.f32 %v353, %v349
      %v356 = vmul.f32 %v354, %v350
      %v357 = vld [vmem:[%s4] sm:$0xff]
      %v358 = vld [vmem:[%s4 + $0x8] sm:$0xff]
      %v359 = vld [vmem:[%s4 + $0x10] sm:$0xff]
      %v360 = vld [vmem:[%s4 + $0x18] sm:$0xff]
      %v361 = vld [vmem:[%s4 + $0x20] sm:$0xff]
      %v362 = vld [vmem:[%s4 + $0x28] sm:$0xff]
      %v363 = vld [vmem:[%s4 + $0x30] sm:$0xff]
      %v364 = vld [vmem:[%s4 + $0x38] sm:$0xff]
      %v365 = vld [vmem:[%s4 + $0x40] sm:$0xff]
      %v366 = vld [vmem:[%s4 + $0x48] sm:$0xff]
      %v367 = vld [vmem:[%s4 + $0x50] sm:$0xff]
      %v368 = vld [vmem:[%s4 + $0x58] sm:$0xff]
      %v369 = vld [vmem:[%s4 + $0x60] sm:$0xff]
      %v370 = vld [vmem:[%s4 + $0x68] sm:$0xff]
      %v371 = vld [vmem:[%s4 + $0x70] sm:$0xff]
      %v372 = vld [vmem:[%s4 + $0x78] sm:$0xff]
      %373 = vmatprep.subr.mxu0 0.0
      %374 = vmatpush1.msra.mxu0 %v372
      %375 = vmatprep.subr.mxu0 0.0
      %376 = vmatpush1.msra.mxu0 %v371
      %377 = vmatprep.subr.mxu0 0.0
      %378 = vmatpush1.msra.mxu0 %v370
      %379 = vmatprep.subr.mxu0 0.0
      %380 = vmatpush1.msra.mxu0 %v369
      %381 = vmatprep.subr.mxu0 0.0
      %382 = vmatpush1.msra.mxu0 %v368
      %383 = vmatprep.subr.mxu0 0.0
      %384 = vmatpush1.msra.mxu0 %v367
      %385 = vmatprep.subr.mxu0 0.0
      %386 = vmatpush1.msra.mxu0 %v366
      %387 = vmatprep.subr.mxu0 0.0
      %388 = vmatpush1.msra.mxu0 %v365
      %389 = vmatprep.subr.mxu0 0.0
      %390 = vmatpush1.msra.mxu0 %v364
      %391 = vmatprep.subr.mxu0 0.0
      %392 = vmatpush1.msra.mxu0 %v363
      %393 = vmatprep.subr.mxu0 0.0
      %394 = vmatpush1.msra.mxu0 %v362
      %395 = vmatprep.subr.mxu0 0.0
      %396 = vmatpush1.msra.mxu0 %v361
      %397 = vmatprep.subr.mxu0 0.0
      %398 = vmatpush1.msra.mxu0 %v360
      %399 = vmatprep.subr.mxu0 0.0
      %400 = vmatpush1.msra.mxu0 %v359
      %401 = vmatprep.subr.mxu0 0.0
      %402 = vmatpush1.msra.mxu0 %v358
      %403 = vmatprep.subr.mxu0 0.0
      %404 = vmatpush1.msra.mxu0 %v357
      %405 = vmatprep.subr.mxu0 0.0
      %406 = vmatpush2.msra.mxu0 0.0
      %407 = vmatprep.subr.mxu0 0.0
      %408 = vmatpush2.msra.mxu0 0.0
      %409 = vmatprep.subr.mxu0 0.0
      %410 = vmatpush2.msra.mxu0 0.0
      %411 = vmatprep.subr.mxu0 0.0
      %412 = vmatpush2.msra.mxu0 0.0
      %413 = vmatprep.subr.mxu0 0.0
      %414 = vmatpush2.msra.mxu0 0.0
      %415 = vmatprep.subr.mxu0 0.0
      %416 = vmatpush2.msra.mxu0 0.0
      %417 = vmatprep.subr.mxu0 0.0
      %418 = vmatpush2.msra.mxu0 0.0
      %419 = vmatprep.subr.mxu0 0.0
      %420 = vmatpush2.msra.mxu0 0.0
      %421 = vmatprep.subr.mxu0 0.0
      %422 = vmatpush2.msra.mxu0 0.0
      %423 = vmatprep.subr.mxu0 0.0
      %424 = vmatpush2.msra.mxu0 0.0
      %425 = vmatprep.subr.mxu0 0.0
      %426 = vmatpush2.msra.mxu0 0.0
      %427 = vmatprep.subr.mxu0 0.0
      %428 = vmatpush2.msra.mxu0 0.0
      %429 = vmatprep.subr.mxu0 0.0
      %430 = vmatpush2.msra.mxu0 0.0
      %431 = vmatprep.subr.mxu0 0.0
      %432 = vmatpush2.msra.mxu0 0.0
      %433 = vmatprep.subr.mxu0 0.0
      %434 = vmatpush2.msra.mxu0 0.0
      %435 = vmatprep.subr.mxu0 0.0
      %436 = vmatpush2.msra.mxu0 0.0
      %437 = vmatprep.mubr.f32.mxu0 0.0
      %438 = vmatmul.mubr.f32.gmra.mxu0 %v355
      %v439 = vpop.f32.mrf.mxu0
      %v440 = vadd.f32 0.0, %v439
      %v441 = vpop.f32.mrf.mxu0
      %442 = vmatprep.mubr.f32.mxu0 0.0
      %443 = vmatmul.mubr.f32.gmra.mxu0 %v356
      %v444 = vpop.f32.mrf.mxu0
      %v445 = vadd.f32 0.0, %v444
      %v446 = vpop.f32.mrf.mxu0
      %447 = vdwg.mxu0
      %v448 = vmul.f32 %v440, 0.17677669
      %v449 = vmul.f32 %v445, 0.17677669
      %vm450 = vcmask 31744
      %451 = vst.msk [vmem:[%s327] sm:$0xff] %vm450, %v448
      %452 = vst.msk [vmem:[%s327 + $0x8] sm:$0xff] %vm450, %v449
      %s453 = smul.u32 2, %s18
      %p454 = scmp.lt.s32.totalorder %s453, 3
      %s455 = scalar_select %p454, %s453, 3
      %s456 = smul.addr %s455, 8
      %s457 = scalar_lea.vmem %s5, %s456
      %s458 = smul.u32 2, %s18
      %p459 = scmp.lt.s32.totalorder %s458, 3
      %s460 = scalar_select %p459, %s458, 3
      %s461 = smul.addr %s460, 4
      %s462 = scalar_lea.vmem %s6, %s461
      // Predicated region
      $region41: #{edge_gnn_classifier.13} parent=39 // pred_check
        %p463 = pneg %p161
      $region42: #{edge_gnn_classifier.13} parent=39 // pred_check_branch
        %465 = sbr.rel (%p463) target = $region44
      $region43: #{edge_gnn_classifier.13} parent=39 // pred_region
        %s466 = smul.u32 2, %s18
      $region44: #{edge_gnn_classifier.13} parent=39 // pred_fallthru
        _
      // Predicated region
      $region45: #{edge_gnn_classifier.13} parent=39 // pred_check
        %p467 = pneg %p187
      $region46: #{edge_gnn_classifier.13} parent=39 // pred_check_branch
        %469 = sbr.rel (%p467) target = $region48
      $region47: #{edge_gnn_classifier.13} parent=39 // pred_region
        %s470 = smul.u32 2, %s18
      $region48: #{edge_gnn_classifier.13} parent=39 // pred_fallthru
        _
    $region40: #{edge_gnn_classifier.13} parent=5 // pred_fallthru
      _
    %p471 = scmp.le.s32.totalorder 2, %s13
    // Predicated region
    $region49: #{edge_gnn_classifier.13} parent=5 // pred_check
      %p472 = pneg %p471
    $region50: #{edge_gnn_classifier.13} parent=5 // pred_check_branch
      %474 = sbr.rel (%p472) target = $region52
    $region51: #{edge_gnn_classifier.13} parent=5 // pred_region
      %s475 = ssub.s32 %s13, 2
      // Predicated region
      $region53: #{edge_gnn_classifier.13} parent=51 // pred_check
        %p476 = pneg %p167
      $region54: #{edge_gnn_classifier.13} parent=51 // pred_check_branch
        %478 = sbr.rel (%p476) target = $region56
      $region55: #{edge_gnn_classifier.13} parent=51 // pred_region
        %s479 = smul.u32 2, %s19
        %p480 = scmp.lt.s32.totalorder %s479, 3
        %s481 = scalar_select %p480, %s479, 3
        %s482 = smul.addr %s481, 8
        %s483 = scalar_lea.vmem %s5, %s482
      $region56: #{edge_gnn_classifier.13} parent=51 // pred_fallthru
        _
      // Predicated region
      $region57: #{edge_gnn_classifier.13} parent=51 // pred_check
        %p484 = pneg %p193
      $region58: #{edge_gnn_classifier.13} parent=51 // pred_check_branch
        %486 = sbr.rel (%p484) target = $region60
      $region59: #{edge_gnn_classifier.13} parent=51 // pred_region
        %s487 = smul.u32 2, %s19
        %p488 = scmp.lt.s32.totalorder %s487, 3
        %s489 = scalar_select %p488, %s487, 3
        %s490 = smul.addr %s489, 4
        %s491 = scalar_lea.vmem %s6, %s490
      $region60: #{edge_gnn_classifier.13} parent=51 // pred_fallthru
        _
    $region52: #{edge_gnn_classifier.13} parent=5 // pred_fallthru
      _
  $region6: #{edge_gnn_classifier.13} parent=0 // loop_footer
    %s17 = sadd.s32 1, %s13
  $region7: #{edge_gnn_classifier.13} parent=0 // loop_footer_branch
    %12 = sbr.rel target = $region3
  $region8: #{edge_gnn_classifier.13} parent=0 // loop_exit
    _

// kernel: edge_gnn_classifier.16
$region0: #{edge_gnn_classifier.16}
  #allocation0 [shape = 'u32[]', space=smem, size = 0x4, offset = 0x4, fixed_abs, tag = 'smem constant byte address 0x4 - core index']
  #allocation1 [shape = 'u32[144,128]{1,0:T(1,128)}', space=vmem, size = 0x12000, scoped, tag = 'internal scratch']
  %s0 = inlined_call_operand.vmem [shape: bf16[16,32], index: 0, kind: input, shape index: {}]
  %s1 = inlined_call_operand.vmem [shape: bf16[32,416], index: 1, kind: input, shape index: {}]
  %s2 = inlined_call_operand.vmem [shape: f32[1,416], index: 2, kind: input, shape index: {}]
  %s3 = inlined_call_operand.vmem [shape: bf16[16,416], index: 3, kind: output, shape index: {}]
  %s4 = sld [smem:[#allocation0]]
  $region45: #{edge_gnn_classifier.16} parent=0
    _
  %s6 = ssub.s32 1, %s4
  %s7 = scalar_select 0, %s6, %s4
  loop: start=0, step=1, limit=4
  $region2: #{edge_gnn_classifier.16} parent=0 // loop_pre_header
    _
  $region3: #{edge_gnn_classifier.16} parent=0 // loop_header
    %s9 = sphi 0, %s13
    %p10 = scmp.ge.s32.totalorder %s9, 4
    %s19 = sphi 0, %s21
    %s22 = sphi 0, %s19
    %s23 = sphi 0, %s22
    %s39 = sphi 0, %s23
    %s43 = sphi 0, %s43
    %s45 = sphi 0, %s43
    %s46 = sphi 0, %s45
    %s60 = sphi 0, %s46
    %s64 = sphi 0, %s64
    %s66 = sphi 0, %s64
    %s67 = sphi 0, %s66
    %s81 = sphi 0, %s67
    %s87 = sphi 0, %s89
    %s90 = sphi 0, %s87
    %s91 = sphi 0, %s90
    %s107 = sphi 0, %s91
  $region4: #{edge_gnn_classifier.16} parent=0 // loop_header_branch
    %12 = sbr.rel (%p10) target = $region8
  $region5: #{edge_gnn_classifier.16} parent=0 // loop_body
    %s14 = ssub.s32 %s9, 1
    %s15 = ssub.s32 %s9, 2
    %s16 = sadd.s32 %s9, 1
    %s17 = ssub.s32 %s9, %s16
    %p18 = scmp.eq.s32.totalorder %s17, 0
    %s20 = sadd.s32 %s19, 1
    %s21 = scalar_select %p18, %s19, %s20
    %p24 = pneg %p18
    %p25 = scmp.eq.s32.totalorder %s9, 1
    %p26 = por %p24, %p25
    %p27 = scmp.ne.s32.totalorder %s19, %s22
    %p28 = scmp.eq.s32.totalorder %s9, 0
    %p29 = por %p27, %p28
    %p30 = scmp.ne.s32.totalorder %s19, %s22
    %p31 = scmp.eq.s32.totalorder %s14, 1
    %p32 = por %p30, %p31
    %p33 = scmp.ne.s32.totalorder %s22, %s23
    %p34 = scmp.eq.s32.totalorder %s14, 0
    %p35 = por %p33, %p34
    %p36 = scmp.ne.s32.totalorder %s22, %s23
    %p37 = scmp.eq.s32.totalorder %s15, 1
    %p38 = por %p36, %p37
    %p40 = scmp.ne.s32.totalorder %s23, %s39
    %p41 = scmp.eq.s32.totalorder %s15, 0
    %p42 = por %p40, %p41
    %s44 = sadd.s32 %s43, 1
    %p47 = scmp.eq.s32.totalorder %s9, 1
    %p48 = scmp.ne.s32.totalorder %s43, %s45
    %p49 = scmp.eq.s32.totalorder %s9, 0
    %p50 = por %p48, %p49
    %p51 = scmp.ne.s32.totalorder %s43, %s45
    %p52 = scmp.eq.s32.totalorder %s14, 1
    %p53 = por %p51, %p52
    %p54 = scmp.ne.s32.totalorder %s45, %s46
    %p55 = scmp.eq.s32.totalorder %s14, 0
    %p56 = por %p54, %p55
    %p57 = scmp.ne.s32.totalorder %s45, %s46
    %p58 = scmp.eq.s32.totalorder %s15, 1
    %p59 = por %p57, %p58
    %p61 = scmp.ne.s32.totalorder %s46, %s60
    %p62 = scmp.eq.s32.totalorder %s15, 0
    %p63 = por %p61, %p62
    %s65 = sadd.s32 %s64, 1
    %p68 = scmp.eq.s32.totalorder %s9, 1
    %p69 = scmp.ne.s32.totalorder %s64, %s66
    %p70 = scmp.eq.s32.totalorder %s9, 0
    %p71 = por %p69, %p70
    %p72 = scmp.ne.s32.totalorder %s64, %s66
    %p73 = scmp.eq.s32.totalorder %s14, 1
    %p74 = por %p72, %p73
    %p75 = scmp.ne.s32.totalorder %s66, %s67
    %p76 = scmp.eq.s32.totalorder %s14, 0
    %p77 = por %p75, %p76
    %p78 = scmp.ne.s32.totalorder %s66, %s67
    %p79 = scmp.eq.s32.totalorder %s15, 1
    %p80 = por %p78, %p79
    %p82 = scmp.ne.s32.totalorder %s67, %s81
    %p83 = scmp.eq.s32.totalorder %s15, 0
    %p84 = por %p82, %p83
    %s85 = ssub.s32 %s9, %s16
    %p86 = scmp.eq.s32.totalorder %s85, 0
    %s88 = sadd.s32 %s87, 1
    %s89 = scalar_select %p86, %s87, %s88
    %p92 = pneg %p86
    %p93 = scmp.eq.s32.totalorder %s9, 1
    %p94 = por %p92, %p93
    %p95 = scmp.ne.s32.totalorder %s87, %s90
    %p96 = scmp.eq.s32.totalorder %s9, 0
    %p97 = por %p95, %p96
    %p98 = scmp.ne.s32.totalorder %s87, %s90
    %p99 = scmp.eq.s32.totalorder %s14, 1
    %p100 = por %p98, %p99
    %p101 = scmp.ne.s32.totalorder %s90, %s91
    %p102 = scmp.eq.s32.totalorder %s14, 0
    %p103 = por %p101, %p102
    %p104 = scmp.ne.s32.totalorder %s90, %s91
    %p105 = scmp.eq.s32.totalorder %s15, 1
    %p106 = por %p104, %p105
    %p108 = scmp.ne.s32.totalorder %s91, %s107
    %p109 = scmp.eq.s32.totalorder %s15, 0
    %p110 = por %p108, %p109
    %p111 = scmp.le.s32.totalorder 1, %s9
    %p112 = scmp.lt.s32.totalorder %s9, 3
    %p113 = pnand %p111, %p112
    %p114 = pneg %p113
    // Predicated region
    $region9: #{edge_gnn_classifier.16} parent=5 // pred_check
      _
    $region10: #{edge_gnn_classifier.16} parent=5 // pred_check_branch
      %116 = sbr.rel (%p113) target = $region12
    $region11: #{edge_gnn_classifier.16} parent=5 // pred_region
      %s117 = ssub.s32 %s9, 1
      // Predicated region
      $region13: #{edge_gnn_classifier.16} parent=11 // pred_check
        %p118 = pneg %p56
      $region14: #{edge_gnn_classifier.16} parent=11 // pred_check_branch
        %120 = sbr.rel (%p118) target = $region16
      $region15: #{edge_gnn_classifier.16} parent=11 // pred_region
        _
      $region16: #{edge_gnn_classifier.16} parent=11 // pred_fallthru
        _
      // Predicated region
      $region17: #{edge_gnn_classifier.16} parent=11 // pred_check
        %p121 = pneg %p77
      $region18: #{edge_gnn_classifier.16} parent=11 // pred_check_branch
        %123 = sbr.rel (%p121) target = $region20
      $region19: #{edge_gnn_classifier.16} parent=11 // pred_region
        _
      $region20: #{edge_gnn_classifier.16} parent=11 // pred_fallthru
        _
    $region12: #{edge_gnn_classifier.16} parent=5 // pred_fallthru
      _
    %p124 = scmp.lt.s32.totalorder %s9, 2
    // Predicated region
    $region21: #{edge_gnn_classifier.16} parent=5 // pred_check
      %p125 = pneg %p124
    $region22: #{edge_gnn_classifier.16} parent=5 // pred_check_branch
      %127 = sbr.rel (%p125) target = $region24
    $region23: #{edge_gnn_classifier.16} parent=5 // pred_region
      // Predicated region
      $region25: #{edge_gnn_classifier.16} parent=23 // pred_check
        %p128 = pneg %p29
      $region26: #{edge_gnn_classifier.16} parent=23 // pred_check_branch
        %130 = sbr.rel (%p128) target = $region28
      $region27: #{edge_gnn_classifier.16} parent=23 // pred_region
        %p131 = scmp.lt.s32.totalorder %s9, 1
        %s132 = scalar_select %p131, %s9, 1
        %s133 = smul.addr %s132, 4
        %s134 = scalar_lea.vmem %s0, %s133
      $region28: #{edge_gnn_classifier.16} parent=23 // pred_fallthru
        _
    $region24: #{edge_gnn_classifier.16} parent=5 // pred_fallthru
      _
    %p135 = scmp.le.s32.totalorder 1, %s9
    %p136 = scmp.lt.s32.totalorder %s9, 3
    %p137 = pnand %p135, %p136
    %p138 = pneg %p137
    // Predicated region
    $region29: #{edge_gnn_classifier.16} parent=5 // pred_check
      _
    $region30: #{edge_gnn_classifier.16} parent=5 // pred_check_branch
      %140 = sbr.rel (%p137) target = $region32
    $region31: #{edge_gnn_classifier.16} parent=5 // pred_region
      %s141 = ssub.s32 %s9, 1
      %p142 = scmp.lt.s32.totalorder %s14, 1
      %s143 = scalar_select %p142, %s14, 1
      %s144 = smul.addr %s143, 4
      %s145 = scalar_lea.vmem %s0, %s144
      %p146 = pneg %p35
      %p147 = pneg %p32
      %p148 = pneg %p56
      %p149 = pneg %p53
      %p150 = pneg %p77
      %p151 = pneg %p74
      %p152 = pneg %p103
      %p153 = pneg %p100
      %p154 = scmp.lt.s32.totalorder %s14, 1
      %s155 = scalar_select %p154, %s14, 1
      %s156 = smul.addr %s155, 4
      %s157 = smul.addr %s156, 4
      %s158 = scalar_lea.vmem %s3, %s157
      %p159 = scmp.lt.s32.totalorder %s14, 1
      %s160 = scalar_select %p159, %s14, 1
      %s161 = smul.addr %s160, 4
      %s162 = scalar_lea.vmem %s0, %s161
      %p163 = scmp.lt.s32.totalorder %s14, 1
      %s164 = scalar_select %p163, %s14, 1
      %s165 = smul.addr %s164, 4
      %s166 = smul.addr %s165, 4
      %s167 = scalar_lea.vmem %s3, %s166
      %v169 = vld [vmem:[%s162] sm:$0xf]
      %v170 = vld [vmem:[%s1] sm:$0xff]
      %v171 = vld [vmem:[%s1 + $0x8] sm:$0xff]
      %v172 = vld [vmem:[%s1 + $0x10] sm:$0xff]
      %v173 = vld [vmem:[%s1 + $0x18] sm:$0xff]
      %v174 = vld [vmem:[%s1 + $0x20] sm:$0xff]
      %v175 = vld [vmem:[%s1 + $0x28] sm:$0xff]
      %v176 = vld [vmem:[%s1 + $0x30] sm:$0xff]
      %v177 = vld [vmem:[%s1 + $0x38] sm:$0xff]
      %v178 = vld [vmem:[%s2] sm:$0xf]
      %v180 = vlaneseq
      %v181 = vshrl.u32 %v180, 7
      %v182 = vsub.s32 0, %v181
      %v183 = vrot.slane %v178, %v182
      %v184 = vlaneseq
      %v185 = vshrl.u32 %v184, 7
      %v186 = vsub.s32 1, %v185
      %v187 = vrot.slane %v178, %v186
      %v188 = vlaneseq
      %v189 = vshrl.u32 %v188, 7
      %v190 = vsub.s32 2, %v189
      %v191 = vrot.slane %v178, %v190
      %v192 = vlaneseq
      %v193 = vshrl.u32 %v192, 7
      %v194 = vsub.s32 3, %v193
      %v195 = vrot.slane %v178, %v194
      %v208 = vunpack.c.l.b16 %v170
      %v209 = vunpack.c.h.b16 %v170
      %v210 = vunpack.c.l.b16 %v171
      %v211 = vunpack.c.h.b16 %v171
      %v212 = vunpack.c.l.b16 %v172
      %v213 = vunpack.c.h.b16 %v172
      %v214 = vunpack.c.l.b16 %v173
      %v215 = vunpack.c.h.b16 %v173
      %v216 = vunpack.c.l.b16 %v174
      %v217 = vunpack.c.h.b16 %v174
      %v218 = vunpack.c.l.b16 %v175
      %v219 = vunpack.c.h.b16 %v175
      %v220 = vunpack.c.l.b16 %v176
      %v221 = vunpack.c.h.b16 %v176
      %v222 = vunpack.c.l.b16 %v177
      %v223 = vunpack.c.h.b16 %v177
      %v224 = vpack.c.b16 %v212, %v208
      %v225 = vpack.c.b16 %v213, %v209
      %v226 = vpack.c.b16 %v214, %v210
      %v227 = vpack.c.b16 %v215, %v211
      %v228 = vpack.c.b16 %v220, %v216
      %v229 = vpack.c.b16 %v221, %v217
      %v230 = vpack.c.b16 %v222, %v218
      %v231 = vpack.c.b16 %v223, %v219
      %vm240 = vcmask 261120
      %v242 = vsel %vm240, %v169, 0
      %244 = vmatprep.subr.bf16.mxu0 0
      %245 = vmatpush1.bf16.msra.mxu0 0
      %246 = vmatprep.subr.bf16.mxu0 0
      %247 = vmatpush1.bf16.msra.mxu0 0
      %248 = vmatprep.subr.bf16.mxu0 0
      %249 = vmatpush1.bf16.msra.mxu0 0
      %250 = vmatprep.subr.bf16.mxu0 0
      %251 = vmatpush1.bf16.msra.mxu0 0
      %252 = vmatprep.subr.bf16.mxu0 0
      %253 = vmatpush1.bf16.msra.mxu0 0
      %254 = vmatprep.subr.bf16.mxu0 0
      %255 = vmatpush1.bf16.msra.mxu0 0
      %256 = vmatprep.subr.bf16.mxu0 %v229
      %257 = vmatpush1.bf16.msra.mxu0 %v228
      %258 = vmatprep.subr.bf16.mxu0 %v225
      %259 = vmatpush1.bf16.msra.mxu0 %v224
      %260 = vmatprep.subr.bf16.mxu0 0
      %261 = vmatpush2.bf16.msra.mxu0 0
      %262 = vmatprep.subr.bf16.mxu0 0
      %263 = vmatpush2.bf16.msra.mxu0 0
      %264 = vmatprep.subr.bf16.mxu0 0
      %265 = vmatpush2.bf16.msra.mxu0 0
      %266 = vmatprep.subr.bf16.mxu0 0
      %267 = vmatpush2.bf16.msra.mxu0 0
      %268 = vmatprep.subr.bf16.mxu0 0
      %269 = vmatpush2.bf16.msra.mxu0 0
      %270 = vmatprep.subr.bf16.mxu0 0
      %271 = vmatpush2.bf16.msra.mxu0 0
      %272 = vmatprep.subr.bf16.mxu0 0
      %273 = vmatpush2.bf16.msra.mxu0 0
      %274 = vmatprep.subr.bf16.mxu0 0
      %275 = vmatpush2.bf16.msra.mxu0 0
      %276 = vmatprep.mubr.bf16.mxu0 0
      %277 = vmatmul.mubr.bf16.gmra.mxu0 %v242
      %v278 = vpop.f32.mrf.mxu0
      %v279 = vadd.f32 %v183, %v278
      %v280 = vpop.f32.mrf.mxu0
      %v281 = vadd.f32 %v187, %v280
      %v282 = vpop.f32.mrf.mxu0
      %v283 = vpop.f32.mrf.mxu0
      %284 = vdwg.mxu0
      %285 = vmatprep.subr.bf16.mxu0 0
      %286 = vmatpush1.bf16.msra.mxu0 0
      %287 = vmatprep.subr.bf16.mxu0 0
      %288 = vmatpush1.bf16.msra.mxu0 0
      %289 = vmatprep.subr.bf16.mxu0 0
      %290 = vmatpush1.bf16.msra.mxu0 0
      %291 = vmatprep.subr.bf16.mxu0 0
      %292 = vmatpush1.bf16.msra.mxu0 0
      %293 = vmatprep.subr.bf16.mxu0 0
      %294 = vmatpush1.bf16.msra.mxu0 0
      %295 = vmatprep.subr.bf16.mxu0 0
      %296 = vmatpush1.bf16.msra.mxu0 0
      %297 = vmatprep.subr.bf16.mxu0 %v231
      %298 = vmatpush1.bf16.msra.mxu0 %v230
      %299 = vmatprep.subr.bf16.mxu0 %v227
      %300 = vmatpush1.bf16.msra.mxu0 %v226
      %301 = vmatprep.subr.bf16.mxu0 0
      %302 = vmatpush2.bf16.msra.mxu0 0
      %303 = vmatprep.subr.bf16.mxu0 0
      %304 = vmatpush2.bf16.msra.mxu0 0
      %305 = vmatprep.subr.bf16.mxu0 0
      %306 = vmatpush2.bf16.msra.mxu0 0
      %307 = vmatprep.subr.bf16.mxu0 0
      %308 = vmatpush2.bf16.msra.mxu0 0
      %309 = vmatprep.subr.bf16.mxu0 0
      %310 = vmatpush2.bf16.msra.mxu0 0
      %311 = vmatprep.subr.bf16.mxu0 0
      %312 = vmatpush2.bf16.msra.mxu0 0
      %313 = vmatprep.subr.bf16.mxu0 0
      %314 = vmatpush2.bf16.msra.mxu0 0
      %315 = vmatprep.subr.bf16.mxu0 0
      %316 = vmatpush2.bf16.msra.mxu0 0
      %317 = vmatprep.mubr.bf16.mxu0 0
      %318 = vmatmul.mubr.bf16.gmra.mxu0 %v242
      %v319 = vpop.f32.mrf.mxu0
      %v320 = vadd.f32 %v191, %v319
      %v321 = vpop.f32.mrf.mxu0
      %v322 = vadd.f32 %v195, %v321
      %v323 = vpop.f32.mrf.mxu0
      %v324 = vpop.f32.mrf.mxu0
      %325 = vdwg.mxu0
      %v326 = vpack.c.bf16 %v279, %v279
      %v327 = vpack.c.bf16 %v281, %v281
      %v328 = vpack.c.bf16 %v320, %v320
      %v329 = vpack.c.bf16 %v322, %v322
      %v334 = vunpack.c.l.b16 %v326
      %v335 = vunpack.c.l.b16 %v327
      %v336 = vunpack.c.l.b16 %v328
      %v337 = vunpack.c.l.b16 %v329
      %v338 = vpack.c.b16 %v335, %v334
      %v339 = vpack.c.b16 %v337, %v336
      %342 = vst [vmem:[%s167] sm:$0xff] %v338
      %vm343 = vcmask 1043456
      %vm344 = vcmask 261124
      %vm345 = vmor %vm344, %vm343
      %346 = vst.msk [vmem:[%s167 + $0x8] sm:$0xff] %vm345, %v339
      %p347 = scmp.lt.s32.totalorder %s14, 1
      %s348 = scalar_select %p347, %s14, 1
      %s349 = smul.addr %s348, 4
      %s350 = smul.addr %s349, 4
      %s351 = scalar_lea.vmem %s3, %s350
      // Predicated region
      $region33: #{edge_gnn_classifier.16} parent=31 // pred_check
        %p352 = pneg %p100
      $region34: #{edge_gnn_classifier.16} parent=31 // pred_check_branch
        %354 = sbr.rel (%p352) target = $region36
      $region35: #{edge_gnn_classifier.16} parent=31 // pred_region
        _
      $region36: #{edge_gnn_classifier.16} parent=31 // pred_fallthru
        _
    $region32: #{edge_gnn_classifier.16} parent=5 // pred_fallthru
      _
    %p355 = scmp.le.s32.totalorder 2, %s9
    // Predicated region
    $region37: #{edge_gnn_classifier.16} parent=5 // pred_check
      %p356 = pneg %p355
    $region38: #{edge_gnn_classifier.16} parent=5 // pred_check_branch
      %358 = sbr.rel (%p356) target = $region40
    $region39: #{edge_gnn_classifier.16} parent=5 // pred_region
      %s359 = ssub.s32 %s9, 2
      // Predicated region
      $region41: #{edge_gnn_classifier.16} parent=39 // pred_check
        %p360 = pneg %p106
      $region42: #{edge_gnn_classifier.16} parent=39 // pred_check_branch
        %362 = sbr.rel (%p360) target = $region44
      $region43: #{edge_gnn_classifier.16} parent=39 // pred_region
        %p363 = scmp.lt.s32.totalorder %s15, 1
        %s364 = scalar_select %p363, %s15, 1
        %s365 = smul.addr %s364, 4
        %s366 = smul.addr %s365, 4
        %s367 = scalar_lea.vmem %s3, %s366
      $region44: #{edge_gnn_classifier.16} parent=39 // pred_fallthru
        _
    $region40: #{edge_gnn_classifier.16} parent=5 // pred_fallthru
      _
  $region6: #{edge_gnn_classifier.16} parent=0 // loop_footer
    %s13 = sadd.s32 1, %s9
  $region7: #{edge_gnn_classifier.16} parent=0 // loop_footer_branch
    %8 = sbr.rel target = $region3
  $region8: #{edge_gnn_classifier.16} parent=0 // loop_exit
    _

// kernel: edge_gnn_classifier.14
$region0: #{edge_gnn_classifier.14}
  #allocation0 [shape = 'u32[]', space=smem, size = 0x4, offset = 0x4, fixed_abs, tag = 'smem constant byte address 0x4 - core index']
  #allocation1 [shape = 'u32[144,128]{1,0:T(1,128)}', space=vmem, size = 0x12000, scoped, tag = 'internal scratch']
  %s0 = inlined_call_operand.vmem [shape: bf16[32,128], index: 0, kind: input, shape index: {}]
  %s1 = inlined_call_operand.vmem [shape: f32[32,4], index: 1, kind: input, shape index: {}]
  %s2 = inlined_call_operand.vmem [shape: s32[32,1], index: 2, kind: input, shape index: {}]
  %s3 = inlined_call_operand.vmem [shape: f32[4,128], index: 3, kind: input, shape index: {}]
  %s4 = inlined_call_operand.vmem [shape: f32[16,128], index: 4, kind: output, shape index: {0}]
  %s5 = inlined_call_operand.vmem [shape: f32[16,4], index: 5, kind: output, shape index: {1}]
  %6 = xla_tuple %s4, %s5
  %s7 = sld [smem:[#allocation0]]
  $region61: #{edge_gnn_classifier.14} parent=0
    _
  %s9 = ssub.s32 1, %s7
  %s10 = scalar_select 0, %s9, %s7
  loop: start=0, step=1, limit=4
  $region2: #{edge_gnn_classifier.14} parent=0 // loop_pre_header
    _
  $region3: #{edge_gnn_classifier.14} parent=0 // loop_header
    %s12 = sphi 0, %s16
    %p13 = scmp.ge.s32.totalorder %s12, 4
    %s22 = sphi 0, %s24
    %s25 = sphi 0, %s22
    %s26 = sphi 0, %s25
    %s42 = sphi 0, %s26
    %s48 = sphi 0, %s50
    %s51 = sphi 0, %s48
    %s52 = sphi 0, %s51
    %s68 = sphi 0, %s52
    %s74 = sphi 0, %s76
    %s77 = sphi 0, %s74
    %s78 = sphi 0, %s77
    %s94 = sphi 0, %s78
    %s98 = sphi 0, %s98
    %s100 = sphi 0, %s98
    %s101 = sphi 0, %s100
    %s115 = sphi 0, %s101
    %s119 = sphi 0, %s119
    %s121 = sphi 0, %s119
    %s122 = sphi 0, %s121
    %s136 = sphi 0, %s122
    %s140 = sphi 0, %s140
    %s142 = sphi 0, %s140
    %s143 = sphi 0, %s142
    %s157 = sphi 0, %s143
  $region4: #{edge_gnn_classifier.14} parent=0 // loop_header_branch
    %15 = sbr.rel (%p13) target = $region8
  $region5: #{edge_gnn_classifier.14} parent=0 // loop_body
    %s17 = ssub.s32 %s12, 1
    %s18 = ssub.s32 %s12, 2
    %s19 = sadd.s32 %s12, 1
    %s20 = ssub.s32 %s12, %s19
    %p21 = scmp.eq.s32.totalorder %s20, 0
    %s23 = sadd.s32 %s22, 1
    %s24 = scalar_select %p21, %s22, %s23
    %p27 = pneg %p21
    %p28 = scmp.eq.s32.totalorder %s12, 1
    %p29 = por %p27, %p28
    %p30 = scmp.ne.s32.totalorder %s22, %s25
    %p31 = scmp.eq.s32.totalorder %s12, 0
    %p32 = por %p30, %p31
    %p33 = scmp.ne.s32.totalorder %s22, %s25
    %p34 = scmp.eq.s32.totalorder %s17, 1
    %p35 = por %p33, %p34
    %p36 = scmp.ne.s32.totalorder %s25, %s26
    %p37 = scmp.eq.s32.totalorder %s17, 0
    %p38 = por %p36, %p37
    %p39 = scmp.ne.s32.totalorder %s25, %s26
    %p40 = scmp.eq.s32.totalorder %s18, 1
    %p41 = por %p39, %p40
    %p43 = scmp.ne.s32.totalorder %s26, %s42
    %p44 = scmp.eq.s32.totalorder %s18, 0
    %p45 = por %p43, %p44
    %s46 = ssub.s32 %s12, %s19
    %p47 = scmp.eq.s32.totalorder %s46, 0
    %s49 = sadd.s32 %s48, 1
    %s50 = scalar_select %p47, %s48, %s49
    %p53 = pneg %p47
    %p54 = scmp.eq.s32.totalorder %s12, 1
    %p55 = por %p53, %p54
    %p56 = scmp.ne.s32.totalorder %s48, %s51
    %p57 = scmp.eq.s32.totalorder %s12, 0
    %p58 = por %p56, %p57
    %p59 = scmp.ne.s32.totalorder %s48, %s51
    %p60 = scmp.eq.s32.totalorder %s17, 1
    %p61 = por %p59, %p60
    %p62 = scmp.ne.s32.totalorder %s51, %s52
    %p63 = scmp.eq.s32.totalorder %s17, 0
    %p64 = por %p62, %p63
    %p65 = scmp.ne.s32.totalorder %s51, %s52
    %p66 = scmp.eq.s32.totalorder %s18, 1
    %p67 = por %p65, %p66
    %p69 = scmp.ne.s32.totalorder %s52, %s68
    %p70 = scmp.eq.s32.totalorder %s18, 0
    %p71 = por %p69, %p70
    %s72 = ssub.s32 %s12, %s19
    %p73 = scmp.eq.s32.totalorder %s72, 0
    %s75 = sadd.s32 %s74, 1
    %s76 = scalar_select %p73, %s74, %s75
    %p79 = pneg %p73
    %p80 = scmp.eq.s32.totalorder %s12, 1
    %p81 = por %p79, %p80
    %p82 = scmp.ne.s32.totalorder %s74, %s77
    %p83 = scmp.eq.s32.totalorder %s12, 0
    %p84 = por %p82, %p83
    %p85 = scmp.ne.s32.totalorder %s74, %s77
    %p86 = scmp.eq.s32.totalorder %s17, 1
    %p87 = por %p85, %p86
    %p88 = scmp.ne.s32.totalorder %s77, %s78
    %p89 = scmp.eq.s32.totalorder %s17, 0
    %p90 = por %p88, %p89
    %p91 = scmp.ne.s32.totalorder %s77, %s78
    %p92 = scmp.eq.s32.totalorder %s18, 1
    %p93 = por %p91, %p92
    %p95 = scmp.ne.s32.totalorder %s78, %s94
    %p96 = scmp.eq.s32.totalorder %s18, 0
    %p97 = por %p95, %p96
    %s99 = sadd.s32 %s98, 1
    %p102 = scmp.eq.s32.totalorder %s12, 1
    %p103 = scmp.ne.s32.totalorder %s98, %s100
    %p104 = scmp.eq.s32.totalorder %s12, 0
    %p105 = por %p103, %p104
    %p106 = scmp.ne.s32.totalorder %s98, %s100
    %p107 = scmp.eq.s32.totalorder %s17, 1
    %p108 = por %p106, %p107
    %p109 = scmp.ne.s32.totalorder %s100, %s101
    %p110 = scmp.eq.s32.totalorder %s17, 0
    %p111 = por %p109, %p110
    %p112 = scmp.ne.s32.totalorder %s100, %s101
    %p113 = scmp.eq.s32.totalorder %s18, 1
    %p114 = por %p112, %p113
    %p116 = scmp.ne.s32.totalorder %s101, %s115
    %p117 = scmp.eq.s32.totalorder %s18, 0
    %p118 = por %p116, %p117
    %s120 = sadd.s32 %s119, 1
    %p123 = scmp.eq.s32.totalorder %s12, 1
    %p124 = scmp.ne.s32.totalorder %s119, %s121
    %p125 = scmp.eq.s32.totalorder %s12, 0
    %p126 = por %p124, %p125
    %p127 = scmp.ne.s32.totalorder %s119, %s121
    %p128 = scmp.eq.s32.totalorder %s17, 1
    %p129 = por %p127, %p128
    %p130 = scmp.ne.s32.totalorder %s121, %s122
    %p131 = scmp.eq.s32.totalorder %s17, 0
    %p132 = por %p130, %p131
    %p133 = scmp.ne.s32.totalorder %s121, %s122
    %p134 = scmp.eq.s32.totalorder %s18, 1
    %p135 = por %p133, %p134
    %p137 = scmp.ne.s32.totalorder %s122, %s136
    %p138 = scmp.eq.s32.totalorder %s18, 0
    %p139 = por %p137, %p138
    %s141 = sadd.s32 %s140, 1
    %p144 = scmp.eq.s32.totalorder %s12, 1
    %p145 = scmp.ne.s32.totalorder %s140, %s142
    %p146 = scmp.eq.s32.totalorder %s12, 0
    %p147 = por %p145, %p146
    %p148 = scmp.ne.s32.totalorder %s140, %s142
    %p149 = scmp.eq.s32.totalorder %s17, 1
    %p150 = por %p148, %p149
    %p151 = scmp.ne.s32.totalorder %s142, %s143
    %p152 = scmp.eq.s32.totalorder %s17, 0
    %p153 = por %p151, %p152
    %p154 = scmp.ne.s32.totalorder %s142, %s143
    %p155 = scmp.eq.s32.totalorder %s18, 1
    %p156 = por %p154, %p155
    %p158 = scmp.ne.s32.totalorder %s143, %s157
    %p159 = scmp.eq.s32.totalorder %s18, 0
    %p160 = por %p158, %p159
    %p161 = scmp.le.s32.totalorder 1, %s12
    %p162 = scmp.lt.s32.totalorder %s12, 3
    %p163 = pnand %p161, %p162
    %p164 = pneg %p163
    // Predicated region
    $region9: #{edge_gnn_classifier.14} parent=5 // pred_check
      _
    $region10: #{edge_gnn_classifier.14} parent=5 // pred_check_branch
      %166 = sbr.rel (%p163) target = $region12
    $region11: #{edge_gnn_classifier.14} parent=5 // pred_region
      %s167 = ssub.s32 %s12, 1
      // Predicated region
      $region13: #{edge_gnn_classifier.14} parent=11 // pred_check
        %p168 = pneg %p111
      $region14: #{edge_gnn_classifier.14} parent=11 // pred_check_branch
        %170 = sbr.rel (%p168) target = $region16
      $region15: #{edge_gnn_classifier.14} parent=11 // pred_region
        _
      $region16: #{edge_gnn_classifier.14} parent=11 // pred_fallthru
        _
    $region12: #{edge_gnn_classifier.14} parent=5 // pred_fallthru
      _
    %p171 = scmp.lt.s32.totalorder %s12, 2
    // Predicated region
    $region17: #{edge_gnn_classifier.14} parent=5 // pred_check
      %p172 = pneg %p171
    $region18: #{edge_gnn_classifier.14} parent=5 // pred_check_branch
      %174 = sbr.rel (%p172) target = $region20
    $region19: #{edge_gnn_classifier.14} parent=5 // pred_region
      // Predicated region
      $region21: #{edge_gnn_classifier.14} parent=19 // pred_check
        %p175 = pneg %p32
      $region22: #{edge_gnn_classifier.14} parent=19 // pred_check_branch
        %177 = sbr.rel (%p175) target = $region24
      $region23: #{edge_gnn_classifier.14} parent=19 // pred_region
        %s178 = smul.u32 2, %s12
        %p179 = scmp.lt.s32.totalorder %s178, 3
        %s180 = scalar_select %p179, %s178, 3
        %s181 = smul.addr %s180, 4
        %s182 = scalar_lea.vmem %s0, %s181
        %s183 = smul.u32 2, %s12
      $region24: #{edge_gnn_classifier.14} parent=19 // pred_fallthru
        _
      // Predicated region
      $region25: #{edge_gnn_classifier.14} parent=19 // pred_check
        %p184 = pneg %p58
      $region26: #{edge_gnn_classifier.14} parent=19 // pred_check_branch
        %186 = sbr.rel (%p184) target = $region28
      $region27: #{edge_gnn_classifier.14} parent=19 // pred_region
        %s187 = smul.u32 2, %s12
        %p188 = scmp.lt.s32.totalorder %s187, 3
        %s189 = scalar_select %p188, %s187, 3
        %s190 = smul.addr %s189, 8
        %s191 = scalar_lea.vmem %s1, %s190
        %s192 = smul.u32 2, %s12
      $region28: #{edge_gnn_classifier.14} parent=19 // pred_fallthru
        _
      // Predicated region
      $region29: #{edge_gnn_classifier.14} parent=19 // pred_check
        %p193 = pneg %p84
      $region30: #{edge_gnn_classifier.14} parent=19 // pred_check_branch
        %195 = sbr.rel (%p193) target = $region32
      $region31: #{edge_gnn_classifier.14} parent=19 // pred_region
        %s196 = smul.u32 2, %s12
        %p197 = scmp.lt.s32.totalorder %s196, 3
        %s198 = scalar_select %p197, %s196, 3
        %s199 = smul.addr %s198, 8
        %s200 = scalar_lea.vmem %s2, %s199
        %s201 = smul.u32 2, %s12
      $region32: #{edge_gnn_classifier.14} parent=19 // pred_fallthru
        _
    $region20: #{edge_gnn_classifier.14} parent=5 // pred_fallthru
      _
    %p202 = scmp.le.s32.totalorder 1, %s12
    %p203 = scmp.lt.s32.totalorder %s12, 3
    %p204 = pnand %p202, %p203
    %p205 = pneg %p204
    // Predicated region
    $region33: #{edge_gnn_classifier.14} parent=5 // pred_check
      _
    $region34: #{edge_gnn_classifier.14} parent=5 // pred_check_branch
      %207 = sbr.rel (%p204) target = $region36
    $region35: #{edge_gnn_classifier.14} parent=5 // pred_region
      %s208 = ssub.s32 %s12, 1
      %s209 = smul.u32 2, %s17
      %p210 = scmp.lt.s32.totalorder %s209, 3
      %s211 = scalar_select %p210, %s209, 3
      %s212 = smul.addr %s211, 4
      %s213 = scalar_lea.vmem %s0, %s212
      %p214 = pneg %p38
      %p215 = pneg %p35
      %s216 = smul.u32 2, %s17
      %p217 = scmp.lt.s32.totalorder %s216, 3
      %s218 = scalar_select %p217, %s216, 3
      %s219 = smul.addr %s218, 8
      %s220 = scalar_lea.vmem %s1, %s219
      %p221 = pneg %p64
      %p222 = pneg %p61
      %s223 = smul.u32 2, %s17
      %p224 = scmp.lt.s32.totalorder %s223, 3
      %s225 = scalar_select %p224, %s223, 3
      %s226 = smul.addr %s225, 8
      %s227 = scalar_lea.vmem %s2, %s226
      %p228 = pneg %p90
      %p229 = pneg %p87
      %p230 = pneg %p111
      %p231 = pneg %p108
      %p232 = pneg %p132
      %p233 = pneg %p129
      %p234 = pneg %p153
      %p235 = pneg %p150
      %s236 = smul.u32 2, %s17
      %p237 = scmp.lt.s32.totalorder %s236, 3
      %s238 = scalar_select %p237, %s236, 3
      %s239 = smul.addr %s238, 4
      %s240 = scalar_lea.vmem %s0, %s239
      %s241 = smul.u32 2, %s17
      %s242 = smul.u32 2, %s17
      %p243 = scmp.lt.s32.totalorder %s242, 3
      %s244 = scalar_select %p243, %s242, 3
      %s245 = smul.addr %s244, 8
      %s246 = scalar_lea.vmem %s1, %s245
      %s247 = smul.u32 2, %s17
      %s248 = smul.u32 2, %s17
      %p249 = scmp.lt.s32.totalorder %s248, 3
      %s250 = scalar_select %p249, %s248, 3
      %s251 = smul.addr %s250, 8
      %s252 = scalar_lea.vmem %s2, %s251
      %s253 = smul.u32 2, %s17
      %p255 = scmp.eq.s32.totalorder %s17, 0
      // Predicated region
      $region37: #{edge_gnn_classifier.14} parent=35 // pred_check
        %p256 = pneg %p255
      $region38: #{edge_gnn_classifier.14} parent=35 // pred_check_branch
        %258 = sbr.rel (%p256) target = $region40
      $region39: #{edge_gnn_classifier.14} parent=35 // pred_region
        %259 = vst [vmem:[%s4] sm:$0xff] 0.0
        %260 = vst [vmem:[%s4 + $0x8] sm:$0xff] 0.0
        %vm261 = vcmask 31744
        %262 = vst.msk [vmem:[%s5] sm:$0xff] %vm261, 0.0
        %263 = vst.msk [vmem:[%s5 + $0x8] sm:$0xff] %vm261, 0.0
      $region40: #{edge_gnn_classifier.14} parent=35 // pred_fallthru
        _
      %v264 = vld [vmem:[%s246] sm:$0xff]
      %v265 = vld [vmem:[%s246 + $0x8] sm:$0xff]
      %v266 = vld [vmem:[%s3] sm:$0xf]
      %vm267 = vcmask 31744
      %v269 = vsel %vm267, %v264, 0
      %v272 = vsel %vm267, %v265, 0
      %vm274 = vcmask 1043456
      %v276 = vsel %vm274, %v266, 0
      %278 = vmatprep.subr.mxu0 0.0
      %279 = vmatpush1.msra.mxu0 0.0
      %280 = vmatprep.subr.mxu0 0.0
      %281 = vmatpush1.msra.mxu0 0.0
      %282 = vmatprep.subr.mxu0 0.0
      %283 = vmatpush1.msra.mxu0 0.0
      %284 = vmatprep.subr.mxu0 0.0
      %285 = vmatpush1.msra.mxu0 0.0
      %286 = vmatprep.subr.mxu0 0.0
      %287 = vmatpush1.msra.mxu0 0.0
      %288 = vmatprep.subr.mxu0 0.0
      %289 = vmatpush1.msra.mxu0 0.0
      %290 = vmatprep.subr.mxu0 0.0
      %291 = vmatpush1.msra.mxu0 0.0
      %292 = vmatprep.subr.mxu0 0.0
      %293 = vmatpush1.msra.mxu0 0.0
      %294 = vmatprep.subr.mxu0 0.0
      %295 = vmatpush1.msra.mxu0 0.0
      %296 = vmatprep.subr.mxu0 0.0
      %297 = vmatpush1.msra.mxu0 0.0
      %298 = vmatprep.subr.mxu0 0.0
      %299 = vmatpush1.msra.mxu0 0.0
      %300 = vmatprep.subr.mxu0 0.0
      %301 = vmatpush1.msra.mxu0 0.0
      %302 = vmatprep.subr.mxu0 0.0
      %303 = vmatpush1.msra.mxu0 0.0
      %304 = vmatprep.subr.mxu0 0.0
      %305 = vmatpush1.msra.mxu0 0.0
      %306 = vmatprep.subr.mxu0 0.0
      %307 = vmatpush1.msra.mxu0 0.0
      %308 = vmatprep.subr.mxu0 0.0
      %309 = vmatpush1.msra.mxu0 %v276
      %310 = vmatprep.subr.mxu0 0.0
      %311 = vmatpush2.msra.mxu0 0.0
      %312 = vmatprep.subr.mxu0 0.0
      %313 = vmatpush2.msra.mxu0 0.0
      %314 = vmatprep.subr.mxu0 0.0
      %315 = vmatpush2.msra.mxu0 0.0
      %316 = vmatprep.subr.mxu0 0.0
      %317 = vmatpush2.msra.mxu0 0.0
      %318 = vmatprep.subr.mxu0 0.0
      %319 = vmatpush2.msra.mxu0 0.0
      %320 = vmatprep.subr.mxu0 0.0
      %321 = vmatpush2.msra.mxu0 0.0
      %322 = vmatprep.subr.mxu0 0.0
      %323 = vmatpush2.msra.mxu0 0.0
      %324 = vmatprep.subr.mxu0 0.0
      %325 = vmatpush2.msra.mxu0 0.0
      %326 = vmatprep.subr.mxu0 0.0
      %327 = vmatpush2.msra.mxu0 0.0
      %328 = vmatprep.subr.mxu0 0.0
      %329 = vmatpush2.msra.mxu0 0.0
      %330 = vmatprep.subr.mxu0 0.0
      %331 = vmatpush2.msra.mxu0 0.0
      %332 = vmatprep.subr.mxu0 0.0
      %333 = vmatpush2.msra.mxu0 0.0
      %334 = vmatprep.subr.mxu0 0.0
      %335 = vmatpush2.msra.mxu0 0.0
      %336 = vmatprep.subr.mxu0 0.0
      %337 = vmatpush2.msra.mxu0 0.0
      %338 = vmatprep.subr.mxu0 0.0
      %339 = vmatpush2.msra.mxu0 0.0
      %340 = vmatprep.subr.mxu0 0.0
      %341 = vmatpush2.msra.mxu0 0.0
      %342 = vmatprep.mubr.f32.mxu0 0.0
      %343 = vmatmul.mubr.f32.gmra.mxu0 %v269
      %v344 = vpop.f32.mrf.mxu0
      %v345 = vadd.f32 0.0, %v344
      %v346 = vpop.f32.mrf.mxu0
      %347 = vmatprep.mubr.f32.mxu0 0.0
      %348 = vmatmul.mubr.f32.gmra.mxu0 %v272
      %v349 = vpop.f32.mrf.mxu0
      %v350 = vadd.f32 0.0, %v349
      %v351 = vpop.f32.mrf.mxu0
      %352 = vdwg.mxu0
      %v353 = vld [vmem:[%s240] sm:$0xf]
      %v354 = vld [vmem:[%s240 + $0x4] sm:$0xf]
      %v355 = vunpack.c.l.bf16 %v353
      %v356 = vunpack.c.l.bf16 %v354
      %v357 = vmul.f32 %v355, %v345
      %v358 = vmul.f32 %v356, %v350
      %v359 = vpack.c.bf16 %v358, %v357
      %v360 = vlaneseq
      %v361 = vand.u32 %v360, 127
      %v362 = vld [vmem:[%s252] sm:$0xff]
      %v363 = vld [vmem:[%s252 + $0x8] sm:$0xff]
      %364 = vset.pattern.permute.xlu0 0
      %365 = vperm.xlu0 %364, %v362
      %v366 = vpop.permute.xlu0 %365
      %367 = vset.pattern.permute.xlu0 0
      %368 = vperm.xlu0 %367, %v363
      %v369 = vpop.permute.xlu0 %368
      %vm370 = vcmp.eq.s32.totalorder %v361, %v366
      %vm371 = vcmp.eq.s32.totalorder %v361, %v369
      %v372 = vsel %vm370, 1, 0
      %v373 = vsel %vm371, 1, 0
      %v374 = vcvt.s32.f32 %v372
      %v375 = vcvt.s32.f32 %v373
      %v376 = vld [vmem:[%s4] sm:$0xff]
      %v377 = vld [vmem:[%s4 + $0x8] sm:$0xff]
      %v378 = vpack.c.bf16 %v375, %v374
      %379 = vxpose.xlu0.c.b16.start [1/8] %v378, 128
      %380 = vxpose.xlu0.c.b16.cont [2/8] 0, 128
      %381 = vxpose.xlu0.c.b16.cont [3/8] 0, 128
      %382 = vxpose.xlu0.c.b16.cont [4/8] 0, 128
      %383 = vxpose.xlu0.c.b16.cont [5/8] 0, 128
      %384 = vxpose.xlu0.c.b16.cont [6/8] 0, 128
      %385 = vxpose.xlu0.c.b16.cont [7/8] 0, 128
      %386 = vxpose.xlu0.c.b16.end [8/8] 0, 128
      %v387 = vpop.trf.xlu0
      %v388 = vpop.trf.xlu0
      %v389 = vpop.trf.xlu0
      %v390 = vpop.trf.xlu0
      %v391 = vpop.trf.xlu0
      %v392 = vpop.trf.xlu0
      %v393 = vpop.trf.xlu0
      %v394 = vpop.trf.xlu0
      %vm395 = vcmask 130048
      %v397 = vsel %vm395, %v387, 0
      %399 = vmatprep.subr.bf16.mxu0 0
      %400 = vmatpush1.bf16.msra.mxu0 0
      %401 = vmatprep.subr.bf16.mxu0 0
      %402 = vmatpush1.bf16.msra.mxu0 0
      %403 = vmatprep.subr.bf16.mxu0 0
      %404 = vmatpush1.bf16.msra.mxu0 0
      %405 = vmatprep.subr.bf16.mxu0 0
      %406 = vmatpush1.bf16.msra.mxu0 0
      %407 = vmatprep.subr.bf16.mxu0 0
      %408 = vmatpush1.bf16.msra.mxu0 0
      %409 = vmatprep.subr.bf16.mxu0 0
      %410 = vmatpush1.bf16.msra.mxu0 0
      %411 = vmatprep.subr.bf16.mxu0 0
      %412 = vmatpush1.bf16.msra.mxu0 0
      %413 = vmatprep.subr.bf16.mxu0 0
      %414 = vmatpush1.bf16.msra.mxu0 %v359
      %415 = vmatprep.subr.bf16.mxu0 0
      %416 = vmatpush2.bf16.msra.mxu0 0
      %417 = vmatprep.subr.bf16.mxu0 0
      %418 = vmatpush2.bf16.msra.mxu0 0
      %419 = vmatprep.subr.bf16.mxu0 0
      %420 = vmatpush2.bf16.msra.mxu0 0
      %421 = vmatprep.subr.bf16.mxu0 0
      %422 = vmatpush2.bf16.msra.mxu0 0
      %423 = vmatprep.subr.bf16.mxu0 0
      %424 = vmatpush2.bf16.msra.mxu0 0
      %425 = vmatprep.subr.bf16.mxu0 0
      %426 = vmatpush2.bf16.msra.mxu0 0
      %427 = vmatprep.subr.bf16.mxu0 0
      %428 = vmatpush2.bf16.msra.mxu0 0
      %429 = vmatprep.subr.bf16.mxu0 0
      %430 = vmatpush2.bf16.msra.mxu0 0
      %431 = vmatprep.mubr.bf16.mxu0 0
      %432 = vmatmul.mubr.bf16.gmra.mxu0 %v397
      %v433 = vpop.f32.mrf.mxu0
      %v434 = vadd.f32 0.0, %v433
      %v435 = vpop.f32.mrf.mxu0
      %v436 = vpop.f32.mrf.mxu0
      %v437 = vadd.f32 0.0, %v436
      %v438 = vpop.f32.mrf.mxu0
      %439 = vdwg.mxu0
      %v440 = vadd.f32 %v376, %v434
      %v441 = vadd.f32 %v377, %v437
      %442 = vst [vmem:[%s4] sm:$0xff] %v440
      %443 = vst [vmem:[%s4 + $0x8] sm:$0xff] %v441
      %v444 = vld [vmem:[%s5] sm:$0xff]
      %v445 = vld [vmem:[%s5 + $0x8] sm:$0xff]
      %446 = vxpose.xlu0.b32.start [1/16] %v374, 128
      %447 = vxpose.xlu0.b32.cont [2/16] %v375, 128
      %448 = vxpose.xlu0.b32.cont [3/16] 0.0, 128
      %449 = vxpose.xlu0.b32.cont [4/16] 0.0, 128
      %450 = vxpose.xlu0.b32.cont [5/16] 0.0, 128
      %451 = vxpose.xlu0.b32.cont [6/16] 0.0, 128
      %452 = vxpose.xlu0.b32.cont [7/16] 0.0, 128
      %453 = vxpose.xlu0.b32.cont [8/16] 0.0, 128
      %454 = vxpose.xlu0.b32.cont [9/16] 0.0, 128
      %455 = vxpose.xlu0.b32.cont [10/16] 0.0, 128
      %456 = vxpose.xlu0.b32.cont [11/16] 0.0, 128
      %457 = vxpose.xlu0.b32.cont [12/16] 0.0, 128
      %458 = vxpose.xlu0.b32.cont [13/16] 0.0, 128
      %459 = vxpose.xlu0.b32.cont [14/16] 0.0, 128
      %460 = vxpose.xlu0.b32.cont [15/16] 0.0, 128
      %461 = vxpose.xlu0.b32.end [16/16] 0.0, 128
      %v462 = vpop.trf.xlu0
      %v463 = vpop.trf.xlu0
      %v464 = vpop.trf.xlu0
      %v465 = vpop.trf.xlu0
      %v466 = vpop.trf.xlu0
      %v467 = vpop.trf.xlu0
      %v468 = vpop.trf.xlu0
      %v469 = vpop.trf.xlu0
      %v470 = vpop.trf.xlu0
      %v471 = vpop.trf.xlu0
      %v472 = vpop.trf.xlu0
      %v473 = vpop.trf.xlu0
      %v474 = vpop.trf.xlu0
      %v475 = vpop.trf.xlu0
      %v476 = vpop.trf.xlu0
      %v477 = vpop.trf.xlu0
      %v479 = vsel %vm395, %v462, 0
      %v482 = vsel %vm395, %v463, 0
      %484 = vmatprep.subr.mxu0 0.0
      %485 = vmatpush1.msra.mxu0 0.0
      %486 = vmatprep.subr.mxu0 0.0
      %487 = vmatpush1.msra.mxu0 0.0
      %488 = vmatprep.subr.mxu0 0.0
      %489 = vmatpush1.msra.mxu0 0.0
      %490 = vmatprep.subr.mxu0 0.0
      %491 = vmatpush1.msra.mxu0 0.0
      %492 = vmatprep.subr.mxu0 0.0
      %493 = vmatpush1.msra.mxu0 0.0
      %494 = vmatprep.subr.mxu0 0.0
      %495 = vmatpush1.msra.mxu0 0.0
      %496 = vmatprep.subr.mxu0 0.0
      %497 = vmatpush1.msra.mxu0 0.0
      %498 = vmatprep.subr.mxu0 0.0
      %499 = vmatpush1.msra.mxu0 0.0
      %500 = vmatprep.subr.mxu0 0.0
      %501 = vmatpush1.msra.mxu0 0.0
      %502 = vmatprep.subr.mxu0 0.0
      %503 = vmatpush1.msra.mxu0 0.0
      %504 = vmatprep.subr.mxu0 0.0
      %505 = vmatpush1.msra.mxu0 0.0
      %506 = vmatprep.subr.mxu0 0.0
      %507 = vmatpush1.msra.mxu0 0.0
      %508 = vmatprep.subr.mxu0 0.0
      %509 = vmatpush1.msra.mxu0 0.0
      %510 = vmatprep.subr.mxu0 0.0
      %511 = vmatpush1.msra.mxu0 0.0
      %512 = vmatprep.subr.mxu0 0.0
      %513 = vmatpush1.msra.mxu0 %v265
      %514 = vmatprep.subr.mxu0 0.0
      %515 = vmatpush1.msra.mxu0 %v264
      %516 = vmatprep.subr.mxu0 0.0
      %517 = vmatpush2.msra.mxu0 0.0
      %518 = vmatprep.subr.mxu0 0.0
      %519 = vmatpush2.msra.mxu0 0.0
      %520 = vmatprep.subr.mxu0 0.0
      %521 = vmatpush2.msra.mxu0 0.0
      %522 = vmatprep.subr.mxu0 0.0
      %523 = vmatpush2.msra.mxu0 0.0
      %524 = vmatprep.subr.mxu0 0.0
      %525 = vmatpush2.msra.mxu0 0.0
      %526 = vmatprep.subr.mxu0 0.0
      %527 = vmatpush2.msra.mxu0 0.0
      %528 = vmatprep.subr.mxu0 0.0
      %529 = vmatpush2.msra.mxu0 0.0
      %530 = vmatprep.subr.mxu0 0.0
      %531 = vmatpush2.msra.mxu0 0.0
      %532 = vmatprep.subr.mxu0 0.0
      %533 = vmatpush2.msra.mxu0 0.0
      %534 = vmatprep.subr.mxu0 0.0
      %535 = vmatpush2.msra.mxu0 0.0
      %536 = vmatprep.subr.mxu0 0.0
      %537 = vmatpush2.msra.mxu0 0.0
      %538 = vmatprep.subr.mxu0 0.0
      %539 = vmatpush2.msra.mxu0 0.0
      %540 = vmatprep.subr.mxu0 0.0
      %541 = vmatpush2.msra.mxu0 0.0
      %542 = vmatprep.subr.mxu0 0.0
      %543 = vmatpush2.msra.mxu0 0.0
      %544 = vmatprep.subr.mxu0 0.0
      %545 = vmatpush2.msra.mxu0 0.0
      %546 = vmatprep.subr.mxu0 0.0
      %547 = vmatpush2.msra.mxu0 0.0
      %548 = vmatprep.mubr.f32.mxu0 0.0
      %549 = vmatmul.mubr.f32.gmra.mxu0 %v479
      %v550 = vpop.f32.mrf.mxu0
      %v551 = vadd.f32 0.0, %v550
      %v552 = vpop.f32.mrf.mxu0
      %553 = vmatprep.mubr.f32.mxu0 0.0
      %554 = vmatmul.mubr.f32.gmra.mxu0 %v482
      %v555 = vpop.f32.mrf.mxu0
      %v556 = vadd.f32 0.0, %v555
      %v557 = vpop.f32.mrf.mxu0
      %558 = vdwg.mxu0
      %v559 = vadd.f32 %v444, %v551
      %v560 = vadd.f32 %v445, %v556
      %561 = vst.msk [vmem:[%s5] sm:$0xff] %vm267, %v559
      %562 = vst.msk [vmem:[%s5 + $0x8] sm:$0xff] %vm267, %v560
      // Predicated region
      $region41: #{edge_gnn_classifier.14} parent=35 // pred_check
        %p563 = pneg %p129
      $region42: #{edge_gnn_classifier.14} parent=35 // pred_check_branch
        %565 = sbr.rel (%p563) target = $region44
      $region43: #{edge_gnn_classifier.14} parent=35 // pred_region
        _
      $region44: #{edge_gnn_classifier.14} parent=35 // pred_fallthru
        _
      // Predicated region
      $region45: #{edge_gnn_classifier.14} parent=35 // pred_check
        %p566 = pneg %p150
      $region46: #{edge_gnn_classifier.14} parent=35 // pred_check_branch
        %568 = sbr.rel (%p566) target = $region48
      $region47: #{edge_gnn_classifier.14} parent=35 // pred_region
        _
      $region48: #{edge_gnn_classifier.14} parent=35 // pred_fallthru
        _
      // Predicated region
      $region49: #{edge_gnn_classifier.14} parent=35 // pred_check
        %p569 = pneg %p129
      $region50: #{edge_gnn_classifier.14} parent=35 // pred_check_branch
        %571 = sbr.rel (%p569) target = $region52
      $region51: #{edge_gnn_classifier.14} parent=35 // pred_region
        _
      $region52: #{edge_gnn_classifier.14} parent=35 // pred_fallthru
        _
      // Predicated region
      $region53: #{edge_gnn_classifier.14} parent=35 // pred_check
        %p572 = pneg %p150
      $region54: #{edge_gnn_classifier.14} parent=35 // pred_check_branch
        %574 = sbr.rel (%p572) target = $region56
      $region55: #{edge_gnn_classifier.14} parent=35 // pred_region
        _
      $region56: #{edge_gnn_classifier.14} parent=35 // pred_fallthru
        _
    $region36: #{edge_gnn_classifier.14} parent=5 // pred_fallthru
      _
    %p575 = scmp.le.s32.totalorder 2, %s12
    // Predicated region
    $region57: #{edge_gnn_classifier.14} parent=5 // pred_check
      %p576 = pneg %p575
    $region58: #{edge_gnn_classifier.14} parent=5 // pred_check_branch
      %578 = sbr.rel (%p576) target = $region60
    $region59: #{edge_gnn_classifier.14} parent=5 // pred_region
      %s579 = ssub.s32 %s12, 2
    $region60: #{edge_gnn_classifier.14} parent=5 // pred_fallthru
      _
  $region6: #{edge_gnn_classifier.14} parent=0 // loop_footer
    %s16 = sadd.s32 1, %s12
  $region7: #{edge_gnn_classifier.14} parent=0 // loop_footer_branch
    %11 = sbr.rel target = $region3
  $region8: #{edge_gnn_classifier.14} parent=0 // loop_exit
    _

// kernel: edge_gnn_classifier.15
$region0: #{edge_gnn_classifier.15}
  #allocation0 [shape = 'u32[]', space=smem, size = 0x4, offset = 0x4, fixed_abs, tag = 'smem constant byte address 0x4 - core index']
  #allocation1 [shape = 'u32[144,128]{1,0:T(1,128)}', space=vmem, size = 0x12000, scoped, tag = 'internal scratch']
  %s0 = inlined_call_operand.vmem [shape: f32[16,128], index: 0, kind: input, shape index: {}]
  %s1 = inlined_call_operand.vmem [shape: f32[16,4], index: 1, kind: input, shape index: {}]
  %s2 = inlined_call_operand.vmem [shape: bf16[16,32], index: 2, kind: input, shape index: {}]
  %s3 = inlined_call_operand.vmem [shape: f32[4,128], index: 3, kind: input, shape index: {}]
  %s4 = inlined_call_operand.vmem [shape: f32[128,32], index: 4, kind: input, shape index: {}]
  %s5 = inlined_call_operand.vmem [shape: bf16[16,32], index: 5, kind: output, shape index: {}]
  %s6 = sld [smem:[#allocation0]]
  $region53: #{edge_gnn_classifier.15} parent=0
    _
  %s8 = ssub.s32 1, %s6
  %s9 = scalar_select 0, %s8, %s6
  loop: start=0, step=1, limit=4
  $region2: #{edge_gnn_classifier.15} parent=0 // loop_pre_header
    _
  $region3: #{edge_gnn_classifier.15} parent=0 // loop_header
    %s11 = sphi 0, %s15
    %p12 = scmp.ge.s32.totalorder %s11, 4
    %s21 = sphi 0, %s23
    %s24 = sphi 0, %s21
    %s25 = sphi 0, %s24
    %s41 = sphi 0, %s25
    %s47 = sphi 0, %s49
    %s50 = sphi 0, %s47
    %s51 = sphi 0, %s50
    %s67 = sphi 0, %s51
    %s73 = sphi 0, %s75
    %s76 = sphi 0, %s73
    %s77 = sphi 0, %s76
    %s93 = sphi 0, %s77
    %s97 = sphi 0, %s97
    %s99 = sphi 0, %s97
    %s100 = sphi 0, %s99
    %s114 = sphi 0, %s100
    %s118 = sphi 0, %s118
    %s120 = sphi 0, %s118
    %s121 = sphi 0, %s120
    %s135 = sphi 0, %s121
    %s141 = sphi 0, %s143
    %s144 = sphi 0, %s141
    %s145 = sphi 0, %s144
    %s161 = sphi 0, %s145
  $region4: #{edge_gnn_classifier.15} parent=0 // loop_header_branch
    %14 = sbr.rel (%p12) target = $region8
  $region5: #{edge_gnn_classifier.15} parent=0 // loop_body
    %s16 = ssub.s32 %s11, 1
    %s17 = ssub.s32 %s11, 2
    %s18 = sadd.s32 %s11, 1
    %s19 = ssub.s32 %s11, %s18
    %p20 = scmp.eq.s32.totalorder %s19, 0
    %s22 = sadd.s32 %s21, 1
    %s23 = scalar_select %p20, %s21, %s22
    %p26 = pneg %p20
    %p27 = scmp.eq.s32.totalorder %s11, 1
    %p28 = por %p26, %p27
    %p29 = scmp.ne.s32.totalorder %s21, %s24
    %p30 = scmp.eq.s32.totalorder %s11, 0
    %p31 = por %p29, %p30
    %p32 = scmp.ne.s32.totalorder %s21, %s24
    %p33 = scmp.eq.s32.totalorder %s16, 1
    %p34 = por %p32, %p33
    %p35 = scmp.ne.s32.totalorder %s24, %s25
    %p36 = scmp.eq.s32.totalorder %s16, 0
    %p37 = por %p35, %p36
    %p38 = scmp.ne.s32.totalorder %s24, %s25
    %p39 = scmp.eq.s32.totalorder %s17, 1
    %p40 = por %p38, %p39
    %p42 = scmp.ne.s32.totalorder %s25, %s41
    %p43 = scmp.eq.s32.totalorder %s17, 0
    %p44 = por %p42, %p43
    %s45 = ssub.s32 %s11, %s18
    %p46 = scmp.eq.s32.totalorder %s45, 0
    %s48 = sadd.s32 %s47, 1
    %s49 = scalar_select %p46, %s47, %s48
    %p52 = pneg %p46
    %p53 = scmp.eq.s32.totalorder %s11, 1
    %p54 = por %p52, %p53
    %p55 = scmp.ne.s32.totalorder %s47, %s50
    %p56 = scmp.eq.s32.totalorder %s11, 0
    %p57 = por %p55, %p56
    %p58 = scmp.ne.s32.totalorder %s47, %s50
    %p59 = scmp.eq.s32.totalorder %s16, 1
    %p60 = por %p58, %p59
    %p61 = scmp.ne.s32.totalorder %s50, %s51
    %p62 = scmp.eq.s32.totalorder %s16, 0
    %p63 = por %p61, %p62
    %p64 = scmp.ne.s32.totalorder %s50, %s51
    %p65 = scmp.eq.s32.totalorder %s17, 1
    %p66 = por %p64, %p65
    %p68 = scmp.ne.s32.totalorder %s51, %s67
    %p69 = scmp.eq.s32.totalorder %s17, 0
    %p70 = por %p68, %p69
    %s71 = ssub.s32 %s11, %s18
    %p72 = scmp.eq.s32.totalorder %s71, 0
    %s74 = sadd.s32 %s73, 1
    %s75 = scalar_select %p72, %s73, %s74
    %p78 = pneg %p72
    %p79 = scmp.eq.s32.totalorder %s11, 1
    %p80 = por %p78, %p79
    %p81 = scmp.ne.s32.totalorder %s73, %s76
    %p82 = scmp.eq.s32.totalorder %s11, 0
    %p83 = por %p81, %p82
    %p84 = scmp.ne.s32.totalorder %s73, %s76
    %p85 = scmp.eq.s32.totalorder %s16, 1
    %p86 = por %p84, %p85
    %p87 = scmp.ne.s32.totalorder %s76, %s77
    %p88 = scmp.eq.s32.totalorder %s16, 0
    %p89 = por %p87, %p88
    %p90 = scmp.ne.s32.totalorder %s76, %s77
    %p91 = scmp.eq.s32.totalorder %s17, 1
    %p92 = por %p90, %p91
    %p94 = scmp.ne.s32.totalorder %s77, %s93
    %p95 = scmp.eq.s32.totalorder %s17, 0
    %p96 = por %p94, %p95
    %s98 = sadd.s32 %s97, 1
    %p101 = scmp.eq.s32.totalorder %s11, 1
    %p102 = scmp.ne.s32.totalorder %s97, %s99
    %p103 = scmp.eq.s32.totalorder %s11, 0
    %p104 = por %p102, %p103
    %p105 = scmp.ne.s32.totalorder %s97, %s99
    %p106 = scmp.eq.s32.totalorder %s16, 1
    %p107 = por %p105, %p106
    %p108 = scmp.ne.s32.totalorder %s99, %s100
    %p109 = scmp.eq.s32.totalorder %s16, 0
    %p110 = por %p108, %p109
    %p111 = scmp.ne.s32.totalorder %s99, %s100
    %p112 = scmp.eq.s32.totalorder %s17, 1
    %p113 = por %p111, %p112
    %p115 = scmp.ne.s32.totalorder %s100, %s114
    %p116 = scmp.eq.s32.totalorder %s17, 0
    %p117 = por %p115, %p116
    %s119 = sadd.s32 %s118, 1
    %p122 = scmp.eq.s32.totalorder %s11, 1
    %p123 = scmp.ne.s32.totalorder %s118, %s120
    %p124 = scmp.eq.s32.totalorder %s11, 0
    %p125 = por %p123, %p124
    %p126 = scmp.ne.s32.totalorder %s118, %s120
    %p127 = scmp.eq.s32.totalorder %s16, 1
    %p128 = por %p126, %p127
    %p129 = scmp.ne.s32.totalorder %s120, %s121
    %p130 = scmp.eq.s32.totalorder %s16, 0
    %p131 = por %p129, %p130
    %p132 = scmp.ne.s32.totalorder %s120, %s121
    %p133 = scmp.eq.s32.totalorder %s17, 1
    %p134 = por %p132, %p133
    %p136 = scmp.ne.s32.totalorder %s121, %s135
    %p137 = scmp.eq.s32.totalorder %s17, 0
    %p138 = por %p136, %p137
    %s139 = ssub.s32 %s11, %s18
    %p140 = scmp.eq.s32.totalorder %s139, 0
    %s142 = sadd.s32 %s141, 1
    %s143 = scalar_select %p140, %s141, %s142
    %p146 = pneg %p140
    %p147 = scmp.eq.s32.totalorder %s11, 1
    %p148 = por %p146, %p147
    %p149 = scmp.ne.s32.totalorder %s141, %s144
    %p150 = scmp.eq.s32.totalorder %s11, 0
    %p151 = por %p149, %p150
    %p152 = scmp.ne.s32.totalorder %s141, %s144
    %p153 = scmp.eq.s32.totalorder %s16, 1
    %p154 = por %p152, %p153
    %p155 = scmp.ne.s32.totalorder %s144, %s145
    %p156 = scmp.eq.s32.totalorder %s16, 0
    %p157 = por %p155, %p156
    %p158 = scmp.ne.s32.totalorder %s144, %s145
    %p159 = scmp.eq.s32.totalorder %s17, 1
    %p160 = por %p158, %p159
    %p162 = scmp.ne.s32.totalorder %s145, %s161
    %p163 = scmp.eq.s32.totalorder %s17, 0
    %p164 = por %p162, %p163
    %p165 = scmp.le.s32.totalorder 1, %s11
    %p166 = scmp.lt.s32.totalorder %s11, 3
    %p167 = pnand %p165, %p166
    %p168 = pneg %p167
    // Predicated region
    $region9: #{edge_gnn_classifier.15} parent=5 // pred_check
      _
    $region10: #{edge_gnn_classifier.15} parent=5 // pred_check_branch
      %170 = sbr.rel (%p167) target = $region12
    $region11: #{edge_gnn_classifier.15} parent=5 // pred_region
      %s171 = ssub.s32 %s11, 1
      // Predicated region
      $region13: #{edge_gnn_classifier.15} parent=11 // pred_check
        %p172 = pneg %p110
      $region14: #{edge_gnn_classifier.15} parent=11 // pred_check_branch
        %174 = sbr.rel (%p172) target = $region16
      $region15: #{edge_gnn_classifier.15} parent=11 // pred_region
        _
      $region16: #{edge_gnn_classifier.15} parent=11 // pred_fallthru
        _
      // Predicated region
      $region17: #{edge_gnn_classifier.15} parent=11 // pred_check
        %p175 = pneg %p131
      $region18: #{edge_gnn_classifier.15} parent=11 // pred_check_branch
        %177 = sbr.rel (%p175) target = $region20
      $region19: #{edge_gnn_classifier.15} parent=11 // pred_region
        _
      $region20: #{edge_gnn_classifier.15} parent=11 // pred_fallthru
        _
    $region12: #{edge_gnn_classifier.15} parent=5 // pred_fallthru
      _
    %p178 = scmp.lt.s32.totalorder %s11, 2
    // Predicated region
    $region21: #{edge_gnn_classifier.15} parent=5 // pred_check
      %p179 = pneg %p178
    $region22: #{edge_gnn_classifier.15} parent=5 // pred_check_branch
      %181 = sbr.rel (%p179) target = $region24
    $region23: #{edge_gnn_classifier.15} parent=5 // pred_region
      // Predicated region
      $region25: #{edge_gnn_classifier.15} parent=23 // pred_check
        %p182 = pneg %p31
      $region26: #{edge_gnn_classifier.15} parent=23 // pred_check_branch
        %184 = sbr.rel (%p182) target = $region28
      $region27: #{edge_gnn_classifier.15} parent=23 // pred_region
        %p185 = scmp.lt.s32.totalorder %s11, 1
        %s186 = scalar_select %p185, %s11, 1
        %s187 = smul.addr %s186, 8
        %s188 = scalar_lea.vmem %s0, %s187
      $region28: #{edge_gnn_classifier.15} parent=23 // pred_fallthru
        _
      // Predicated region
      $region29: #{edge_gnn_classifier.15} parent=23 // pred_check
        %p189 = pneg %p57
      $region30: #{edge_gnn_classifier.15} parent=23 // pred_check_branch
        %191 = sbr.rel (%p189) target = $region32
      $region31: #{edge_gnn_classifier.15} parent=23 // pred_region
        %p192 = scmp.lt.s32.totalorder %s11, 1
        %s193 = scalar_select %p192, %s11, 1
        %s194 = smul.addr %s193, 8
        %s195 = scalar_lea.vmem %s1, %s194
      $region32: #{edge_gnn_classifier.15} parent=23 // pred_fallthru
        _
      // Predicated region
      $region33: #{edge_gnn_classifier.15} parent=23 // pred_check
        %p196 = pneg %p83
      $region34: #{edge_gnn_classifier.15} parent=23 // pred_check_branch
        %198 = sbr.rel (%p196) target = $region36
      $region35: #{edge_gnn_classifier.15} parent=23 // pred_region
        %p199 = scmp.lt.s32.totalorder %s11, 1
        %s200 = scalar_select %p199, %s11, 1
        %s201 = smul.addr %s200, 4
        %s202 = scalar_lea.vmem %s2, %s201
      $region36: #{edge_gnn_classifier.15} parent=23 // pred_fallthru
        _
    $region24: #{edge_gnn_classifier.15} parent=5 // pred_fallthru
      _
    %p203 = scmp.le.s32.totalorder 1, %s11
    %p204 = scmp.lt.s32.totalorder %s11, 3
    %p205 = pnand %p203, %p204
    %p206 = pneg %p205
    // Predicated region
    $region37: #{edge_gnn_classifier.15} parent=5 // pred_check
      _
    $region38: #{edge_gnn_classifier.15} parent=5 // pred_check_branch
      %208 = sbr.rel (%p205) target = $region40
    $region39: #{edge_gnn_classifier.15} parent=5 // pred_region
      %s209 = ssub.s32 %s11, 1
      %p210 = scmp.lt.s32.totalorder %s16, 1
      %s211 = scalar_select %p210, %s16, 1
      %s212 = smul.addr %s211, 8
      %s213 = scalar_lea.vmem %s0, %s212
      %p214 = pneg %p37
      %p215 = pneg %p34
      %p216 = scmp.lt.s32.totalorder %s16, 1
      %s217 = scalar_select %p216, %s16, 1
      %s218 = smul.addr %s217, 8
      %s219 = scalar_lea.vmem %s1, %s218
      %p220 = pneg %p63
      %p221 = pneg %p60
      %p222 = scmp.lt.s32.totalorder %s16, 1
      %s223 = scalar_select %p222, %s16, 1
      %s224 = smul.addr %s223, 4
      %s225 = scalar_lea.vmem %s2, %s224
      %p226 = pneg %p89
      %p227 = pneg %p86
      %p228 = pneg %p110
      %p229 = pneg %p107
      %p230 = pneg %p131
      %p231 = pneg %p128
      %p232 = pneg %p157
      %p233 = pneg %p154
      %p234 = scmp.lt.s32.totalorder %s16, 1
      %s235 = scalar_select %p234, %s16, 1
      %s236 = smul.addr %s235, 4
      %s237 = scalar_lea.vmem %s5, %s236
      %p238 = scmp.lt.s32.totalorder %s16, 1
      %s239 = scalar_select %p238, %s16, 1
      %s240 = smul.addr %s239, 8
      %s241 = scalar_lea.vmem %s0, %s240
      %p242 = scmp.lt.s32.totalorder %s16, 1
      %s243 = scalar_select %p242, %s16, 1
      %s244 = smul.addr %s243, 8
      %s245 = scalar_lea.vmem %s1, %s244
      %p246 = scmp.lt.s32.totalorder %s16, 1
      %s247 = scalar_select %p246, %s16, 1
      %s248 = smul.addr %s247, 4
      %s249 = scalar_lea.vmem %s2, %s248
      %p250 = scmp.lt.s32.totalorder %s16, 1
      %s251 = scalar_select %p250, %s16, 1
      %s252 = smul.addr %s251, 4
      %s253 = scalar_lea.vmem %s5, %s252
      %v254 = vld [vmem:[%s245] sm:$0xff]
      %v255 = vld [vmem:[%s3] sm:$0xf]
      %vm256 = vcmask 31744
      %v258 = vsel %vm256, %v254, 0
      %vm260 = vcmask 1043456
      %v262 = vsel %vm260, %v255, 0
      %264 = vmatprep.subr.mxu0 0.0
      %265 = vmatpush1.msra.mxu0 0.0
      %266 = vmatprep.subr.mxu0 0.0
      %267 = vmatpush1.msra.mxu0 0.0
      %268 = vmatprep.subr.mxu0 0.0
      %269 = vmatpush1.msra.mxu0 0.0
      %270 = vmatprep.subr.mxu0 0.0
      %271 = vmatpush1.msra.mxu0 0.0
      %272 = vmatprep.subr.mxu0 0.0
      %273 = vmatpush1.msra.mxu0 0.0
      %274 = vmatprep.subr.mxu0 0.0
      %275 = vmatpush1.msra.mxu0 0.0
      %276 = vmatprep.subr.mxu0 0.0
      %277 = vmatpush1.msra.mxu0 0.0
      %278 = vmatprep.subr.mxu0 0.0
      %279 = vmatpush1.msra.mxu0 0.0
      %280 = vmatprep.subr.mxu0 0.0
      %281 = vmatpush1.msra.mxu0 0.0
      %282 = vmatprep.subr.mxu0 0.0
      %283 = vmatpush1.msra.mxu0 0.0
      %284 = vmatprep.subr.mxu0 0.0
      %285 = vmatpush1.msra.mxu0 0.0
      %286 = vmatprep.subr.mxu0 0.0
      %287 = vmatpush1.msra.mxu0 0.0
      %288 = vmatprep.subr.mxu0 0.0
      %289 = vmatpush1.msra.mxu0 0.0
      %290 = vmatprep.subr.mxu0 0.0
      %291 = vmatpush1.msra.mxu0 0.0
      %292 = vmatprep.subr.mxu0 0.0
      %293 = vmatpush1.msra.mxu0 0.0
      %294 = vmatprep.subr.mxu0 0.0
      %295 = vmatpush1.msra.mxu0 %v262
      %296 = vmatprep.subr.mxu0 0.0
      %297 = vmatpush2.msra.mxu0 0.0
      %298 = vmatprep.subr.mxu0 0.0
      %299 = vmatpush2.msra.mxu0 0.0
      %300 = vmatprep.subr.mxu0 0.0
      %301 = vmatpush2.msra.mxu0 0.0
      %302 = vmatprep.subr.mxu0 0.0
      %303 = vmatpush2.msra.mxu0 0.0
      %304 = vmatprep.subr.mxu0 0.0
      %305 = vmatpush2.msra.mxu0 0.0
      %306 = vmatprep.subr.mxu0 0.0
      %307 = vmatpush2.msra.mxu0 0.0
      %308 = vmatprep.subr.mxu0 0.0
      %309 = vmatpush2.msra.mxu0 0.0
      %310 = vmatprep.subr.mxu0 0.0
      %311 = vmatpush2.msra.mxu0 0.0
      %312 = vmatprep.subr.mxu0 0.0
      %313 = vmatpush2.msra.mxu0 0.0
      %314 = vmatprep.subr.mxu0 0.0
      %315 = vmatpush2.msra.mxu0 0.0
      %316 = vmatprep.subr.mxu0 0.0
      %317 = vmatpush2.msra.mxu0 0.0
      %318 = vmatprep.subr.mxu0 0.0
      %319 = vmatpush2.msra.mxu0 0.0
      %320 = vmatprep.subr.mxu0 0.0
      %321 = vmatpush2.msra.mxu0 0.0
      %322 = vmatprep.subr.mxu0 0.0
      %323 = vmatpush2.msra.mxu0 0.0
      %324 = vmatprep.subr.mxu0 0.0
      %325 = vmatpush2.msra.mxu0 0.0
      %326 = vmatprep.subr.mxu0 0.0
      %327 = vmatpush2.msra.mxu0 0.0
      %328 = vmatprep.mubr.f32.mxu0 0.0
      %329 = vmatmul.mubr.f32.gmra.mxu0 %v258
      %v330 = vpop.f32.mrf.mxu0
      %v331 = vadd.f32 1e-16, %v330
      %v332 = vpop.f32.mrf.mxu0
      %333 = vdwg.mxu0
      %v334 = vrcp.pop %v331
      %v335 = vld [vmem:[%s241] sm:$0xff]
      %v336 = vmul.f32 %v335, %v334
      %v337 = vld [vmem:[%s4] sm:$0xff]
      %v338 = vld [vmem:[%s4 + $0x8] sm:$0xff]
      %v339 = vld [vmem:[%s4 + $0x10] sm:$0xff]
      %v340 = vld [vmem:[%s4 + $0x18] sm:$0xff]
      %v341 = vld [vmem:[%s4 + $0x20] sm:$0xff]
      %v342 = vld [vmem:[%s4 + $0x28] sm:$0xff]
      %v343 = vld [vmem:[%s4 + $0x30] sm:$0xff]
      %v344 = vld [vmem:[%s4 + $0x38] sm:$0xff]
      %v345 = vld [vmem:[%s4 + $0x40] sm:$0xff]
      %v346 = vld [vmem:[%s4 + $0x48] sm:$0xff]
      %v347 = vld [vmem:[%s4 + $0x50] sm:$0xff]
      %v348 = vld [vmem:[%s4 + $0x58] sm:$0xff]
      %v349 = vld [vmem:[%s4 + $0x60] sm:$0xff]
      %v350 = vld [vmem:[%s4 + $0x68] sm:$0xff]
      %v351 = vld [vmem:[%s4 + $0x70] sm:$0xff]
      %v352 = vld [vmem:[%s4 + $0x78] sm:$0xff]
      %v353 = vld [vmem:[%s249] sm:$0xf]
      %v354 = vunpack.c.l.bf16 %v353
      %355 = vmatprep.subr.mxu0 0.0
      %356 = vmatpush1.msra.mxu0 %v352
      %357 = vmatprep.subr.mxu0 0.0
      %358 = vmatpush1.msra.mxu0 %v351
      %359 = vmatprep.subr.mxu0 0.0
      %360 = vmatpush1.msra.mxu0 %v350
      %361 = vmatprep.subr.mxu0 0.0
      %362 = vmatpush1.msra.mxu0 %v349
      %363 = vmatprep.subr.mxu0 0.0
      %364 = vmatpush1.msra.mxu0 %v348
      %365 = vmatprep.subr.mxu0 0.0
      %366 = vmatpush1.msra.mxu0 %v347
      %367 = vmatprep.subr.mxu0 0.0
      %368 = vmatpush1.msra.mxu0 %v346
      %369 = vmatprep.subr.mxu0 0.0
      %370 = vmatpush1.msra.mxu0 %v345
      %371 = vmatprep.subr.mxu0 0.0
      %372 = vmatpush1.msra.mxu0 %v344
      %373 = vmatprep.subr.mxu0 0.0
      %374 = vmatpush1.msra.mxu0 %v343
      %375 = vmatprep.subr.mxu0 0.0
      %376 = vmatpush1.msra.mxu0 %v342
      %377 = vmatprep.subr.mxu0 0.0
      %378 = vmatpush1.msra.mxu0 %v341
      %379 = vmatprep.subr.mxu0 0.0
      %380 = vmatpush1.msra.mxu0 %v340
      %381 = vmatprep.subr.mxu0 0.0
      %382 = vmatpush1.msra.mxu0 %v339
      %383 = vmatprep.subr.mxu0 0.0
      %384 = vmatpush1.msra.mxu0 %v338
      %385 = vmatprep.subr.mxu0 0.0
      %386 = vmatpush1.msra.mxu0 %v337
      %387 = vmatprep.subr.mxu0 0.0
      %388 = vmatpush2.msra.mxu0 0.0
      %389 = vmatprep.subr.mxu0 0.0
      %390 = vmatpush2.msra.mxu0 0.0
      %391 = vmatprep.subr.mxu0 0.0
      %392 = vmatpush2.msra.mxu0 0.0
      %393 = vmatprep.subr.mxu0 0.0
      %394 = vmatpush2.msra.mxu0 0.0
      %395 = vmatprep.subr.mxu0 0.0
      %396 = vmatpush2.msra.mxu0 0.0
      %397 = vmatprep.subr.mxu0 0.0
      %398 = vmatpush2.msra.mxu0 0.0
      %399 = vmatprep.subr.mxu0 0.0
      %400 = vmatpush2.msra.mxu0 0.0
      %401 = vmatprep.subr.mxu0 0.0
      %402 = vmatpush2.msra.mxu0 0.0
      %403 = vmatprep.subr.mxu0 0.0
      %404 = vmatpush2.msra.mxu0 0.0
      %405 = vmatprep.subr.mxu0 0.0
      %406 = vmatpush2.msra.mxu0 0.0
      %407 = vmatprep.subr.mxu0 0.0
      %408 = vmatpush2.msra.mxu0 0.0
      %409 = vmatprep.subr.mxu0 0.0
      %410 = vmatpush2.msra.mxu0 0.0
      %411 = vmatprep.subr.mxu0 0.0
      %412 = vmatpush2.msra.mxu0 0.0
      %413 = vmatprep.subr.mxu0 0.0
      %414 = vmatpush2.msra.mxu0 0.0
      %415 = vmatprep.subr.mxu0 0.0
      %416 = vmatpush2.msra.mxu0 0.0
      %417 = vmatprep.subr.mxu0 0.0
      %418 = vmatpush2.msra.mxu0 0.0
      %419 = vmatprep.mubr.f32.mxu0 0.0
      %420 = vmatmul.mubr.f32.gmra.mxu0 %v336
      %v421 = vpop.f32.mrf.mxu0
      %v422 = vadd.f32 %v354, %v421
      %v423 = vpop.f32.mrf.mxu0
      %424 = vdwg.mxu0
      %v425 = vmax.f32 %v422, 0.0
      %v426 = vpack.c.bf16 %v425, %v425
      %vm427 = vcmask 257024
      %428 = vst.msk [vmem:[%s253] sm:$0xf] %vm427, %v426
      %p429 = scmp.lt.s32.totalorder %s16, 1
      %s430 = scalar_select %p429, %s16, 1
      %s431 = smul.addr %s430, 4
      %s432 = scalar_lea.vmem %s5, %s431
      // Predicated region
      $region41: #{edge_gnn_classifier.15} parent=39 // pred_check
        %p433 = pneg %p154
      $region42: #{edge_gnn_classifier.15} parent=39 // pred_check_branch
        %435 = sbr.rel (%p433) target = $region44
      $region43: #{edge_gnn_classifier.15} parent=39 // pred_region
        _
      $region44: #{edge_gnn_classifier.15} parent=39 // pred_fallthru
        _
    $region40: #{edge_gnn_classifier.15} parent=5 // pred_fallthru
      _
    %p436 = scmp.le.s32.totalorder 2, %s11
    // Predicated region
    $region45: #{edge_gnn_classifier.15} parent=5 // pred_check
      %p437 = pneg %p436
    $region46: #{edge_gnn_classifier.15} parent=5 // pred_check_branch
      %439 = sbr.rel (%p437) target = $region48
    $region47: #{edge_gnn_classifier.15} parent=5 // pred_region
      %s440 = ssub.s32 %s11, 2
      // Predicated region
      $region49: #{edge_gnn_classifier.15} parent=47 // pred_check
        %p441 = pneg %p160
      $region50: #{edge_gnn_classifier.15} parent=47 // pred_check_branch
        %443 = sbr.rel (%p441) target = $region52
      $region51: #{edge_gnn_classifier.15} parent=47 // pred_region
        %p444 = scmp.lt.s32.totalorder %s17, 1
        %s445 = scalar_select %p444, %s17, 1
        %s446 = smul.addr %s445, 4
        %s447 = scalar_lea.vmem %s5, %s446
      $region52: #{edge_gnn_classifier.15} parent=47 // pred_fallthru
        _
    $region48: #{edge_gnn_classifier.15} parent=5 // pred_fallthru
      _
  $region6: #{edge_gnn_classifier.15} parent=0 // loop_footer
    %s15 = sadd.s32 1, %s11
  $region7: #{edge_gnn_classifier.15} parent=0 // loop_footer_branch
    %10 = sbr.rel target = $region3
  $region8: #{edge_gnn_classifier.15} parent=0 // loop_exit
    _

// kernel: edge_gnn_classifier.21
$region0: #{edge_gnn_classifier.21}
  #allocation0 [shape = 'u32[]', space=smem, size = 0x4, offset = 0x4, fixed_abs, tag = 'smem constant byte address 0x4 - core index']
  #allocation1 [shape = 'u32[144,128]{1,0:T(1,128)}', space=vmem, size = 0x12000, scoped, tag = 'internal scratch']
  #allocation2 [shape = 'f32[1,1]{1,0:T(1,128)S(1)}', space=vmem, size = 0x200, scoped, tag = 'scoped memory for edge_gnn_classifier.21']
  %s0 = inlined_call_operand.vmem [shape: bf16[32,32], index: 0, kind: input, shape index: {}]
  %s1 = inlined_call_operand.vmem [shape: bf16[32,4], index: 1, kind: input, shape index: {}]
  %s2 = inlined_call_operand.vmem [shape: bf16[32,32], index: 2, kind: input, shape index: {}]
  %s3 = inlined_call_operand.vmem [shape: bf16[32,32], index: 3, kind: input, shape index: {}]
  %s4 = inlined_call_operand.vmem [shape: bf16[4,32], index: 4, kind: input, shape index: {}]
  %s5 = inlined_call_operand.vmem [shape: bf16[32,32], index: 5, kind: input, shape index: {}]
  %s6 = inlined_call_operand.vmem [shape: f32[1,32], index: 6, kind: input, shape index: {}]
  %s7 = inlined_call_operand.vmem [shape: f32[1,32], index: 7, kind: input, shape index: {}]
  %s8 = inlined_call_operand.<no memory space> [shape: f32[1,1], index: 8, kind: input, shape index: {}]
  %s9 = inlined_call_operand.vmem [shape: f32[32,1], index: 9, kind: output, shape index: {}]
  %s10 = sld [smem:[#allocation0]]
  $region69: #{edge_gnn_classifier.21} parent=0
    _
  %s12 = ssub.s32 1, %s10
  %s13 = scalar_select 0, %s12, %s10
  %v14 = vstv %s8
  %15 = vst [vmem:[#allocation2] sm:$0x1] %v14
  loop: start=0, step=1, limit=4
  $region2: #{edge_gnn_classifier.21} parent=0 // loop_pre_header
    _
  $region3: #{edge_gnn_classifier.21} parent=0 // loop_header
    %s17 = sphi 0, %s21
    %p18 = scmp.ge.s32.totalorder %s17, 4
    %s27 = sphi 0, %s29
    %s30 = sphi 0, %s27
    %s31 = sphi 0, %s30
    %s47 = sphi 0, %s31
    %s53 = sphi 0, %s55
    %s56 = sphi 0, %s53
    %s57 = sphi 0, %s56
    %s73 = sphi 0, %s57
    %s79 = sphi 0, %s81
    %s82 = sphi 0, %s79
    %s83 = sphi 0, %s82
    %s99 = sphi 0, %s83
    %s103 = sphi 0, %s103
    %s105 = sphi 0, %s103
    %s106 = sphi 0, %s105
    %s120 = sphi 0, %s106
    %s124 = sphi 0, %s124
    %s126 = sphi 0, %s124
    %s127 = sphi 0, %s126
    %s141 = sphi 0, %s127
    %s145 = sphi 0, %s145
    %s147 = sphi 0, %s145
    %s148 = sphi 0, %s147
    %s162 = sphi 0, %s148
    %s166 = sphi 0, %s166
    %s168 = sphi 0, %s166
    %s169 = sphi 0, %s168
    %s183 = sphi 0, %s169
    %s187 = sphi 0, %s187
    %s189 = sphi 0, %s187
    %s190 = sphi 0, %s189
    %s204 = sphi 0, %s190
    %s208 = sphi 0, %s208
    %s210 = sphi 0, %s208
    %s211 = sphi 0, %s210
    %s225 = sphi 0, %s211
    %s231 = sphi 0, %s233
    %s234 = sphi 0, %s231
    %s235 = sphi 0, %s234
    %s251 = sphi 0, %s235
  $region4: #{edge_gnn_classifier.21} parent=0 // loop_header_branch
    %20 = sbr.rel (%p18) target = $region8
  $region5: #{edge_gnn_classifier.21} parent=0 // loop_body
    %s22 = ssub.s32 %s17, 1
    %s23 = ssub.s32 %s17, 2
    %s24 = sadd.s32 %s17, 1
    %s25 = ssub.s32 %s17, %s24
    %p26 = scmp.eq.s32.totalorder %s25, 0
    %s28 = sadd.s32 %s27, 1
    %s29 = scalar_select %p26, %s27, %s28
    %p32 = pneg %p26
    %p33 = scmp.eq.s32.totalorder %s17, 1
    %p34 = por %p32, %p33
    %p35 = scmp.ne.s32.totalorder %s27, %s30
    %p36 = scmp.eq.s32.totalorder %s17, 0
    %p37 = por %p35, %p36
    %p38 = scmp.ne.s32.totalorder %s27, %s30
    %p39 = scmp.eq.s32.totalorder %s22, 1
    %p40 = por %p38, %p39
    %p41 = scmp.ne.s32.totalorder %s30, %s31
    %p42 = scmp.eq.s32.totalorder %s22, 0
    %p43 = por %p41, %p42
    %p44 = scmp.ne.s32.totalorder %s30, %s31
    %p45 = scmp.eq.s32.totalorder %s23, 1
    %p46 = por %p44, %p45
    %p48 = scmp.ne.s32.totalorder %s31, %s47
    %p49 = scmp.eq.s32.totalorder %s23, 0
    %p50 = por %p48, %p49
    %s51 = ssub.s32 %s17, %s24
    %p52 = scmp.eq.s32.totalorder %s51, 0
    %s54 = sadd.s32 %s53, 1
    %s55 = scalar_select %p52, %s53, %s54
    %p58 = pneg %p52
    %p59 = scmp.eq.s32.totalorder %s17, 1
    %p60 = por %p58, %p59
    %p61 = scmp.ne.s32.totalorder %s53, %s56
    %p62 = scmp.eq.s32.totalorder %s17, 0
    %p63 = por %p61, %p62
    %p64 = scmp.ne.s32.totalorder %s53, %s56
    %p65 = scmp.eq.s32.totalorder %s22, 1
    %p66 = por %p64, %p65
    %p67 = scmp.ne.s32.totalorder %s56, %s57
    %p68 = scmp.eq.s32.totalorder %s22, 0
    %p69 = por %p67, %p68
    %p70 = scmp.ne.s32.totalorder %s56, %s57
    %p71 = scmp.eq.s32.totalorder %s23, 1
    %p72 = por %p70, %p71
    %p74 = scmp.ne.s32.totalorder %s57, %s73
    %p75 = scmp.eq.s32.totalorder %s23, 0
    %p76 = por %p74, %p75
    %s77 = ssub.s32 %s17, %s24
    %p78 = scmp.eq.s32.totalorder %s77, 0
    %s80 = sadd.s32 %s79, 1
    %s81 = scalar_select %p78, %s79, %s80
    %p84 = pneg %p78
    %p85 = scmp.eq.s32.totalorder %s17, 1
    %p86 = por %p84, %p85
    %p87 = scmp.ne.s32.totalorder %s79, %s82
    %p88 = scmp.eq.s32.totalorder %s17, 0
    %p89 = por %p87, %p88
    %p90 = scmp.ne.s32.totalorder %s79, %s82
    %p91 = scmp.eq.s32.totalorder %s22, 1
    %p92 = por %p90, %p91
    %p93 = scmp.ne.s32.totalorder %s82, %s83
    %p94 = scmp.eq.s32.totalorder %s22, 0
    %p95 = por %p93, %p94
    %p96 = scmp.ne.s32.totalorder %s82, %s83
    %p97 = scmp.eq.s32.totalorder %s23, 1
    %p98 = por %p96, %p97
    %p100 = scmp.ne.s32.totalorder %s83, %s99
    %p101 = scmp.eq.s32.totalorder %s23, 0
    %p102 = por %p100, %p101
    %s104 = sadd.s32 %s103, 1
    %p107 = scmp.eq.s32.totalorder %s17, 1
    %p108 = scmp.ne.s32.totalorder %s103, %s105
    %p109 = scmp.eq.s32.totalorder %s17, 0
    %p110 = por %p108, %p109
    %p111 = scmp.ne.s32.totalorder %s103, %s105
    %p112 = scmp.eq.s32.totalorder %s22, 1
    %p113 = por %p111, %p112
    %p114 = scmp.ne.s32.totalorder %s105, %s106
    %p115 = scmp.eq.s32.totalorder %s22, 0
    %p116 = por %p114, %p115
    %p117 = scmp.ne.s32.totalorder %s105, %s106
    %p118 = scmp.eq.s32.totalorder %s23, 1
    %p119 = por %p117, %p118
    %p121 = scmp.ne.s32.totalorder %s106, %s120
    %p122 = scmp.eq.s32.totalorder %s23, 0
    %p123 = por %p121, %p122
    %s125 = sadd.s32 %s124, 1
    %p128 = scmp.eq.s32.totalorder %s17, 1
    %p129 = scmp.ne.s32.totalorder %s124, %s126
    %p130 = scmp.eq.s32.totalorder %s17, 0
    %p131 = por %p129, %p130
    %p132 = scmp.ne.s32.totalorder %s124, %s126
    %p133 = scmp.eq.s32.totalorder %s22, 1
    %p134 = por %p132, %p133
    %p135 = scmp.ne.s32.totalorder %s126, %s127
    %p136 = scmp.eq.s32.totalorder %s22, 0
    %p137 = por %p135, %p136
    %p138 = scmp.ne.s32.totalorder %s126, %s127
    %p139 = scmp.eq.s32.totalorder %s23, 1
    %p140 = por %p138, %p139
    %p142 = scmp.ne.s32.totalorder %s127, %s141
    %p143 = scmp.eq.s32.totalorder %s23, 0
    %p144 = por %p142, %p143
    %s146 = sadd.s32 %s145, 1
    %p149 = scmp.eq.s32.totalorder %s17, 1
    %p150 = scmp.ne.s32.totalorder %s145, %s147
    %p151 = scmp.eq.s32.totalorder %s17, 0
    %p152 = por %p150, %p151
    %p153 = scmp.ne.s32.totalorder %s145, %s147
    %p154 = scmp.eq.s32.totalorder %s22, 1
    %p155 = por %p153, %p154
    %p156 = scmp.ne.s32.totalorder %s147, %s148
    %p157 = scmp.eq.s32.totalorder %s22, 0
    %p158 = por %p156, %p157
    %p159 = scmp.ne.s32.totalorder %s147, %s148
    %p160 = scmp.eq.s32.totalorder %s23, 1
    %p161 = por %p159, %p160
    %p163 = scmp.ne.s32.totalorder %s148, %s162
    %p164 = scmp.eq.s32.totalorder %s23, 0
    %p165 = por %p163, %p164
    %s167 = sadd.s32 %s166, 1
    %p170 = scmp.eq.s32.totalorder %s17, 1
    %p171 = scmp.ne.s32.totalorder %s166, %s168
    %p172 = scmp.eq.s32.totalorder %s17, 0
    %p173 = por %p171, %p172
    %p174 = scmp.ne.s32.totalorder %s166, %s168
    %p175 = scmp.eq.s32.totalorder %s22, 1
    %p176 = por %p174, %p175
    %p177 = scmp.ne.s32.totalorder %s168, %s169
    %p178 = scmp.eq.s32.totalorder %s22, 0
    %p179 = por %p177, %p178
    %p180 = scmp.ne.s32.totalorder %s168, %s169
    %p181 = scmp.eq.s32.totalorder %s23, 1
    %p182 = por %p180, %p181
    %p184 = scmp.ne.s32.totalorder %s169, %s183
    %p185 = scmp.eq.s32.totalorder %s23, 0
    %p186 = por %p184, %p185
    %s188 = sadd.s32 %s187, 1
    %p191 = scmp.eq.s32.totalorder %s17, 1
    %p192 = scmp.ne.s32.totalorder %s187, %s189
    %p193 = scmp.eq.s32.totalorder %s17, 0
    %p194 = por %p192, %p193
    %p195 = scmp.ne.s32.totalorder %s187, %s189
    %p196 = scmp.eq.s32.totalorder %s22, 1
    %p197 = por %p195, %p196
    %p198 = scmp.ne.s32.totalorder %s189, %s190
    %p199 = scmp.eq.s32.totalorder %s22, 0
    %p200 = por %p198, %p199
    %p201 = scmp.ne.s32.totalorder %s189, %s190
    %p202 = scmp.eq.s32.totalorder %s23, 1
    %p203 = por %p201, %p202
    %p205 = scmp.ne.s32.totalorder %s190, %s204
    %p206 = scmp.eq.s32.totalorder %s23, 0
    %p207 = por %p205, %p206
    %s209 = sadd.s32 %s208, 1
    %p212 = scmp.eq.s32.totalorder %s17, 1
    %p213 = scmp.ne.s32.totalorder %s208, %s210
    %p214 = scmp.eq.s32.totalorder %s17, 0
    %p215 = por %p213, %p214
    %p216 = scmp.ne.s32.totalorder %s208, %s210
    %p217 = scmp.eq.s32.totalorder %s22, 1
    %p218 = por %p216, %p217
    %p219 = scmp.ne.s32.totalorder %s210, %s211
    %p220 = scmp.eq.s32.totalorder %s22, 0
    %p221 = por %p219, %p220
    %p222 = scmp.ne.s32.totalorder %s210, %s211
    %p223 = scmp.eq.s32.totalorder %s23, 1
    %p224 = por %p222, %p223
    %p226 = scmp.ne.s32.totalorder %s211, %s225
    %p227 = scmp.eq.s32.totalorder %s23, 0
    %p228 = por %p226, %p227
    %s229 = ssub.s32 %s17, %s24
    %p230 = scmp.eq.s32.totalorder %s229, 0
    %s232 = sadd.s32 %s231, 1
    %s233 = scalar_select %p230, %s231, %s232
    %p236 = pneg %p230
    %p237 = scmp.eq.s32.totalorder %s17, 1
    %p238 = por %p236, %p237
    %p239 = scmp.ne.s32.totalorder %s231, %s234
    %p240 = scmp.eq.s32.totalorder %s17, 0
    %p241 = por %p239, %p240
    %p242 = scmp.ne.s32.totalorder %s231, %s234
    %p243 = scmp.eq.s32.totalorder %s22, 1
    %p244 = por %p242, %p243
    %p245 = scmp.ne.s32.totalorder %s234, %s235
    %p246 = scmp.eq.s32.totalorder %s22, 0
    %p247 = por %p245, %p246
    %p248 = scmp.ne.s32.totalorder %s234, %s235
    %p249 = scmp.eq.s32.totalorder %s23, 1
    %p250 = por %p248, %p249
    %p252 = scmp.ne.s32.totalorder %s235, %s251
    %p253 = scmp.eq.s32.totalorder %s23, 0
    %p254 = por %p252, %p253
    %p255 = scmp.le.s32.totalorder 1, %s17
    %p256 = scmp.lt.s32.totalorder %s17, 3
    %p257 = pnand %p255, %p256
    %p258 = pneg %p257
    // Predicated region
    $region9: #{edge_gnn_classifier.21} parent=5 // pred_check
      _
    $region10: #{edge_gnn_classifier.21} parent=5 // pred_check_branch
      %260 = sbr.rel (%p257) target = $region12
    $region11: #{edge_gnn_classifier.21} parent=5 // pred_region
      %s261 = ssub.s32 %s17, 1
      // Predicated region
      $region13: #{edge_gnn_classifier.21} parent=11 // pred_check
        %p262 = pneg %p116
      $region14: #{edge_gnn_classifier.21} parent=11 // pred_check_branch
        %264 = sbr.rel (%p262) target = $region16
      $region15: #{edge_gnn_classifier.21} parent=11 // pred_region
        _
      $region16: #{edge_gnn_classifier.21} parent=11 // pred_fallthru
        _
      // Predicated region
      $region17: #{edge_gnn_classifier.21} parent=11 // pred_check
        %p265 = pneg %p137
      $region18: #{edge_gnn_classifier.21} parent=11 // pred_check_branch
        %267 = sbr.rel (%p265) target = $region20
      $region19: #{edge_gnn_classifier.21} parent=11 // pred_region
        _
      $region20: #{edge_gnn_classifier.21} parent=11 // pred_fallthru
        _
      // Predicated region
      $region21: #{edge_gnn_classifier.21} parent=11 // pred_check
        %p268 = pneg %p158
      $region22: #{edge_gnn_classifier.21} parent=11 // pred_check_branch
        %270 = sbr.rel (%p268) target = $region24
      $region23: #{edge_gnn_classifier.21} parent=11 // pred_region
        _
      $region24: #{edge_gnn_classifier.21} parent=11 // pred_fallthru
        _
      // Predicated region
      $region25: #{edge_gnn_classifier.21} parent=11 // pred_check
        %p271 = pneg %p179
      $region26: #{edge_gnn_classifier.21} parent=11 // pred_check_branch
        %273 = sbr.rel (%p271) target = $region28
      $region27: #{edge_gnn_classifier.21} parent=11 // pred_region
        _
      $region28: #{edge_gnn_classifier.21} parent=11 // pred_fallthru
        _
      // Predicated region
      $region29: #{edge_gnn_classifier.21} parent=11 // pred_check
        %p274 = pneg %p200
      $region30: #{edge_gnn_classifier.21} parent=11 // pred_check_branch
        %276 = sbr.rel (%p274) target = $region32
      $region31: #{edge_gnn_classifier.21} parent=11 // pred_region
        _
      $region32: #{edge_gnn_classifier.21} parent=11 // pred_fallthru
        _
      // Predicated region
      $region33: #{edge_gnn_classifier.21} parent=11 // pred_check
        %p277 = pneg %p221
      $region34: #{edge_gnn_classifier.21} parent=11 // pred_check_branch
        %279 = sbr.rel (%p277) target = $region36
      $region35: #{edge_gnn_classifier.21} parent=11 // pred_region
        _
      $region36: #{edge_gnn_classifier.21} parent=11 // pred_fallthru
        _
    $region12: #{edge_gnn_classifier.21} parent=5 // pred_fallthru
      _
    %p280 = scmp.lt.s32.totalorder %s17, 2
    // Predicated region
    $region37: #{edge_gnn_classifier.21} parent=5 // pred_check
      %p281 = pneg %p280
    $region38: #{edge_gnn_classifier.21} parent=5 // pred_check_branch
      %283 = sbr.rel (%p281) target = $region40
    $region39: #{edge_gnn_classifier.21} parent=5 // pred_region
      // Predicated region
      $region41: #{edge_gnn_classifier.21} parent=39 // pred_check
        %p284 = pneg %p37
      $region42: #{edge_gnn_classifier.21} parent=39 // pred_check_branch
        %286 = sbr.rel (%p284) target = $region44
      $region43: #{edge_gnn_classifier.21} parent=39 // pred_region
        %s287 = smul.u32 2, %s17
        %p288 = scmp.lt.s32.totalorder %s287, 3
        %s289 = scalar_select %p288, %s287, 3
        %s290 = smul.addr %s289, 4
        %s291 = scalar_lea.vmem %s0, %s290
        %s292 = smul.u32 2, %s17
      $region44: #{edge_gnn_classifier.21} parent=39 // pred_fallthru
        _
      // Predicated region
      $region45: #{edge_gnn_classifier.21} parent=39 // pred_check
        %p293 = pneg %p63
      $region46: #{edge_gnn_classifier.21} parent=39 // pred_check_branch
        %295 = sbr.rel (%p293) target = $region48
      $region47: #{edge_gnn_classifier.21} parent=39 // pred_region
        %s296 = smul.u32 2, %s17
        %p297 = scmp.lt.s32.totalorder %s296, 3
        %s298 = scalar_select %p297, %s296, 3
        %s299 = smul.addr %s298, 4
        %s300 = scalar_lea.vmem %s1, %s299
        %s301 = smul.u32 2, %s17
      $region48: #{edge_gnn_classifier.21} parent=39 // pred_fallthru
        _
      // Predicated region
      $region49: #{edge_gnn_classifier.21} parent=39 // pred_check
        %p302 = pneg %p89
      $region50: #{edge_gnn_classifier.21} parent=39 // pred_check_branch
        %304 = sbr.rel (%p302) target = $region52
      $region51: #{edge_gnn_classifier.21} parent=39 // pred_region
        %s305 = smul.u32 2, %s17
        %p306 = scmp.lt.s32.totalorder %s305, 3
        %s307 = scalar_select %p306, %s305, 3
        %s308 = smul.addr %s307, 4
        %s309 = scalar_lea.vmem %s2, %s308
        %s310 = smul.u32 2, %s17
      $region52: #{edge_gnn_classifier.21} parent=39 // pred_fallthru
        _
    $region40: #{edge_gnn_classifier.21} parent=5 // pred_fallthru
      _
    %p311 = scmp.le.s32.totalorder 1, %s17
    %p312 = scmp.lt.s32.totalorder %s17, 3
    %p313 = pnand %p311, %p312
    %p314 = pneg %p313
    // Predicated region
    $region53: #{edge_gnn_classifier.21} parent=5 // pred_check
      _
    $region54: #{edge_gnn_classifier.21} parent=5 // pred_check_branch
      %316 = sbr.rel (%p313) target = $region56
    $region55: #{edge_gnn_classifier.21} parent=5 // pred_region
      %s317 = ssub.s32 %s17, 1
      %s318 = smul.u32 2, %s22
      %p319 = scmp.lt.s32.totalorder %s318, 3
      %s320 = scalar_select %p319, %s318, 3
      %s321 = smul.addr %s320, 4
      %s322 = scalar_lea.vmem %s0, %s321
      %p323 = pneg %p43
      %p324 = pneg %p40
      %s325 = smul.u32 2, %s22
      %p326 = scmp.lt.s32.totalorder %s325, 3
      %s327 = scalar_select %p326, %s325, 3
      %s328 = smul.addr %s327, 4
      %s329 = scalar_lea.vmem %s1, %s328
      %p330 = pneg %p69
      %p331 = pneg %p66
      %s332 = smul.u32 2, %s22
      %p333 = scmp.lt.s32.totalorder %s332, 3
      %s334 = scalar_select %p333, %s332, 3
      %s335 = smul.addr %s334, 4
      %s336 = scalar_lea.vmem %s2, %s335
      %p337 = pneg %p95
      %p338 = pneg %p92
      %p339 = pneg %p116
      %p340 = pneg %p113
      %p341 = pneg %p137
      %p342 = pneg %p134
      %p343 = pneg %p158
      %p344 = pneg %p155
      %p345 = pneg %p179
      %p346 = pneg %p176
      %p347 = pneg %p200
      %p348 = pneg %p197
      %p349 = pneg %p221
      %p350 = pneg %p218
      %p351 = pneg %p247
      %p352 = pneg %p244
      %s353 = smul.u32 2, %s22
      %p354 = scmp.lt.s32.totalorder %s353, 3
      %s355 = scalar_select %p354, %s353, 3
      %s356 = smul.addr %s355, 8
      %s357 = scalar_lea.vmem %s9, %s356
      %s358 = smul.u32 2, %s22
      %p359 = scmp.lt.s32.totalorder %s358, 3
      %s360 = scalar_select %p359, %s358, 3
      %s361 = smul.addr %s360, 4
      %s362 = scalar_lea.vmem %s0, %s361
      %s363 = smul.u32 2, %s22
      %s364 = smul.u32 2, %s22
      %p365 = scmp.lt.s32.totalorder %s364, 3
      %s366 = scalar_select %p365, %s364, 3
      %s367 = smul.addr %s366, 4
      %s368 = scalar_lea.vmem %s1, %s367
      %s369 = smul.u32 2, %s22
      %s370 = smul.u32 2, %s22
      %p371 = scmp.lt.s32.totalorder %s370, 3
      %s372 = scalar_select %p371, %s370, 3
      %s373 = smul.addr %s372, 4
      %s374 = scalar_lea.vmem %s2, %s373
      %s375 = smul.u32 2, %s22
      %s376 = smul.u32 2, %s22
      %p377 = scmp.lt.s32.totalorder %s376, 3
      %s378 = scalar_select %p377, %s376, 3
      %s379 = smul.addr %s378, 8
      %s380 = scalar_lea.vmem %s9, %s379
      %s381 = smul.u32 2, %s22
      %v383 = vld [vmem:[%s362] sm:$0xf]
      %v384 = vld [vmem:[%s362 + $0x4] sm:$0xf]
      %v385 = vld [vmem:[%s3] sm:$0xf]
      %v386 = vld [vmem:[%s3 + $0x4] sm:$0xf]
      %v387 = vld [vmem:[%s3 + $0x8] sm:$0xf]
      %v388 = vld [vmem:[%s3 + $0xc] sm:$0xf]
      %v389 = vld [vmem:[%s368] sm:$0xf]
      %v390 = vld [vmem:[%s368 + $0x4] sm:$0xf]
      %v391 = vld [vmem:[%s4] sm:$0x3]
      %v394 = vunpack.c.l.b16 %v389
      %v395 = vunpack.c.l.b16 %v390
      %v396 = vpack.c.b16 %v395, %v394
      %vm397 = vcmask 31744
      %v399 = vsel %vm397, %v396, 0
      %vm401 = vcmask 1041408
      %v403 = vsel %vm401, %v391, 0
      %405 = vmatprep.subr.bf16.mxu0 0
      %406 = vmatpush1.bf16.msra.mxu0 0
      %407 = vmatprep.subr.bf16.mxu0 0
      %408 = vmatpush1.bf16.msra.mxu0 0
      %409 = vmatprep.subr.bf16.mxu0 0
      %410 = vmatpush1.bf16.msra.mxu0 0
      %411 = vmatprep.subr.bf16.mxu0 0
      %412 = vmatpush1.bf16.msra.mxu0 0
      %413 = vmatprep.subr.bf16.mxu0 0
      %414 = vmatpush1.bf16.msra.mxu0 0
      %415 = vmatprep.subr.bf16.mxu0 0
      %416 = vmatpush1.bf16.msra.mxu0 0
      %417 = vmatprep.subr.bf16.mxu0 0
      %418 = vmatpush1.bf16.msra.mxu0 0
      %419 = vmatprep.subr.bf16.mxu0 0
      %420 = vmatpush1.bf16.msra.mxu0 %v403
      %421 = vmatprep.subr.bf16.mxu0 0
      %422 = vmatpush2.bf16.msra.mxu0 0
      %423 = vmatprep.subr.bf16.mxu0 0
      %424 = vmatpush2.bf16.msra.mxu0 0
      %425 = vmatprep.subr.bf16.mxu0 0
      %426 = vmatpush2.bf16.msra.mxu0 0
      %427 = vmatprep.subr.bf16.mxu0 0
      %428 = vmatpush2.bf16.msra.mxu0 0
      %429 = vmatprep.subr.bf16.mxu0 0
      %430 = vmatpush2.bf16.msra.mxu0 0
      %431 = vmatprep.subr.bf16.mxu0 0
      %432 = vmatpush2.bf16.msra.mxu0 0
      %433 = vmatprep.subr.bf16.mxu0 0
      %434 = vmatpush2.bf16.msra.mxu0 0
      %435 = vmatprep.subr.bf16.mxu0 0
      %436 = vmatpush2.bf16.msra.mxu0 0
      %437 = vmatprep.mubr.bf16.mxu0 0
      %438 = vmatmul.mubr.bf16.gmra.mxu0 %v399
      %v439 = vpop.f32.mrf.mxu0
      %v440 = vadd.f32 0.0, %v439
      %v441 = vpop.f32.mrf.mxu0
      %v442 = vpop.f32.mrf.mxu0
      %v443 = vadd.f32 0.0, %v442
      %v444 = vpop.f32.mrf.mxu0
      %445 = vdwg.mxu0
      %v448 = vunpack.c.l.b16 %v383
      %v449 = vunpack.c.l.b16 %v384
      %v450 = vpack.c.b16 %v449, %v448
      %v455 = vunpack.c.l.b16 %v385
      %v456 = vunpack.c.l.b16 %v386
      %v457 = vunpack.c.l.b16 %v387
      %v458 = vunpack.c.l.b16 %v388
      %v459 = vpack.c.b16 %v456, %v455
      %v460 = vpack.c.b16 %v458, %v457
      %vm463 = vcmask 261120
      %v465 = vsel %vm463, %v450, 0
      %467 = vmatprep.subr.bf16.mxu0 0
      %468 = vmatpush1.bf16.msra.mxu0 0
      %469 = vmatprep.subr.bf16.mxu0 0
      %470 = vmatpush1.bf16.msra.mxu0 0
      %471 = vmatprep.subr.bf16.mxu0 0
      %472 = vmatpush1.bf16.msra.mxu0 0
      %473 = vmatprep.subr.bf16.mxu0 0
      %474 = vmatpush1.bf16.msra.mxu0 0
      %475 = vmatprep.subr.bf16.mxu0 0
      %476 = vmatpush1.bf16.msra.mxu0 0
      %477 = vmatprep.subr.bf16.mxu0 0
      %478 = vmatpush1.bf16.msra.mxu0 0
      %479 = vmatprep.subr.bf16.mxu0 0
      %480 = vmatpush1.bf16.msra.mxu0 %v460
      %481 = vmatprep.subr.bf16.mxu0 0
      %482 = vmatpush1.bf16.msra.mxu0 %v459
      %483 = vmatprep.subr.bf16.mxu0 0
      %484 = vmatpush2.bf16.msra.mxu0 0
      %485 = vmatprep.subr.bf16.mxu0 0
      %486 = vmatpush2.bf16.msra.mxu0 0
      %487 = vmatprep.subr.bf16.mxu0 0
      %488 = vmatpush2.bf16.msra.mxu0 0
      %489 = vmatprep.subr.bf16.mxu0 0
      %490 = vmatpush2.bf16.msra.mxu0 0
      %491 = vmatprep.subr.bf16.mxu0 0
      %492 = vmatpush2.bf16.msra.mxu0 0
      %493 = vmatprep.subr.bf16.mxu0 0
      %494 = vmatpush2.bf16.msra.mxu0 0
      %495 = vmatprep.subr.bf16.mxu0 0
      %496 = vmatpush2.bf16.msra.mxu0 0
      %497 = vmatprep.subr.bf16.mxu0 0
      %498 = vmatpush2.bf16.msra.mxu0 0
      %499 = vmatprep.mubr.bf16.mxu0 0
      %500 = vmatmul.mubr.bf16.gmra.mxu0 %v465
      %v501 = vpop.f32.mrf.mxu0
      %v502 = vadd.f32 %v440, %v501
      %v503 = vpop.f32.mrf.mxu0
      %v504 = vpop.f32.mrf.mxu0
      %v505 = vadd.f32 %v443, %v504
      %v506 = vpop.f32.mrf.mxu0
      %507 = vdwg.mxu0
      %v508 = vld [vmem:[%s374] sm:$0xf]
      %v509 = vld [vmem:[%s374 + $0x4] sm:$0xf]
      %v510 = vld [vmem:[%s5] sm:$0xf]
      %v511 = vld [vmem:[%s5 + $0x4] sm:$0xf]
      %v512 = vld [vmem:[%s5 + $0x8] sm:$0xf]
      %v513 = vld [vmem:[%s5 + $0xc] sm:$0xf]
      %v516 = vunpack.c.l.b16 %v508
      %v517 = vunpack.c.l.b16 %v509
      %v518 = vpack.c.b16 %v517, %v516
      %v523 = vunpack.c.l.b16 %v510
      %v524 = vunpack.c.l.b16 %v511
      %v525 = vunpack.c.l.b16 %v512
      %v526 = vunpack.c.l.b16 %v513
      %v527 = vpack.c.b16 %v524, %v523
      %v528 = vpack.c.b16 %v526, %v525
      %v532 = vsel %vm463, %v518, 0
      %534 = vmatprep.subr.bf16.mxu0 0
      %535 = vmatpush1.bf16.msra.mxu0 0
      %536 = vmatprep.subr.bf16.mxu0 0
      %537 = vmatpush1.bf16.msra.mxu0 0
      %538 = vmatprep.subr.bf16.mxu0 0
      %539 = vmatpush1.bf16.msra.mxu0 0
      %540 = vmatprep.subr.bf16.mxu0 0
      %541 = vmatpush1.bf16.msra.mxu0 0
      %542 = vmatprep.subr.bf16.mxu0 0
      %543 = vmatpush1.bf16.msra.mxu0 0
      %544 = vmatprep.subr.bf16.mxu0 0
      %545 = vmatpush1.bf16.msra.mxu0 0
      %546 = vmatprep.subr.bf16.mxu0 0
      %547 = vmatpush1.bf16.msra.mxu0 %v528
      %548 = vmatprep.subr.bf16.mxu0 0
      %549 = vmatpush1.bf16.msra.mxu0 %v527
      %550 = vmatprep.subr.bf16.mxu0 0
      %551 = vmatpush2.bf16.msra.mxu0 0
      %552 = vmatprep.subr.bf16.mxu0 0
      %553 = vmatpush2.bf16.msra.mxu0 0
      %554 = vmatprep.subr.bf16.mxu0 0
      %555 = vmatpush2.bf16.msra.mxu0 0
      %556 = vmatprep.subr.bf16.mxu0 0
      %557 = vmatpush2.bf16.msra.mxu0 0
      %558 = vmatprep.subr.bf16.mxu0 0
      %559 = vmatpush2.bf16.msra.mxu0 0
      %560 = vmatprep.subr.bf16.mxu0 0
      %561 = vmatpush2.bf16.msra.mxu0 0
      %562 = vmatprep.subr.bf16.mxu0 0
      %563 = vmatpush2.bf16.msra.mxu0 0
      %564 = vmatprep.subr.bf16.mxu0 0
      %565 = vmatpush2.bf16.msra.mxu0 0
      %566 = vmatprep.mubr.bf16.mxu0 0
      %567 = vmatmul.mubr.bf16.gmra.mxu0 %v532
      %v568 = vpop.f32.mrf.mxu0
      %v569 = vadd.f32 0.0, %v568
      %v570 = vpop.f32.mrf.mxu0
      %v571 = vpop.f32.mrf.mxu0
      %v572 = vadd.f32 0.0, %v571
      %v573 = vpop.f32.mrf.mxu0
      %574 = vdwg.mxu0
      %v575 = vadd.f32 %v502, %v569
      %v576 = vadd.f32 %v505, %v572
      %v577 = vld [vmem:[%s6] sm:$0x1]
      %v579 = vlaneseq
      %v580 = vshrl.u32 %v579, 7
      %v581 = vsub.s32 0, %v580
      %v582 = vrot.slane %v577, %v581
      %v584 = vadd.f32 %v575, %v582
      %v585 = vadd.f32 %v576, %v582
      %v586 = vmax.f32 %v584, 0.0
      %v587 = vmax.f32 %v585, 0.0
      %v588 = vld [vmem:[%s7] sm:$0x1]
      %v590 = vlaneseq
      %v591 = vshrl.u32 %v590, 7
      %v592 = vsub.s32 0, %v591
      %v593 = vrot.slane %v588, %v592
      %v595 = vmul.f32 %v586, %v593
      %v596 = vmul.f32 %v587, %v593
      %v597 = vsel %vm463, %v595, 0.0
      %598 = vadd.xlane.f32.xlu0 %v597
      %v599 = vpop.xlane.xlu0 %598
      %v600 = vsel %vm463, %v596, 0.0
      %601 = vadd.xlane.f32.xlu0 %v600
      %v602 = vpop.xlane.xlu0 %601
      %v603 = vld [vmem:[#allocation2] sm:$0x1]
      %v605 = vlaneseq
      %v606 = vshrl.u32 %v605, 7
      %v607 = vsub.s32 0, %v606
      %v608 = vrot.slane %v603, %v607
      %v610 = vadd.f32 %v599, %v608
      %v611 = vadd.f32 %v602, %v608
      %vm612 = vcmask 7168
      %613 = vst.msk [vmem:[%s380] sm:$0xff] %vm612, %v610
      %614 = vst.msk [vmem:[%s380 + $0x8] sm:$0xff] %vm612, %v611
      %s615 = smul.u32 2, %s22
      %p616 = scmp.lt.s32.totalorder %s615, 3
      %s617 = scalar_select %p616, %s615, 3
      %s618 = smul.addr %s617, 8
      %s619 = scalar_lea.vmem %s9, %s618
      // Predicated region
      $region57: #{edge_gnn_classifier.21} parent=55 // pred_check
        %p620 = pneg %p244
      $region58: #{edge_gnn_classifier.21} parent=55 // pred_check_branch
        %622 = sbr.rel (%p620) target = $region60
      $region59: #{edge_gnn_classifier.21} parent=55 // pred_region
        %s623 = smul.u32 2, %s22
      $region60: #{edge_gnn_classifier.21} parent=55 // pred_fallthru
        _
    $region56: #{edge_gnn_classifier.21} parent=5 // pred_fallthru
      _
    %p624 = scmp.le.s32.totalorder 2, %s17
    // Predicated region
    $region61: #{edge_gnn_classifier.21} parent=5 // pred_check
      %p625 = pneg %p624
    $region62: #{edge_gnn_classifier.21} parent=5 // pred_check_branch
      %627 = sbr.rel (%p625) target = $region64
    $region63: #{edge_gnn_classifier.21} parent=5 // pred_region
      %s628 = ssub.s32 %s17, 2
      // Predicated region
      $region65: #{edge_gnn_classifier.21} parent=63 // pred_check
        %p629 = pneg %p250
      $region66: #{edge_gnn_classifier.21} parent=63 // pred_check_branch
        %631 = sbr.rel (%p629) target = $region68
      $region67: #{edge_gnn_classifier.21} parent=63 // pred_region
        %s632 = smul.u32 2, %s23
        %p633 = scmp.lt.s32.totalorder %s632, 3
        %s634 = scalar_select %p633, %s632, 3
        %s635 = smul.addr %s634, 8
        %s636 = scalar_lea.vmem %s9, %s635
      $region68: #{edge_gnn_classifier.21} parent=63 // pred_fallthru
        _
    $region64: #{edge_gnn_classifier.21} parent=5 // pred_fallthru
      _
  $region6: #{edge_gnn_classifier.21} parent=0 // loop_footer
    %s21 = sadd.s32 1, %s17
  $region7: #{edge_gnn_classifier.21} parent=0 // loop_footer_branch
    %16 = sbr.rel target = $region3
  $region8: #{edge_gnn_classifier.21} parent=0 // loop_exit
    _

</llo_original>
